<compile_context>
chip_gen: v7x
topology: tpu7x:2x2x1
jax: 0.10.0
libtpu: 0.0.40
codegen_flags: <defaults>
</compile_context>

<pallas_src>
import functools

import jax
import jax.numpy as jnp
from jax.experimental import pallas as pl
from jax.experimental.pallas import tpu as pltpu

LEAKY_SLOPE = 0.2
BN_EPS = 1e-5
ETA = 1e-6                      # Constants.eta in the original repo
_VMEM_LIMIT = 32 * 1024 * 1024  # safe on v5e/v6e/v7x


def _round_up(x, m):
    return (x + m - 1) // m * m


def _pick_tile_m(m):
    """Tile_M: multiple of 128 with >=2 grid steps when m >= 256 (v7x dual-TC),
    otherwise the whole (16-rounded) extent; capped at 512."""
    m = max(m, 1)
    if m < 256:
        return _round_up(m, 16)
    return min(512, _round_up((m + 1) // 2, 128))


def _leaky(x):
    return jnp.where(x > 0, x, LEAKY_SLOPE * x)


# ---------------------------------------------------------------------------
# Pallas kernels
# ---------------------------------------------------------------------------

def _conv_leaky_kernel(a_ref, w_ref, o_ref):
    """o = LeakyReLU(a @ w); bf16 operands, f32 accumulate, bf16 store."""
    acc = jnp.dot(a_ref[...], w_ref[...], preferred_element_type=jnp.float32)
    o_ref[...] = _leaky(acc).astype(o_ref.dtype)


def _conv_stats_kernel(a_ref, w_ref, y_ref, stats_ref):
    """y = a @ w (pre-BN, stored bf16) plus per-tile channel sum / sum-of-squares.

    Sums are taken from the f32 accumulator in-register (full precision), then
    the activation is cast to bf16 for writeback.  stats block is (8, Npad):
    row 0 = per-channel sum over this M tile, row 1 = per-channel sum of
    squares; rows 2..7 are unused.  The tiny cross-tile reduction happens in
    JAX so the M grid axis stays fully parallel.
    """
    acc = jnp.dot(a_ref[...], w_ref[...], preferred_element_type=jnp.float32)
    y_ref[...] = acc.astype(y_ref.dtype)
    stats_ref[0:1, :] = jnp.sum(acc, axis=0, keepdims=True)
    stats_ref[1:2, :] = jnp.sum(acc * acc, axis=0, keepdims=True)


def _heads_kernel(a_ref, mean_ref, inv_ref, w_ref, b_ref, o_ref, *, latent, eta):
    """Fused conv3-BN apply + LeakyReLU + latent heads.

    a is the *pre-BN* conv3 output flattened to (M, K) with channel the fast
    axis of K; mean/inv_std are channel vectors tiled along K.  Then
    z = leaky((a - mean) * inv) @ [W_mu | W_scale] + [b_mu | b_scale]:
      columns [0, latent)        -> mu    = z
      columns [latent, 2*latent) -> scale = softplus(z) + eta
    """
    a = a_ref[...].astype(jnp.float32)
    a = _leaky((a - mean_ref[...]) * inv_ref[...])
    z = jnp.dot(a.astype(jnp.bfloat16), w_ref[...],
                preferred_element_type=jnp.float32)
    z = z + b_ref[...]
    col = jax.lax.broadcasted_iota(jnp.int32, z.shape, 1)
    is_scale = (col >= latent) & (col < 2 * latent)
    softplus = jnp.maximum(z, 0.0) + jnp.log1p(jnp.exp(-jnp.abs(z)))
    o_ref[...] = jnp.where(is_scale, softplus + eta, z)


# ---------------------------------------------------------------------------
# JAX glue: im2col (bf16, fused in the same jit) + padding helpers
# ---------------------------------------------------------------------------

def _im2col_nhwc(x, kh, kw, stride, pad):
    """x: (B, H, W, C) -> patches (B*OH*OW, KH*KW*C), cols ordered (kh, kw, c)."""
    b, h, w, c = x.shape
    xp = jnp.pad(x, ((0, 0), (pad, pad), (pad, pad), (0, 0)))
    oh = (h + 2 * pad - kh) // stride + 1
    ow = (w + 2 * pad - kw) // stride + 1
    cols = []
    for i in range(kh):
        for j in range(kw):
            cols.append(xp[:, i:i + stride * oh:stride, j:j + stride * ow:stride, :])
    patches = jnp.stack(cols, axis=3)            # (B, OH, OW, KH*KW, C)
    return patches.reshape(b * oh * ow, kh * kw * c), oh, ow


def _w_to_mat(w):
    """PyTorch (Cout, Cin, KH, KW) -> (KH*KW*Cin, Cout), rows ordered (kh, kw, cin)."""
    return jnp.transpose(w, (2, 3, 1, 0)).reshape(-1, w.shape[0])


def _pad_operands(patches, wmat, n_true):
    """Pad M to a tile multiple and N to 128; K is never padded (full-extent blocks)."""
    m, k = patches.shape
    np_ = _round_up(n_true, 128)
    tm = _pick_tile_m(m)
    mp = _round_up(m, tm)
    a_p = jnp.pad(patches, ((0, mp - m), (0, 0))).astype(jnp.bfloat16)
    w_p = jnp.pad(wmat, ((0, 0), (0, np_ - n_true))).astype(jnp.bfloat16)
    return a_p, w_p, tm, mp, k, np_


def _compiler_params():
    return pltpu.CompilerParams(dimension_semantics=("parallel",),
                                vmem_limit_bytes=_VMEM_LIMIT)


# ---------------------------------------------------------------------------
# Layer wrappers (pallas_call)
# ---------------------------------------------------------------------------

def _conv_leaky(patches, wmat, n_true):
    m = patches.shape[0]
    a_p, w_p, tm, mp, kk, np_ = _pad_operands(patches, wmat, n_true)
    out = pl.pallas_call(
        _conv_leaky_kernel,
        out_shape=jax.ShapeDtypeStruct((mp, np_), jnp.bfloat16),
        grid_spec=pltpu.PrefetchScalarGridSpec(
            num_scalar_prefetch=0,
            grid=(mp // tm,),
            in_specs=[pl.BlockSpec((tm, kk), lambda i: (i, 0)),
                      pl.BlockSpec((kk, np_), lambda i: (0, 0))],
            out_specs=pl.BlockSpec((tm, np_), lambda i: (i, 0))),
        compiler_params=_compiler_params(),
    )(a_p, w_p)
    return out[:m, :n_true]


def _conv_prebn_stats(patches, wmat, n_true):
    """Conv matmul returning (pre-BN activation bf16, batch mean, inv_std)."""
    m = patches.shape[0]
    a_p, w_p, tm, mp, kk, np_ = _pad_operands(patches, wmat, n_true)
    n_tiles = mp // tm

    y, stats = pl.pallas_call(
        _conv_stats_kernel,
        out_shape=(jax.ShapeDtypeStruct((mp, np_), jnp.bfloat16),
                   jax.ShapeDtypeStruct((n_tiles * 8, np_), jnp.float32)),
        grid_spec=pltpu.PrefetchScalarGridSpec(
            num_scalar_prefetch=0,
            grid=(n_tiles,),
            in_specs=[pl.BlockSpec((tm, kk), lambda i: (i, 0)),
                      pl.BlockSpec((kk, np_), lambda i: (0, 0))],
            out_specs=[pl.BlockSpec((tm, np_), lambda i: (i, 0)),
                       pl.BlockSpec((8, np_), lambda i: (i, 0))]),
        compiler_params=_compiler_params(),
    )(a_p, w_p)

    # Global training-mode batch statistics (padded zero rows contribute 0).
    st = stats.reshape(n_tiles, 8, np_)
    count = jnp.float32(m)
    mean = jnp.sum(st[:, 0, :], axis=0) / count
    ex2 = jnp.sum(st[:, 1, :], axis=0) / count
    # TODO(synk): switch to a shifted/two-pass variance if used with trained
    # weights where channel means dwarf the std (E[x^2]-E[x]^2 can cancel).
    var = jnp.maximum(ex2 - mean * mean, 0.0)
    inv_std = jax.lax.rsqrt(var + BN_EPS)        # gamma=1, beta=0 (fresh BN)
    return y[:m, :n_true], mean[:n_true], inv_std[:n_true]


def _fused_heads(e_prebn_flat, mean3, inv3, wc1, bc1, wc2, bc2, latent):
    """BN apply + LeakyReLU for conv3 fused with the two 4x4 valid-conv heads."""
    b = e_prebn_flat.shape[0]
    cout = mean3.shape[0]
    reps = e_prebn_flat.shape[1] // cout         # spatial positions; channel is fast axis
    mean_k = jnp.tile(mean3, reps)[None, :].astype(jnp.float32)
    inv_k = jnp.tile(inv3, reps)[None, :].astype(jnp.float32)

    wmat = jnp.concatenate([_w_to_mat(wc1), _w_to_mat(wc2)], axis=1)   # (K, 2*latent)
    bias = jnp.concatenate([bc1, bc2]).astype(jnp.float32)             # (2*latent,)
    n_true = 2 * latent
    a_p, w_p, tm, mp, kk, np_ = _pad_operands(e_prebn_flat, wmat, n_true)
    b_p = jnp.pad(bias, (0, np_ - n_true))[None, :]

    out = pl.pallas_call(
        functools.partial(_heads_kernel, latent=latent, eta=ETA),
        out_shape=jax.ShapeDtypeStruct((mp, np_), jnp.float32),
        grid_spec=pltpu.PrefetchScalarGridSpec(
            num_scalar_prefetch=0,
            grid=(mp // tm,),
            in_specs=[pl.BlockSpec((tm, kk), lambda i: (i, 0)),
                      pl.BlockSpec((1, kk), lambda i: (0, 0)),
                      pl.BlockSpec((1, kk), lambda i: (0, 0)),
                      pl.BlockSpec((kk, np_), lambda i: (0, 0)),
                      pl.BlockSpec((1, np_), lambda i: (0, 0))],
            out_specs=pl.BlockSpec((tm, np_), lambda i: (i, 0))),
        compiler_params=_compiler_params(),
    )(a_p, mean_k, inv_k, w_p, b_p)
    mu = out[:b, :latent]
    scale = out[:b, latent:n_true]
    return mu, scale


# ---------------------------------------------------------------------------
# Full Enc forward
# ---------------------------------------------------------------------------

def enc_forward(x, params):
    """Pallas forward of Enc.  x: (..., 1, 32, 32) NCHW float32 -> (mu, scale)."""
    pre_shape = x.shape[:-3]
    x = x.reshape((-1, 1, 32, 32)).astype(jnp.float32)
    b = x.shape[0]
    a = jnp.transpose(x, (0, 2, 3, 1)).astype(jnp.bfloat16)   # NHWC (B, 32, 32, 1)

    # conv1 (bias=False) + LeakyReLU(0.2):  32 -> 16   (K = 16, no padding)
    patches, oh, ow = _im2col_nhwc(a, 4, 4, 2, 1)
    cout = params["w1"].shape[0]
    a = _conv_leaky(patches, _w_to_mat(params["w1"]), cout).reshape(b, oh, ow, cout)

    # conv2 (bias=False) -> BatchNorm (train-mode batch stats) -> LeakyReLU:  16 -> 8
    # BN apply is plain JAX (XLA fuses it into the next im2col gather).
    patches, oh, ow = _im2col_nhwc(a, 4, 4, 2, 1)
    cout = params["w2"].shape[0]
    y2, mean2, inv2 = _conv_prebn_stats(patches, _w_to_mat(params["w2"]), cout)
    a = _leaky((y2.astype(jnp.float32) - mean2) * inv2).astype(jnp.bfloat16)
    a = a.reshape(b, oh, ow, cout)

    # conv3 (bias=False) -> BatchNorm -> LeakyReLU:  8 -> 4
    # BN apply + LeakyReLU is fused into the heads kernel on its A operand.
    patches, oh, ow = _im2col_nhwc(a, 4, 4, 2, 1)
    cout = params["w3"].shape[0]
    y3, mean3, inv3 = _conv_prebn_stats(patches, _w_to_mat(params["w3"]), cout)
    e_flat = y3.reshape(b, oh * ow * cout)        # (h, w, c) order, channel fastest

    # fused 4x4 valid-conv heads: mu = c1(e)+b1,  scale = softplus(c2(e)+b2) + eta
    latent = params["wc1"].shape[0]
    mu, scale = _fused_heads(e_flat, mean3, inv3, params["wc1"], params["bc1"],
                             params["wc2"], params["bc2"], latent)
    mu = mu.reshape(pre_shape + (latent,))
    scale = scale.reshape(pre_shape + (latent,))
    return mu, scale


if __name__ == "__main__":
    key = jax.random.PRNGKey(0)
    kx, k1, k2, k3, k4, k5 = jax.random.split(key, 6)
    fBase, latent = 32, 20

    # PyTorch init: conv weights ~ N(0, 0.02); head conv biases zeroed.
    params = {
        "w1": 0.02 * jax.random.normal(k1, (fBase, 1, 4, 4), jnp.float32),
        "w2": 0.02 * jax.random.normal(k2, (2 * fBase, fBase, 4, 4), jnp.float32),
        "w3": 0.02 * jax.random.normal(k3, (4 * fBase, 2 * fBase, 4, 4), jnp.float32),
        "wc1": 0.02 * jax.random.normal(k4, (latent, 4 * fBase, 4, 4), jnp.float32),
        "bc1": jnp.zeros((latent,), jnp.float32),
        "wc2": 0.02 * jax.random.normal(k5, (latent, 4 * fBase, 4, 4), jnp.float32),
        "bc2": jnp.zeros((latent,), jnp.float32),
    }
    x = jax.random.normal(kx, (2, 1, 32, 32), jnp.float32)

    mu, scale = jax.jit(enc_forward)(x, params)
    jax.block_until_ready((mu, scale))
    assert mu.shape == (2, latent) and scale.shape == (2, latent)
    assert bool(jnp.all(jnp.isfinite(mu))) and bool(jnp.all(scale > 0))
    print("KERNEL_OK")
</pallas_src>

<mosaic_0001>
module attributes {stable_mosaic.version = 11 : i64} {
  func.func @_conv_leaky_kernel(%arg0: i32, %arg1: memref<256x16xbf16, #tpu.memory_space<vmem>>, %arg2: memref<16x128xbf16, #tpu.memory_space<vmem>>, %arg3: memref<256x128xbf16, #tpu.memory_space<vmem>>) attributes {dimension_semantics = [#tpu.dimension_semantics<parallel>], iteration_bounds = array<i64: 2>, scalar_prefetch = 0 : i64, scratch_operands = 0 : i64, tpu.core_type = #tpu.core_type<tc>, window_params = [{transform_indices = @transform_0, window_bounds = array<i64: 256, 16>}, {pipeline_mode = #tpu.pipeline_mode<synchronous>, transform_indices = @transform_1, window_bounds = array<i64: 16, 128>}, {transform_indices = @transform_2, window_bounds = array<i64: 256, 128>}]} {
    %c0 = arith.constant 0 : index
    %c0_0 = arith.constant 0 : index
    %0 = vector.load %arg1[%c0, %c0_0] : memref<256x16xbf16, #tpu.memory_space<vmem>>, vector<256x16xbf16>
    %c0_1 = arith.constant 0 : index
    %c0_2 = arith.constant 0 : index
    %1 = vector.load %arg2[%c0_1, %c0_2] : memref<16x128xbf16, #tpu.memory_space<vmem>>, vector<16x128xbf16>
    %cst = arith.constant dense<0.000000e+00> : vector<256x128xf32>
    %2 = tpu.matmul %0, %1, %cst {dimension_numbers = #tpu.dot_dimension_numbers<[1], [0], [0], [1], [0, 0, 1, 1], [], []>} : vector<256x16xbf16>, vector<16x128xbf16>, vector<256x128xf32> -> vector<256x128xf32>
    %cst_3 = arith.constant 0.000000e+00 : f32
    %3 = vector.broadcast %cst_3 : f32 to vector<256x128xf32>
    %4 = arith.cmpf ogt, %2, %3 : vector<256x128xf32>
    %cst_4 = arith.constant 2.000000e-01 : f32
    %5 = vector.broadcast %cst_4 : f32 to vector<256x128xf32>
    %6 = arith.mulf %5, %2 : vector<256x128xf32>
    %7 = arith.select %4, %2, %6 : vector<256x128xi1>, vector<256x128xf32>
    %8 = arith.truncf %7 : vector<256x128xf32> to vector<256x128xbf16>
    %c0_5 = arith.constant 0 : index
    %c0_6 = arith.constant 0 : index
    %9 = vector.load %arg3[%c0_5, %c0_6] : memref<256x128xbf16, #tpu.memory_space<vmem>>, vector<256x128xbf16>
    tpu.vector_store %arg3[%c0_5, %c0_6], %8 {strides = array<i32>} : memref<256x128xbf16, #tpu.memory_space<vmem>>, vector<256x128xbf16>,
    return
  }
  func.func @transform_0(%arg0: i32) -> (i32, i32) {
    %c0_i32 = arith.constant 0 : i32
    %c0_i32_0 = arith.constant 0 : i32
    return %arg0, %c0_i32 : i32, i32
  }
  func.func @transform_1(%arg0: i32) -> (i32, i32) {
    %c0_i32 = arith.constant 0 : i32
    %c0_i32_0 = arith.constant 0 : i32
    %c0_i32_1 = arith.constant 0 : i32
    return %c0_i32, %c0_i32_0 : i32, i32
  }
  func.func @transform_2(%arg0: i32) -> (i32, i32) {
    %c0_i32 = arith.constant 0 : i32
    %c0_i32_0 = arith.constant 0 : i32
    return %arg0, %c0_i32 : i32, i32
  }
}

module attributes {stable_mosaic.version = 11 : i64} {
  func.func @_conv_stats_kernel(%arg0: i32, %arg1: memref<128x512xbf16, #tpu.memory_space<vmem>>, %arg2: memref<512x128xbf16, #tpu.memory_space<vmem>>, %arg3: memref<128x128xbf16, #tpu.memory_space<vmem>>, %arg4: memref<8x128xf32, #tpu.memory_space<vmem>>) attributes {dimension_semantics = [#tpu.dimension_semantics<parallel>], iteration_bounds = array<i64: 1>, scalar_prefetch = 0 : i64, scratch_operands = 0 : i64, tpu.core_type = #tpu.core_type<tc>, window_params = [{transform_indices = @transform_0, window_bounds = array<i64: 128, 512>}, {pipeline_mode = #tpu.pipeline_mode<synchronous>, transform_indices = @transform_1, window_bounds = array<i64: 512, 128>}, {transform_indices = @transform_2, window_bounds = array<i64: 128, 128>}, {transform_indices = @transform_3, window_bounds = array<i64: 8, 128>}]} {
    %c0 = arith.constant 0 : index
    %c0_0 = arith.constant 0 : index
    %0 = vector.load %arg1[%c0, %c0_0] : memref<128x512xbf16, #tpu.memory_space<vmem>>, vector<128x512xbf16>
    %c0_1 = arith.constant 0 : index
    %c0_2 = arith.constant 0 : index
    %1 = vector.load %arg2[%c0_1, %c0_2] : memref<512x128xbf16, #tpu.memory_space<vmem>>, vector<512x128xbf16>
    %cst = arith.constant dense<0.000000e+00> : vector<128x128xf32>
    %2 = tpu.matmul %0, %1, %cst {dimension_numbers = #tpu.dot_dimension_numbers<[1], [0], [0], [1], [0, 0, 1, 1], [], []>} : vector<128x512xbf16>, vector<512x128xbf16>, vector<128x128xf32> -> vector<128x128xf32>
    %3 = arith.truncf %2 : vector<128x128xf32> to vector<128x128xbf16>
    %c0_3 = arith.constant 0 : index
    %c0_4 = arith.constant 0 : index
    %4 = vector.load %arg3[%c0_3, %c0_4] : memref<128x128xbf16, #tpu.memory_space<vmem>>, vector<128x128xbf16>
    tpu.vector_store %arg3[%c0_3, %c0_4], %3 {strides = array<i32>} : memref<128x128xbf16, #tpu.memory_space<vmem>>, vector<128x128xbf16>,
    %cst_5 = arith.constant dense<0.000000e+00> : vector<128xf32>
    %5 = vector.multi_reduction <add>, %2, %cst_5 [0] : vector<128x128xf32> to vector<128xf32>
    %6 = vector.shape_cast %5 : vector<128xf32> to vector<1x128xf32>
    %c0_6 = arith.constant 0 : index
    %c0_7 = arith.constant 0 : index
    %7 = vector.load %arg4[%c0_6, %c0_7] : memref<8x128xf32, #tpu.memory_space<vmem>>, vector<1x128xf32>
    tpu.vector_store %arg4[%c0_6, %c0_7], %6 {strides = array<i32>} : memref<8x128xf32, #tpu.memory_space<vmem>>, vector<1x128xf32>,
    %8 = arith.mulf %2, %2 : vector<128x128xf32>
    %cst_8 = arith.constant dense<0.000000e+00> : vector<128xf32>
    %9 = vector.multi_reduction <add>, %8, %cst_8 [0] : vector<128x128xf32> to vector<128xf32>
    %10 = vector.shape_cast %9 : vector<128xf32> to vector<1x128xf32>
    %c1 = arith.constant 1 : index
    %c0_9 = arith.constant 0 : index
    %11 = vector.load %arg4[%c1, %c0_9] : memref<8x128xf32, #tpu.memory_space<vmem>>, vector<1x128xf32>
    tpu.vector_store %arg4[%c1, %c0_9], %10 {strides = array<i32>} : memref<8x128xf32, #tpu.memory_space<vmem>>, vector<1x128xf32>,
    return
  }
  func.func @transform_0(%arg0: i32) -> (i32, i32) {
    %c0_i32 = arith.constant 0 : i32
    %c0_i32_0 = arith.constant 0 : i32
    return %arg0, %c0_i32 : i32, i32
  }
  func.func @transform_1(%arg0: i32) -> (i32, i32) {
    %c0_i32 = arith.constant 0 : i32
    %c0_i32_0 = arith.constant 0 : i32
    %c0_i32_1 = arith.constant 0 : i32
    return %c0_i32, %c0_i32_0 : i32, i32
  }
  func.func @transform_2(%arg0: i32) -> (i32, i32) {
    %c0_i32 = arith.constant 0 : i32
    %c0_i32_0 = arith.constant 0 : i32
    return %arg0, %c0_i32 : i32, i32
  }
  func.func @transform_3(%arg0: i32) -> (i32, i32) {
    %c0_i32 = arith.constant 0 : i32
    %c0_i32_0 = arith.constant 0 : i32
    return %arg0, %c0_i32 : i32, i32
  }
}

module attributes {stable_mosaic.version = 11 : i64} {
  func.func @_conv_stats_kernel(%arg0: i32, %arg1: memref<32x1024xbf16, #tpu.memory_space<vmem>>, %arg2: memref<1024x128xbf16, #tpu.memory_space<vmem>>, %arg3: memref<32x128xbf16, #tpu.memory_space<vmem>>, %arg4: memref<8x128xf32, #tpu.memory_space<vmem>>) attributes {dimension_semantics = [#tpu.dimension_semantics<parallel>], iteration_bounds = array<i64: 1>, scalar_prefetch = 0 : i64, scratch_operands = 0 : i64, tpu.core_type = #tpu.core_type<tc>, window_params = [{transform_indices = @transform_0, window_bounds = array<i64: 32, 1024>}, {pipeline_mode = #tpu.pipeline_mode<synchronous>, transform_indices = @transform_1, window_bounds = array<i64: 1024, 128>}, {transform_indices = @transform_2, window_bounds = array<i64: 32, 128>}, {transform_indices = @transform_3, window_bounds = array<i64: 8, 128>}]} {
    %c0 = arith.constant 0 : index
    %c0_0 = arith.constant 0 : index
    %0 = vector.load %arg1[%c0, %c0_0] : memref<32x1024xbf16, #tpu.memory_space<vmem>>, vector<32x1024xbf16>
    %c0_1 = arith.constant 0 : index
    %c0_2 = arith.constant 0 : index
    %1 = vector.load %arg2[%c0_1, %c0_2] : memref<1024x128xbf16, #tpu.memory_space<vmem>>, vector<1024x128xbf16>
    %cst = arith.constant dense<0.000000e+00> : vector<32x128xf32>
    %2 = tpu.matmul %0, %1, %cst {dimension_numbers = #tpu.dot_dimension_numbers<[1], [0], [0], [1], [0, 0, 1, 1], [], []>} : vector<32x1024xbf16>, vector<1024x128xbf16>, vector<32x128xf32> -> vector<32x128xf32>
    %3 = arith.truncf %2 : vector<32x128xf32> to vector<32x128xbf16>
    %c0_3 = arith.constant 0 : index
    %c0_4 = arith.constant 0 : index
    %4 = vector.load %arg3[%c0_3, %c0_4] : memref<32x128xbf16, #tpu.memory_space<vmem>>, vector<32x128xbf16>
    tpu.vector_store %arg3[%c0_3, %c0_4], %3 {strides = array<i32>} : memref<32x128xbf16, #tpu.memory_space<vmem>>, vector<32x128xbf16>,
    %cst_5 = arith.constant dense<0.000000e+00> : vector<128xf32>
    %5 = vector.multi_reduction <add>, %2, %cst_5 [0] : vector<32x128xf32> to vector<128xf32>
    %6 = vector.shape_cast %5 : vector<128xf32> to vector<1x128xf32>
    %c0_6 = arith.constant 0 : index
    %c0_7 = arith.constant 0 : index
    %7 = vector.load %arg4[%c0_6, %c0_7] : memref<8x128xf32, #tpu.memory_space<vmem>>, vector<1x128xf32>
    tpu.vector_store %arg4[%c0_6, %c0_7], %6 {strides = array<i32>} : memref<8x128xf32, #tpu.memory_space<vmem>>, vector<1x128xf32>,
    %8 = arith.mulf %2, %2 : vector<32x128xf32>
    %cst_8 = arith.constant dense<0.000000e+00> : vector<128xf32>
    %9 = vector.multi_reduction <add>, %8, %cst_8 [0] : vector<32x128xf32> to vector<128xf32>
    %10 = vector.shape_cast %9 : vector<128xf32> to vector<1x128xf32>
    %c1 = arith.constant 1 : index
    %c0_9 = arith.constant 0 : index
    %11 = vector.load %arg4[%c1, %c0_9] : memref<8x128xf32, #tpu.memory_space<vmem>>, vector<1x128xf32>
    tpu.vector_store %arg4[%c1, %c0_9], %10 {strides = array<i32>} : memref<8x128xf32, #tpu.memory_space<vmem>>, vector<1x128xf32>,
    return
  }
  func.func @transform_0(%arg0: i32) -> (i32, i32) {
    %c0_i32 = arith.constant 0 : i32
    %c0_i32_0 = arith.constant 0 : i32
    return %arg0, %c0_i32 : i32, i32
  }
  func.func @transform_1(%arg0: i32) -> (i32, i32) {
    %c0_i32 = arith.constant 0 : i32
    %c0_i32_0 = arith.constant 0 : i32
    %c0_i32_1 = arith.constant 0 : i32
    return %c0_i32, %c0_i32_0 : i32, i32
  }
  func.func @transform_2(%arg0: i32) -> (i32, i32) {
    %c0_i32 = arith.constant 0 : i32
    %c0_i32_0 = arith.constant 0 : i32
    return %arg0, %c0_i32 : i32, i32
  }
  func.func @transform_3(%arg0: i32) -> (i32, i32) {
    %c0_i32 = arith.constant 0 : i32
    %c0_i32_0 = arith.constant 0 : i32
    return %arg0, %c0_i32 : i32, i32
  }
}

module attributes {stable_mosaic.version = 11 : i64} {
  func.func @_heads_kernel(%arg0: i32, %arg1: memref<16x2048xbf16, #tpu.memory_space<vmem>>, %arg2: memref<1x2048xf32, #tpu.memory_space<vmem>>, %arg3: memref<1x2048xf32, #tpu.memory_space<vmem>>, %arg4: memref<2048x128xbf16, #tpu.memory_space<vmem>>, %arg5: memref<1x128xf32, #tpu.memory_space<vmem>>, %arg6: memref<16x128xf32, #tpu.memory_space<vmem>>) attributes {dimension_semantics = [#tpu.dimension_semantics<parallel>], iteration_bounds = array<i64: 1>, scalar_prefetch = 0 : i64, scratch_operands = 0 : i64, tpu.core_type = #tpu.core_type<tc>, window_params = [{transform_indices = @transform_0, window_bounds = array<i64: 16, 2048>}, {pipeline_mode = #tpu.pipeline_mode<synchronous>, transform_indices = @transform_1, window_bounds = array<i64: 1, 2048>}, {pipeline_mode = #tpu.pipeline_mode<synchronous>, transform_indices = @transform_2, window_bounds = array<i64: 1, 2048>}, {pipeline_mode = #tpu.pipeline_mode<synchronous>, transform_indices = @transform_3, window_bounds = array<i64: 2048, 128>}, {pipeline_mode = #tpu.pipeline_mode<synchronous>, transform_indices = @transform_4, window_bounds = array<i64: 1, 128>}, {transform_indices = @transform_5, window_bounds = array<i64: 16, 128>}]} {
    %c0 = arith.constant 0 : index
    %c0_0 = arith.constant 0 : index
    %0 = vector.load %arg1[%c0, %c0_0] : memref<16x2048xbf16, #tpu.memory_space<vmem>>, vector<16x2048xbf16>
    %1 = arith.extf %0 : vector<16x2048xbf16> to vector<16x2048xf32>
    %c0_1 = arith.constant 0 : index
    %c0_2 = arith.constant 0 : index
    %2 = vector.load %arg2[%c0_1, %c0_2] : memref<1x2048xf32, #tpu.memory_space<vmem>>, vector<1x2048xf32>
    %3 = vector.broadcast %2 : vector<1x2048xf32> to vector<16x2048xf32>
    %4 = arith.subf %1, %3 : vector<16x2048xf32>
    %c0_3 = arith.constant 0 : index
    %c0_4 = arith.constant 0 : index
    %5 = vector.load %arg3[%c0_3, %c0_4] : memref<1x2048xf32, #tpu.memory_space<vmem>>, vector<1x2048xf32>
    %6 = vector.broadcast %5 : vector<1x2048xf32> to vector<16x2048xf32>
    %7 = arith.mulf %4, %6 : vector<16x2048xf32>
    %cst = arith.constant 0.000000e+00 : f32
    %8 = vector.broadcast %cst : f32 to vector<16x2048xf32>
    %9 = arith.cmpf ogt, %7, %8 : vector<16x2048xf32>
    %cst_5 = arith.constant 2.000000e-01 : f32
    %10 = vector.broadcast %cst_5 : f32 to vector<16x2048xf32>
    %11 = arith.mulf %10, %7 : vector<16x2048xf32>
    %12 = arith.select %9, %7, %11 : vector<16x2048xi1>, vector<16x2048xf32>
    %13 = arith.truncf %12 : vector<16x2048xf32> to vector<16x2048xbf16>
    %c0_6 = arith.constant 0 : index
    %c0_7 = arith.constant 0 : index
    %14 = vector.load %arg4[%c0_6, %c0_7] : memref<2048x128xbf16, #tpu.memory_space<vmem>>, vector<2048x128xbf16>
    %cst_8 = arith.constant dense<0.000000e+00> : vector<16x128xf32>
    %15 = tpu.matmul %13, %14, %cst_8 {dimension_numbers = #tpu.dot_dimension_numbers<[1], [0], [0], [1], [0, 0, 1, 1], [], []>} : vector<16x2048xbf16>, vector<2048x128xbf16>, vector<16x128xf32> -> vector<16x128xf32>
    %c0_9 = arith.constant 0 : index
    %c0_10 = arith.constant 0 : index
    %16 = vector.load %arg5[%c0_9, %c0_10] : memref<1x128xf32, #tpu.memory_space<vmem>>, vector<1x128xf32>
    %17 = vector.broadcast %16 : vector<1x128xf32> to vector<16x128xf32>
    %18 = arith.addf %15, %17 : vector<16x128xf32>
    %19 = tpu.iota {dimensions = array<i32: 1>} : vector<16x128xi32>
    %c20_i32 = arith.constant 20 : i32
    %20 = vector.broadcast %c20_i32 : i32 to vector<16x128xi32>
    %21 = arith.cmpi sge, %19, %20 : vector<16x128xi32>
    %c40_i32 = arith.constant 40 : i32
    %22 = vector.broadcast %c40_i32 : i32 to vector<16x128xi32>
    %23 = arith.cmpi slt, %19, %22 : vector<16x128xi32>
    %24 = arith.andi %21, %23 : vector<16x128xi1>
    %cst_11 = arith.constant 0.000000e+00 : f32
    %25 = vector.broadcast %cst_11 : f32 to vector<16x128xf32>
    %26 = arith.maximumf %18, %25 : vector<16x128xf32>
    %27 = math.absf %18 : vector<16x128xf32>
    %cst_12 = arith.constant 0.000000e+00 : f32
    %28 = vector.broadcast %cst_12 : f32 to vector<16x128xf32>
    %29 = arith.subf %28, %27 : vector<16x128xf32>
    %30 = math.exp %29 : vector<16x128xf32>
    %31 = math.log1p %30 : vector<16x128xf32>
    %32 = arith.addf %26, %31 : vector<16x128xf32>
    %cst_13 = arith.constant 9.99999997E-7 : f32
    %33 = vector.broadcast %cst_13 : f32 to vector<16x128xf32>
    %34 = arith.addf %32, %33 : vector<16x128xf32>
    %35 = arith.select %24, %34, %18 : vector<16x128xi1>, vector<16x128xf32>
    %c0_14 = arith.constant 0 : index
    %c0_15 = arith.constant 0 : index
    %36 = vector.load %arg6[%c0_14, %c0_15] : memref<16x128xf32, #tpu.memory_space<vmem>>, vector<16x128xf32>
    tpu.vector_store %arg6[%c0_14, %c0_15], %35 {strides = array<i32>} : memref<16x128xf32, #tpu.memory_space<vmem>>, vector<16x128xf32>,
    return
  }
  func.func @transform_0(%arg0: i32) -> (i32, i32) {
    %c0_i32 = arith.constant 0 : i32
    %c0_i32_0 = arith.constant 0 : i32
    return %arg0, %c0_i32 : i32, i32
  }
  func.func @transform_1(%arg0: i32) -> (i32, i32) {
    %c0_i32 = arith.constant 0 : i32
    %c0_i32_0 = arith.constant 0 : i32
    %c0_i32_1 = arith.constant 0 : i32
    return %c0_i32, %c0_i32_0 : i32, i32
  }
  func.func @transform_2(%arg0: i32) -> (i32, i32) {
    %c0_i32 = arith.constant 0 : i32
    %c0_i32_0 = arith.constant 0 : i32
    %c0_i32_1 = arith.constant 0 : i32
    return %c0_i32, %c0_i32_0 : i32, i32
  }
  func.func @transform_3(%arg0: i32) -> (i32, i32) {
    %c0_i32 = arith.constant 0 : i32
    %c0_i32_0 = arith.constant 0 : i32
    %c0_i32_1 = arith.constant 0 : i32
    return %c0_i32, %c0_i32_0 : i32, i32
  }
  func.func @transform_4(%arg0: i32) -> (i32, i32) {
    %c0_i32 = arith.constant 0 : i32
    %c0_i32_0 = arith.constant 0 : i32
    %c0_i32_1 = arith.constant 0 : i32
    return %c0_i32, %c0_i32_0 : i32, i32
  }
  func.func @transform_5(%arg0: i32) -> (i32, i32) {
    %c0_i32 = arith.constant 0 : i32
    %c0_i32_0 = arith.constant 0 : i32
    return %arg0, %c0_i32 : i32, i32
  }
}

</mosaic_0001>

<llo_original>
// kernel: enc_forward.4
$region0: #{enc_forward.4}
  #allocation0 [shape = 'u32[]', space=smem, size = 0x4, offset = 0x4, fixed_abs, tag = 'smem constant byte address 0x4 - core index']
  #allocation1 [shape = 'u32[144,128]{1,0:T(1,128)}', space=vmem, size = 0x12000, scoped, tag = 'internal scratch']
  %s0 = inlined_call_operand.vmem [shape: bf16[512,16], index: 0, kind: input, shape index: {}]
  %s1 = inlined_call_operand.vmem [shape: bf16[16,128], index: 1, kind: input, shape index: {}]
  %s2 = inlined_call_operand.vmem [shape: bf16[512,128], index: 2, kind: output, shape index: {}]
  %s3 = sld [smem:[#allocation0]]
  $region41: #{enc_forward.4} parent=0
    _
  %s5 = ssub.s32 1, %s3
  %s6 = scalar_select 0, %s5, %s3
  loop: start=0, step=1, limit=4
  $region2: #{enc_forward.4} parent=0 // loop_pre_header
    _
  $region3: #{enc_forward.4} parent=0 // loop_header
    %s8 = sphi 0, %s12
    %p9 = scmp.ge.s32.totalorder %s8, 4
    %s18 = sphi 0, %s20
    %s21 = sphi 0, %s18
    %s22 = sphi 0, %s21
    %s38 = sphi 0, %s22
    %s42 = sphi 0, %s42
    %s44 = sphi 0, %s42
    %s45 = sphi 0, %s44
    %s59 = sphi 0, %s45
    %s65 = sphi 0, %s67
    %s68 = sphi 0, %s65
    %s69 = sphi 0, %s68
    %s85 = sphi 0, %s69
  $region4: #{enc_forward.4} parent=0 // loop_header_branch
    %11 = sbr.rel (%p9) target = $region8
  $region5: #{enc_forward.4} parent=0 // loop_body
    %s13 = ssub.s32 %s8, 1
    %s14 = ssub.s32 %s8, 2
    %s15 = sadd.s32 %s8, 1
    %s16 = ssub.s32 %s8, %s15
    %p17 = scmp.eq.s32.totalorder %s16, 0
    %s19 = sadd.s32 %s18, 1
    %s20 = scalar_select %p17, %s18, %s19
    %p23 = pneg %p17
    %p24 = scmp.eq.s32.totalorder %s8, 1
    %p25 = por %p23, %p24
    %p26 = scmp.ne.s32.totalorder %s18, %s21
    %p27 = scmp.eq.s32.totalorder %s8, 0
    %p28 = por %p26, %p27
    %p29 = scmp.ne.s32.totalorder %s18, %s21
    %p30 = scmp.eq.s32.totalorder %s13, 1
    %p31 = por %p29, %p30
    %p32 = scmp.ne.s32.totalorder %s21, %s22
    %p33 = scmp.eq.s32.totalorder %s13, 0
    %p34 = por %p32, %p33
    %p35 = scmp.ne.s32.totalorder %s21, %s22
    %p36 = scmp.eq.s32.totalorder %s14, 1
    %p37 = por %p35, %p36
    %p39 = scmp.ne.s32.totalorder %s22, %s38
    %p40 = scmp.eq.s32.totalorder %s14, 0
    %p41 = por %p39, %p40
    %s43 = sadd.s32 %s42, 1
    %p46 = scmp.eq.s32.totalorder %s8, 1
    %p47 = scmp.ne.s32.totalorder %s42, %s44
    %p48 = scmp.eq.s32.totalorder %s8, 0
    %p49 = por %p47, %p48
    %p50 = scmp.ne.s32.totalorder %s42, %s44
    %p51 = scmp.eq.s32.totalorder %s13, 1
    %p52 = por %p50, %p51
    %p53 = scmp.ne.s32.totalorder %s44, %s45
    %p54 = scmp.eq.s32.totalorder %s13, 0
    %p55 = por %p53, %p54
    %p56 = scmp.ne.s32.totalorder %s44, %s45
    %p57 = scmp.eq.s32.totalorder %s14, 1
    %p58 = por %p56, %p57
    %p60 = scmp.ne.s32.totalorder %s45, %s59
    %p61 = scmp.eq.s32.totalorder %s14, 0
    %p62 = por %p60, %p61
    %s63 = ssub.s32 %s8, %s15
    %p64 = scmp.eq.s32.totalorder %s63, 0
    %s66 = sadd.s32 %s65, 1
    %s67 = scalar_select %p64, %s65, %s66
    %p70 = pneg %p64
    %p71 = scmp.eq.s32.totalorder %s8, 1
    %p72 = por %p70, %p71
    %p73 = scmp.ne.s32.totalorder %s65, %s68
    %p74 = scmp.eq.s32.totalorder %s8, 0
    %p75 = por %p73, %p74
    %p76 = scmp.ne.s32.totalorder %s65, %s68
    %p77 = scmp.eq.s32.totalorder %s13, 1
    %p78 = por %p76, %p77
    %p79 = scmp.ne.s32.totalorder %s68, %s69
    %p80 = scmp.eq.s32.totalorder %s13, 0
    %p81 = por %p79, %p80
    %p82 = scmp.ne.s32.totalorder %s68, %s69
    %p83 = scmp.eq.s32.totalorder %s14, 1
    %p84 = por %p82, %p83
    %p86 = scmp.ne.s32.totalorder %s69, %s85
    %p87 = scmp.eq.s32.totalorder %s14, 0
    %p88 = por %p86, %p87
    %p89 = scmp.le.s32.totalorder 1, %s8
    %p90 = scmp.lt.s32.totalorder %s8, 3
    %p91 = pnand %p89, %p90
    %p92 = pneg %p91
    // Predicated region
    $region9: #{enc_forward.4} parent=5 // pred_check
      _
    $region10: #{enc_forward.4} parent=5 // pred_check_branch
      %94 = sbr.rel (%p91) target = $region12
    $region11: #{enc_forward.4} parent=5 // pred_region
      %s95 = ssub.s32 %s8, 1
      // Predicated region
      $region13: #{enc_forward.4} parent=11 // pred_check
        %p96 = pneg %p55
      $region14: #{enc_forward.4} parent=11 // pred_check_branch
        %98 = sbr.rel (%p96) target = $region16
      $region15: #{enc_forward.4} parent=11 // pred_region
        _
      $region16: #{enc_forward.4} parent=11 // pred_fallthru
        _
    $region12: #{enc_forward.4} parent=5 // pred_fallthru
      _
    %p99 = scmp.lt.s32.totalorder %s8, 2
    // Predicated region
    $region17: #{enc_forward.4} parent=5 // pred_check
      %p100 = pneg %p99
    $region18: #{enc_forward.4} parent=5 // pred_check_branch
      %102 = sbr.rel (%p100) target = $region20
    $region19: #{enc_forward.4} parent=5 // pred_region
      // Predicated region
      $region21: #{enc_forward.4} parent=19 // pred_check
        %p103 = pneg %p28
      $region22: #{enc_forward.4} parent=19 // pred_check_branch
        %105 = sbr.rel (%p103) target = $region24
      $region23: #{enc_forward.4} parent=19 // pred_region
        %s106 = smul.u32 32, %s8
        %p107 = scmp.lt.s32.totalorder %s106, 63
        %s108 = scalar_select %p107, %s106, 63
        %s109 = smul.addr %s108, 4
        %s110 = scalar_lea.vmem %s0, %s109
        %s111 = smul.u32 32, %s8
      $region24: #{enc_forward.4} parent=19 // pred_fallthru
        _
    $region20: #{enc_forward.4} parent=5 // pred_fallthru
      _
    %p112 = scmp.le.s32.totalorder 1, %s8
    %p113 = scmp.lt.s32.totalorder %s8, 3
    %p114 = pnand %p112, %p113
    %p115 = pneg %p114
    // Predicated region
    $region25: #{enc_forward.4} parent=5 // pred_check
      _
    $region26: #{enc_forward.4} parent=5 // pred_check_branch
      %117 = sbr.rel (%p114) target = $region28
    $region27: #{enc_forward.4} parent=5 // pred_region
      %s118 = ssub.s32 %s8, 1
      %s119 = smul.u32 32, %s13
      %p120 = scmp.lt.s32.totalorder %s119, 63
      %s121 = scalar_select %p120, %s119, 63
      %s122 = smul.addr %s121, 4
      %s123 = scalar_lea.vmem %s0, %s122
      %p124 = pneg %p34
      %p125 = pneg %p31
      %p126 = pneg %p55
      %p127 = pneg %p52
      %p128 = pneg %p81
      %p129 = pneg %p78
      %s130 = smul.u32 32, %s13
      %p131 = scmp.lt.s32.totalorder %s130, 63
      %s132 = scalar_select %p131, %s130, 63
      %s133 = smul.addr %s132, 4
      %s134 = scalar_lea.vmem %s2, %s133
      %s135 = smul.u32 32, %s13
      %p136 = scmp.lt.s32.totalorder %s135, 63
      %s137 = scalar_select %p136, %s135, 63
      %s138 = smul.addr %s137, 4
      %s139 = scalar_lea.vmem %s0, %s138
      %s140 = smul.u32 32, %s13
      %s141 = smul.u32 32, %s13
      %p142 = scmp.lt.s32.totalorder %s141, 63
      %s143 = scalar_select %p142, %s141, 63
      %s144 = smul.addr %s143, 4
      %s145 = scalar_lea.vmem %s2, %s144
      %s146 = smul.u32 32, %s13
      %v148 = vld [vmem:[%s139] sm:$0xf]
      %v149 = vld [vmem:[%s139 + $0x4] sm:$0xf]
      %v150 = vld [vmem:[%s139 + $0x8] sm:$0xf]
      %v151 = vld [vmem:[%s139 + $0xc] sm:$0xf]
      %v152 = vld [vmem:[%s139 + $0x10] sm:$0xf]
      %v153 = vld [vmem:[%s139 + $0x14] sm:$0xf]
      %v154 = vld [vmem:[%s139 + $0x18] sm:$0xf]
      %v155 = vld [vmem:[%s139 + $0x1c] sm:$0xf]
      %v156 = vld [vmem:[%s139 + $0x20] sm:$0xf]
      %v157 = vld [vmem:[%s139 + $0x24] sm:$0xf]
      %v158 = vld [vmem:[%s139 + $0x28] sm:$0xf]
      %v159 = vld [vmem:[%s139 + $0x2c] sm:$0xf]
      %v160 = vld [vmem:[%s139 + $0x30] sm:$0xf]
      %v161 = vld [vmem:[%s139 + $0x34] sm:$0xf]
      %v162 = vld [vmem:[%s139 + $0x38] sm:$0xf]
      %v163 = vld [vmem:[%s139 + $0x3c] sm:$0xf]
      %v164 = vld [vmem:[%s139 + $0x40] sm:$0xf]
      %v165 = vld [vmem:[%s139 + $0x44] sm:$0xf]
      %v166 = vld [vmem:[%s139 + $0x48] sm:$0xf]
      %v167 = vld [vmem:[%s139 + $0x4c] sm:$0xf]
      %v168 = vld [vmem:[%s139 + $0x50] sm:$0xf]
      %v169 = vld [vmem:[%s139 + $0x54] sm:$0xf]
      %v170 = vld [vmem:[%s139 + $0x58] sm:$0xf]
      %v171 = vld [vmem:[%s139 + $0x5c] sm:$0xf]
      %v172 = vld [vmem:[%s139 + $0x60] sm:$0xf]
      %v173 = vld [vmem:[%s139 + $0x64] sm:$0xf]
      %v174 = vld [vmem:[%s139 + $0x68] sm:$0xf]
      %v175 = vld [vmem:[%s139 + $0x6c] sm:$0xf]
      %v176 = vld [vmem:[%s139 + $0x70] sm:$0xf]
      %v177 = vld [vmem:[%s139 + $0x74] sm:$0xf]
      %v178 = vld [vmem:[%s139 + $0x78] sm:$0xf]
      %v179 = vld [vmem:[%s139 + $0x7c] sm:$0xf]
      %v180 = vld [vmem:[%s1] sm:$0xf]
      %v181 = vld [vmem:[%s1 + $0x4] sm:$0xf]
      %v214 = vunpack.c.l.b16 %v148
      %v215 = vunpack.c.l.b16 %v149
      %v216 = vunpack.c.l.b16 %v150
      %v217 = vunpack.c.l.b16 %v151
      %v218 = vunpack.c.l.b16 %v152
      %v219 = vunpack.c.l.b16 %v153
      %v220 = vunpack.c.l.b16 %v154
      %v221 = vunpack.c.l.b16 %v155
      %v222 = vunpack.c.l.b16 %v156
      %v223 = vunpack.c.l.b16 %v157
      %v224 = vunpack.c.l.b16 %v158
      %v225 = vunpack.c.l.b16 %v159
      %v226 = vunpack.c.l.b16 %v160
      %v227 = vunpack.c.l.b16 %v161
      %v228 = vunpack.c.l.b16 %v162
      %v229 = vunpack.c.l.b16 %v163
      %v230 = vunpack.c.l.b16 %v164
      %v231 = vunpack.c.l.b16 %v165
      %v232 = vunpack.c.l.b16 %v166
      %v233 = vunpack.c.l.b16 %v167
      %v234 = vunpack.c.l.b16 %v168
      %v235 = vunpack.c.l.b16 %v169
      %v236 = vunpack.c.l.b16 %v170
      %v237 = vunpack.c.l.b16 %v171
      %v238 = vunpack.c.l.b16 %v172
      %v239 = vunpack.c.l.b16 %v173
      %v240 = vunpack.c.l.b16 %v174
      %v241 = vunpack.c.l.b16 %v175
      %v242 = vunpack.c.l.b16 %v176
      %v243 = vunpack.c.l.b16 %v177
      %v244 = vunpack.c.l.b16 %v178
      %v245 = vunpack.c.l.b16 %v179
      %v246 = vpack.c.b16 %v215, %v214
      %v247 = vpack.c.b16 %v217, %v216
      %v248 = vpack.c.b16 %v219, %v218
      %v249 = vpack.c.b16 %v221, %v220
      %v250 = vpack.c.b16 %v223, %v222
      %v251 = vpack.c.b16 %v225, %v224
      %v252 = vpack.c.b16 %v227, %v226
      %v253 = vpack.c.b16 %v229, %v228
      %v254 = vpack.c.b16 %v231, %v230
      %v255 = vpack.c.b16 %v233, %v232
      %v256 = vpack.c.b16 %v235, %v234
      %v257 = vpack.c.b16 %v237, %v236
      %v258 = vpack.c.b16 %v239, %v238
      %v259 = vpack.c.b16 %v241, %v240
      %v260 = vpack.c.b16 %v243, %v242
      %v261 = vpack.c.b16 %v245, %v244
      %v264 = vunpack.c.l.b16 %v180
      %v265 = vunpack.c.l.b16 %v181
      %v266 = vpack.c.b16 %v265, %v264
      %vm268 = vcmask 130048
      %v270 = vsel %vm268, %v246, 0
      %v273 = vsel %vm268, %v247, 0
      %v276 = vsel %vm268, %v248, 0
      %v279 = vsel %vm268, %v249, 0
      %v282 = vsel %vm268, %v250, 0
      %v285 = vsel %vm268, %v251, 0
      %v288 = vsel %vm268, %v252, 0
      %v291 = vsel %vm268, %v253, 0
      %v294 = vsel %vm268, %v254, 0
      %v297 = vsel %vm268, %v255, 0
      %v300 = vsel %vm268, %v256, 0
      %v303 = vsel %vm268, %v257, 0
      %v306 = vsel %vm268, %v258, 0
      %v309 = vsel %vm268, %v259, 0
      %v312 = vsel %vm268, %v260, 0
      %v315 = vsel %vm268, %v261, 0
      %317 = vmatprep.subr.bf16.mxu0 0
      %318 = vmatpush1.bf16.msra.mxu0 %v266
      %319 = vmatprep.subr.bf16.mxu0 0
      %320 = vmatpush1.bf16.msra.mxu0 0
      %321 = vmatprep.subr.bf16.mxu0 0
      %322 = vmatpush1.bf16.msra.mxu0 0
      %323 = vmatprep.subr.bf16.mxu0 0
      %324 = vmatpush1.bf16.msra.mxu0 0
      %325 = vmatprep.subr.bf16.mxu0 0
      %326 = vmatpush1.bf16.msra.mxu0 0
      %327 = vmatprep.subr.bf16.mxu0 0
      %328 = vmatpush1.bf16.msra.mxu0 0
      %329 = vmatprep.subr.bf16.mxu0 0
      %330 = vmatpush1.bf16.msra.mxu0 0
      %331 = vmatprep.subr.bf16.mxu0 0
      %332 = vmatpush1.bf16.msra.mxu0 0
      %333 = vmatprep.subr.bf16.mxu0 0
      %334 = vmatpush1.bf16.msra.mxu0 0
      %335 = vmatprep.subr.bf16.mxu0 0
      %336 = vmatpush1.bf16.msra.mxu0 0
      %337 = vmatprep.subr.bf16.mxu0 0
      %338 = vmatpush1.bf16.msra.mxu0 0
      %339 = vmatprep.subr.bf16.mxu0 0
      %340 = vmatpush1.bf16.msra.mxu0 0
      %341 = vmatprep.subr.bf16.mxu0 0
      %342 = vmatpush1.bf16.msra.mxu0 0
      %343 = vmatprep.subr.bf16.mxu0 0
      %344 = vmatpush1.bf16.msra.mxu0 0
      %345 = vmatprep.subr.bf16.mxu0 0
      %346 = vmatpush1.bf16.msra.mxu0 0
      %347 = vmatprep.subr.bf16.mxu0 0
      %348 = vmatpush1.bf16.msra.mxu0 0
      %349 = vmatprep.mubr.bf16.mxu0 0
      %350 = vmatmul.mubr.bf16.gmra.mrb[0].mxu0 %v270
      %v351 = vpop.f32.mrb[0].mxu0
      %v352 = vadd.f32 0.0, %v351
      %v353 = vpop.f32.mrb[0].mxu0
      %v354 = vpop.f32.mrb[0].mxu0
      %v355 = vadd.f32 0.0, %v354
      %v356 = vpop.f32.mrb[0].mxu0
      %357 = vmatprep.mubr.bf16.mxu0 0
      %358 = vmatmul.mubr.bf16.gmra.mrb[0].mxu0 %v273
      %v359 = vpop.f32.mrb[0].mxu0
      %v360 = vadd.f32 0.0, %v359
      %v361 = vpop.f32.mrb[0].mxu0
      %v362 = vpop.f32.mrb[0].mxu0
      %v363 = vadd.f32 0.0, %v362
      %v364 = vpop.f32.mrb[0].mxu0
      %365 = vmatprep.mubr.bf16.mxu0 0
      %366 = vmatmul.mubr.bf16.gmra.mrb[0].mxu0 %v276
      %v367 = vpop.f32.mrb[0].mxu0
      %v368 = vadd.f32 0.0, %v367
      %v369 = vpop.f32.mrb[0].mxu0
      %v370 = vpop.f32.mrb[0].mxu0
      %v371 = vadd.f32 0.0, %v370
      %v372 = vpop.f32.mrb[0].mxu0
      %373 = vmatprep.mubr.bf16.mxu0 0
      %374 = vmatmul.mubr.bf16.gmra.mrb[0].mxu0 %v279
      %v375 = vpop.f32.mrb[0].mxu0
      %v376 = vadd.f32 0.0, %v375
      %v377 = vpop.f32.mrb[0].mxu0
      %v378 = vpop.f32.mrb[0].mxu0
      %v379 = vadd.f32 0.0, %v378
      %v380 = vpop.f32.mrb[0].mxu0
      %381 = vmatprep.mubr.bf16.mxu0 0
      %382 = vmatmul.mubr.bf16.gmra.mrb[0].mxu0 %v282
      %v383 = vpop.f32.mrb[0].mxu0
      %v384 = vadd.f32 0.0, %v383
      %v385 = vpop.f32.mrb[0].mxu0
      %v386 = vpop.f32.mrb[0].mxu0
      %v387 = vadd.f32 0.0, %v386
      %v388 = vpop.f32.mrb[0].mxu0
      %389 = vmatprep.mubr.bf16.mxu0 0
      %390 = vmatmul.mubr.bf16.gmra.mrb[0].mxu0 %v285
      %v391 = vpop.f32.mrb[0].mxu0
      %v392 = vadd.f32 0.0, %v391
      %v393 = vpop.f32.mrb[0].mxu0
      %v394 = vpop.f32.mrb[0].mxu0
      %v395 = vadd.f32 0.0, %v394
      %v396 = vpop.f32.mrb[0].mxu0
      %397 = vmatprep.mubr.bf16.mxu0 0
      %398 = vmatmul.mubr.bf16.gmra.mrb[0].mxu0 %v288
      %v399 = vpop.f32.mrb[0].mxu0
      %v400 = vadd.f32 0.0, %v399
      %v401 = vpop.f32.mrb[0].mxu0
      %v402 = vpop.f32.mrb[0].mxu0
      %v403 = vadd.f32 0.0, %v402
      %v404 = vpop.f32.mrb[0].mxu0
      %405 = vmatprep.mubr.bf16.mxu0 0
      %406 = vmatmul.mubr.bf16.gmra.mrb[0].mxu0 %v291
      %v407 = vpop.f32.mrb[0].mxu0
      %v408 = vadd.f32 0.0, %v407
      %v409 = vpop.f32.mrb[0].mxu0
      %v410 = vpop.f32.mrb[0].mxu0
      %v411 = vadd.f32 0.0, %v410
      %v412 = vpop.f32.mrb[0].mxu0
      %413 = vmatprep.mubr.bf16.mxu0 0
      %414 = vmatmul.mubr.bf16.gmra.mrb[0].mxu0 %v294
      %v415 = vpop.f32.mrb[0].mxu0
      %v416 = vadd.f32 0.0, %v415
      %v417 = vpop.f32.mrb[0].mxu0
      %v418 = vpop.f32.mrb[0].mxu0
      %v419 = vadd.f32 0.0, %v418
      %v420 = vpop.f32.mrb[0].mxu0
      %421 = vmatprep.mubr.bf16.mxu0 0
      %422 = vmatmul.mubr.bf16.gmra.mrb[0].mxu0 %v297
      %v423 = vpop.f32.mrb[0].mxu0
      %v424 = vadd.f32 0.0, %v423
      %v425 = vpop.f32.mrb[0].mxu0
      %v426 = vpop.f32.mrb[0].mxu0
      %v427 = vadd.f32 0.0, %v426
      %v428 = vpop.f32.mrb[0].mxu0
      %429 = vmatprep.mubr.bf16.mxu0 0
      %430 = vmatmul.mubr.bf16.gmra.mrb[0].mxu0 %v300
      %v431 = vpop.f32.mrb[0].mxu0
      %v432 = vadd.f32 0.0, %v431
      %v433 = vpop.f32.mrb[0].mxu0
      %v434 = vpop.f32.mrb[0].mxu0
      %v435 = vadd.f32 0.0, %v434
      %v436 = vpop.f32.mrb[0].mxu0
      %437 = vmatprep.mubr.bf16.mxu0 0
      %438 = vmatmul.mubr.bf16.gmra.mrb[0].mxu0 %v303
      %v439 = vpop.f32.mrb[0].mxu0
      %v440 = vadd.f32 0.0, %v439
      %v441 = vpop.f32.mrb[0].mxu0
      %v442 = vpop.f32.mrb[0].mxu0
      %v443 = vadd.f32 0.0, %v442
      %v444 = vpop.f32.mrb[0].mxu0
      %445 = vmatprep.mubr.bf16.mxu0 0
      %446 = vmatmul.mubr.bf16.gmra.mrb[0].mxu0 %v306
      %v447 = vpop.f32.mrb[0].mxu0
      %v448 = vadd.f32 0.0, %v447
      %v449 = vpop.f32.mrb[0].mxu0
      %v450 = vpop.f32.mrb[0].mxu0
      %v451 = vadd.f32 0.0, %v450
      %v452 = vpop.f32.mrb[0].mxu0
      %453 = vmatprep.mubr.bf16.mxu0 0
      %454 = vmatmul.mubr.bf16.gmra.mrb[0].mxu0 %v309
      %v455 = vpop.f32.mrb[0].mxu0
      %v456 = vadd.f32 0.0, %v455
      %v457 = vpop.f32.mrb[0].mxu0
      %v458 = vpop.f32.mrb[0].mxu0
      %v459 = vadd.f32 0.0, %v458
      %v460 = vpop.f32.mrb[0].mxu0
      %461 = vmatprep.mubr.bf16.mxu0 0
      %462 = vmatmul.mubr.bf16.gmra.mrb[0].mxu0 %v312
      %v463 = vpop.f32.mrb[0].mxu0
      %v464 = vadd.f32 0.0, %v463
      %v465 = vpop.f32.mrb[0].mxu0
      %v466 = vpop.f32.mrb[0].mxu0
      %v467 = vadd.f32 0.0, %v466
      %v468 = vpop.f32.mrb[0].mxu0
      %469 = vmatprep.mubr.bf16.mxu0 0
      %470 = vmatmul.mubr.bf16.gmra.mrb[0].mxu0 %v315
      %v471 = vpop.f32.mrb[0].mxu0
      %v472 = vadd.f32 0.0, %v471
      %v473 = vpop.f32.mrb[0].mxu0
      %v474 = vpop.f32.mrb[0].mxu0
      %v475 = vadd.f32 0.0, %v474
      %v476 = vpop.f32.mrb[0].mxu0
      %477 = vdwg.mxu0
      %vm478 = vcmp.gt.f32.partialorder %v352, 0.0
      %vm479 = vcmp.gt.f32.partialorder %v355, 0.0
      %vm480 = vcmp.gt.f32.partialorder %v360, 0.0
      %vm481 = vcmp.gt.f32.partialorder %v363, 0.0
      %vm482 = vcmp.gt.f32.partialorder %v368, 0.0
      %vm483 = vcmp.gt.f32.partialorder %v371, 0.0
      %vm484 = vcmp.gt.f32.partialorder %v376, 0.0
      %vm485 = vcmp.gt.f32.partialorder %v379, 0.0
      %vm486 = vcmp.gt.f32.partialorder %v384, 0.0
      %vm487 = vcmp.gt.f32.partialorder %v387, 0.0
      %vm488 = vcmp.gt.f32.partialorder %v392, 0.0
      %vm489 = vcmp.gt.f32.partialorder %v395, 0.0
      %vm490 = vcmp.gt.f32.partialorder %v400, 0.0
      %vm491 = vcmp.gt.f32.partialorder %v403, 0.0
      %vm492 = vcmp.gt.f32.partialorder %v408, 0.0
      %vm493 = vcmp.gt.f32.partialorder %v411, 0.0
      %vm494 = vcmp.gt.f32.partialorder %v416, 0.0
      %vm495 = vcmp.gt.f32.partialorder %v419, 0.0
      %vm496 = vcmp.gt.f32.partialorder %v424, 0.0
      %vm497 = vcmp.gt.f32.partialorder %v427, 0.0
      %vm498 = vcmp.gt.f32.partialorder %v432, 0.0
      %vm499 = vcmp.gt.f32.partialorder %v435, 0.0
      %vm500 = vcmp.gt.f32.partialorder %v440, 0.0
      %vm501 = vcmp.gt.f32.partialorder %v443, 0.0
      %vm502 = vcmp.gt.f32.partialorder %v448, 0.0
      %vm503 = vcmp.gt.f32.partialorder %v451, 0.0
      %vm504 = vcmp.gt.f32.partialorder %v456, 0.0
      %vm505 = vcmp.gt.f32.partialorder %v459, 0.0
      %vm506 = vcmp.gt.f32.partialorder %v464, 0.0
      %vm507 = vcmp.gt.f32.partialorder %v467, 0.0
      %vm508 = vcmp.gt.f32.partialorder %v472, 0.0
      %vm509 = vcmp.gt.f32.partialorder %v475, 0.0
      %v510 = vmul.f32 %v352, 0.2
      %v511 = vmul.f32 %v355, 0.2
      %v512 = vmul.f32 %v360, 0.2
      %v513 = vmul.f32 %v363, 0.2
      %v514 = vmul.f32 %v368, 0.2
      %v515 = vmul.f32 %v371, 0.2
      %v516 = vmul.f32 %v376, 0.2
      %v517 = vmul.f32 %v379, 0.2
      %v518 = vmul.f32 %v384, 0.2
      %v519 = vmul.f32 %v387, 0.2
      %v520 = vmul.f32 %v392, 0.2
      %v521 = vmul.f32 %v395, 0.2
      %v522 = vmul.f32 %v400, 0.2
      %v523 = vmul.f32 %v403, 0.2
      %v524 = vmul.f32 %v408, 0.2
      %v525 = vmul.f32 %v411, 0.2
      %v526 = vmul.f32 %v416, 0.2
      %v527 = vmul.f32 %v419, 0.2
      %v528 = vmul.f32 %v424, 0.2
      %v529 = vmul.f32 %v427, 0.2
      %v530 = vmul.f32 %v432, 0.2
      %v531 = vmul.f32 %v435, 0.2
      %v532 = vmul.f32 %v440, 0.2
      %v533 = vmul.f32 %v443, 0.2
      %v534 = vmul.f32 %v448, 0.2
      %v535 = vmul.f32 %v451, 0.2
      %v536 = vmul.f32 %v456, 0.2
      %v537 = vmul.f32 %v459, 0.2
      %v538 = vmul.f32 %v464, 0.2
      %v539 = vmul.f32 %v467, 0.2
      %v540 = vmul.f32 %v472, 0.2
      %v541 = vmul.f32 %v475, 0.2
      %v542 = vsel %vm478, %v352, %v510
      %v543 = vsel %vm479, %v355, %v511
      %v544 = vsel %vm480, %v360, %v512
      %v545 = vsel %vm481, %v363, %v513
      %v546 = vsel %vm482, %v368, %v514
      %v547 = vsel %vm483, %v371, %v515
      %v548 = vsel %vm484, %v376, %v516
      %v549 = vsel %vm485, %v379, %v517
      %v550 = vsel %vm486, %v384, %v518
      %v551 = vsel %vm487, %v387, %v519
      %v552 = vsel %vm488, %v392, %v520
      %v553 = vsel %vm489, %v395, %v521
      %v554 = vsel %vm490, %v400, %v522
      %v555 = vsel %vm491, %v403, %v523
      %v556 = vsel %vm492, %v408, %v524
      %v557 = vsel %vm493, %v411, %v525
      %v558 = vsel %vm494, %v416, %v526
      %v559 = vsel %vm495, %v419, %v527
      %v560 = vsel %vm496, %v424, %v528
      %v561 = vsel %vm497, %v427, %v529
      %v562 = vsel %vm498, %v432, %v530
      %v563 = vsel %vm499, %v435, %v531
      %v564 = vsel %vm500, %v440, %v532
      %v565 = vsel %vm501, %v443, %v533
      %v566 = vsel %vm502, %v448, %v534
      %v567 = vsel %vm503, %v451, %v535
      %v568 = vsel %vm504, %v456, %v536
      %v569 = vsel %vm505, %v459, %v537
      %v570 = vsel %vm506, %v464, %v538
      %v571 = vsel %vm507, %v467, %v539
      %v572 = vsel %vm508, %v472, %v540
      %v573 = vsel %vm509, %v475, %v541
      %v574 = vpack.c.bf16 %v543, %v542
      %v575 = vpack.c.bf16 %v545, %v544
      %v576 = vpack.c.bf16 %v547, %v546
      %v577 = vpack.c.bf16 %v549, %v548
      %v578 = vpack.c.bf16 %v551, %v550
      %v579 = vpack.c.bf16 %v553, %v552
      %v580 = vpack.c.bf16 %v555, %v554
      %v581 = vpack.c.bf16 %v557, %v556
      %v582 = vpack.c.bf16 %v559, %v558
      %v583 = vpack.c.bf16 %v561, %v560
      %v584 = vpack.c.bf16 %v563, %v562
      %v585 = vpack.c.bf16 %v565, %v564
      %v586 = vpack.c.bf16 %v567, %v566
      %v587 = vpack.c.bf16 %v569, %v568
      %v588 = vpack.c.bf16 %v571, %v570
      %v589 = vpack.c.bf16 %v573, %v572
      %v606 = vunpack.c.l.b16 %v574
      %v607 = vunpack.c.h.b16 %v574
      %v608 = vunpack.c.l.b16 %v575
      %v609 = vunpack.c.h.b16 %v575
      %v610 = vunpack.c.l.b16 %v576
      %v611 = vunpack.c.h.b16 %v576
      %v612 = vunpack.c.l.b16 %v577
      %v613 = vunpack.c.h.b16 %v577
      %v614 = vunpack.c.l.b16 %v578
      %v615 = vunpack.c.h.b16 %v578
      %v616 = vunpack.c.l.b16 %v579
      %v617 = vunpack.c.h.b16 %v579
      %v618 = vunpack.c.l.b16 %v580
      %v619 = vunpack.c.h.b16 %v580
      %v620 = vunpack.c.l.b16 %v581
      %v621 = vunpack.c.h.b16 %v581
      %v622 = vunpack.c.l.b16 %v582
      %v623 = vunpack.c.h.b16 %v582
      %v624 = vunpack.c.l.b16 %v583
      %v625 = vunpack.c.h.b16 %v583
      %v626 = vunpack.c.l.b16 %v584
      %v627 = vunpack.c.h.b16 %v584
      %v628 = vunpack.c.l.b16 %v585
      %v629 = vunpack.c.h.b16 %v585
      %v630 = vunpack.c.l.b16 %v586
      %v631 = vunpack.c.h.b16 %v586
      %v632 = vunpack.c.l.b16 %v587
      %v633 = vunpack.c.h.b16 %v587
      %v634 = vunpack.c.l.b16 %v588
      %v635 = vunpack.c.h.b16 %v588
      %v636 = vunpack.c.l.b16 %v589
      %v637 = vunpack.c.h.b16 %v589
      %v638 = vpack.c.b16 %v606, %v606
      %v639 = vpack.c.b16 %v607, %v607
      %v640 = vpack.c.b16 %v608, %v608
      %v641 = vpack.c.b16 %v609, %v609
      %v642 = vpack.c.b16 %v610, %v610
      %v643 = vpack.c.b16 %v611, %v611
      %v644 = vpack.c.b16 %v612, %v612
      %v645 = vpack.c.b16 %v613, %v613
      %v646 = vpack.c.b16 %v614, %v614
      %v647 = vpack.c.b16 %v615, %v615
      %v648 = vpack.c.b16 %v616, %v616
      %v649 = vpack.c.b16 %v617, %v617
      %v650 = vpack.c.b16 %v618, %v618
      %v651 = vpack.c.b16 %v619, %v619
      %v652 = vpack.c.b16 %v620, %v620
      %v653 = vpack.c.b16 %v621, %v621
      %v654 = vpack.c.b16 %v622, %v622
      %v655 = vpack.c.b16 %v623, %v623
      %v656 = vpack.c.b16 %v624, %v624
      %v657 = vpack.c.b16 %v625, %v625
      %v658 = vpack.c.b16 %v626, %v626
      %v659 = vpack.c.b16 %v627, %v627
      %v660 = vpack.c.b16 %v628, %v628
      %v661 = vpack.c.b16 %v629, %v629
      %v662 = vpack.c.b16 %v630, %v630
      %v663 = vpack.c.b16 %v631, %v631
      %v664 = vpack.c.b16 %v632, %v632
      %v665 = vpack.c.b16 %v633, %v633
      %v666 = vpack.c.b16 %v634, %v634
      %v667 = vpack.c.b16 %v635, %v635
      %v668 = vpack.c.b16 %v636, %v636
      %v669 = vpack.c.b16 %v637, %v637
      %702 = vst [vmem:[%s145] sm:$0xf] %v638
      %703 = vst [vmem:[%s145 + $0x4] sm:$0xf] %v639
      %704 = vst [vmem:[%s145 + $0x8] sm:$0xf] %v640
      %705 = vst [vmem:[%s145 + $0xc] sm:$0xf] %v641
      %706 = vst [vmem:[%s145 + $0x10] sm:$0xf] %v642
      %707 = vst [vmem:[%s145 + $0x14] sm:$0xf] %v643
      %708 = vst [vmem:[%s145 + $0x18] sm:$0xf] %v644
      %709 = vst [vmem:[%s145 + $0x1c] sm:$0xf] %v645
      %710 = vst [vmem:[%s145 + $0x20] sm:$0xf] %v646
      %711 = vst [vmem:[%s145 + $0x24] sm:$0xf] %v647
      %712 = vst [vmem:[%s145 + $0x28] sm:$0xf] %v648
      %713 = vst [vmem:[%s145 + $0x2c] sm:$0xf] %v649
      %714 = vst [vmem:[%s145 + $0x30] sm:$0xf] %v650
      %715 = vst [vmem:[%s145 + $0x34] sm:$0xf] %v651
      %716 = vst [vmem:[%s145 + $0x38] sm:$0xf] %v652
      %717 = vst [vmem:[%s145 + $0x3c] sm:$0xf] %v653
      %718 = vst [vmem:[%s145 + $0x40] sm:$0xf] %v654
      %719 = vst [vmem:[%s145 + $0x44] sm:$0xf] %v655
      %720 = vst [vmem:[%s145 + $0x48] sm:$0xf] %v656
      %721 = vst [vmem:[%s145 + $0x4c] sm:$0xf] %v657
      %722 = vst [vmem:[%s145 + $0x50] sm:$0xf] %v658
      %723 = vst [vmem:[%s145 + $0x54] sm:$0xf] %v659
      %724 = vst [vmem:[%s145 + $0x58] sm:$0xf] %v660
      %725 = vst [vmem:[%s145 + $0x5c] sm:$0xf] %v661
      %726 = vst [vmem:[%s145 + $0x60] sm:$0xf] %v662
      %727 = vst [vmem:[%s145 + $0x64] sm:$0xf] %v663
      %728 = vst [vmem:[%s145 + $0x68] sm:$0xf] %v664
      %729 = vst [vmem:[%s145 + $0x6c] sm:$0xf] %v665
      %730 = vst [vmem:[%s145 + $0x70] sm:$0xf] %v666
      %731 = vst [vmem:[%s145 + $0x74] sm:$0xf] %v667
      %732 = vst [vmem:[%s145 + $0x78] sm:$0xf] %v668
      %733 = vst [vmem:[%s145 + $0x7c] sm:$0xf] %v669
      %s734 = smul.u32 32, %s13
      %p735 = scmp.lt.s32.totalorder %s734, 63
      %s736 = scalar_select %p735, %s734, 63
      %s737 = smul.addr %s736, 4
      %s738 = scalar_lea.vmem %s2, %s737
      // Predicated region
      $region29: #{enc_forward.4} parent=27 // pred_check
        %p739 = pneg %p78
      $region30: #{enc_forward.4} parent=27 // pred_check_branch
        %741 = sbr.rel (%p739) target = $region32
      $region31: #{enc_forward.4} parent=27 // pred_region
        %s742 = smul.u32 32, %s13
      $region32: #{enc_forward.4} parent=27 // pred_fallthru
        _
    $region28: #{enc_forward.4} parent=5 // pred_fallthru
      _
    %p743 = scmp.le.s32.totalorder 2, %s8
    // Predicated region
    $region33: #{enc_forward.4} parent=5 // pred_check
      %p744 = pneg %p743
    $region34: #{enc_forward.4} parent=5 // pred_check_branch
      %746 = sbr.rel (%p744) target = $region36
    $region35: #{enc_forward.4} parent=5 // pred_region
      %s747 = ssub.s32 %s8, 2
      // Predicated region
      $region37: #{enc_forward.4} parent=35 // pred_check
        %p748 = pneg %p84
      $region38: #{enc_forward.4} parent=35 // pred_check_branch
        %750 = sbr.rel (%p748) target = $region40
      $region39: #{enc_forward.4} parent=35 // pred_region
        %s751 = smul.u32 32, %s14
        %p752 = scmp.lt.s32.totalorder %s751, 63
        %s753 = scalar_select %p752, %s751, 63
        %s754 = smul.addr %s753, 4
        %s755 = scalar_lea.vmem %s2, %s754
      $region40: #{enc_forward.4} parent=35 // pred_fallthru
        _
    $region36: #{enc_forward.4} parent=5 // pred_fallthru
      _
  $region6: #{enc_forward.4} parent=0 // loop_footer
    %s12 = sadd.s32 1, %s8
  $region7: #{enc_forward.4} parent=0 // loop_footer_branch
    %7 = sbr.rel target = $region3
  $region8: #{enc_forward.4} parent=0 // loop_exit
    _

// kernel: enc_forward.5
$region0: #{enc_forward.5}
  #allocation0 [shape = 'u32[]', space=smem, size = 0x4, offset = 0x4, fixed_abs, tag = 'smem constant byte address 0x4 - core index']
  #allocation1 [shape = 'u32[144,128]{1,0:T(1,128)}', space=vmem, size = 0x12000, scoped, tag = 'internal scratch']
  %s0 = inlined_call_operand.vmem [shape: bf16[128,512], index: 0, kind: input, shape index: {}]
  %s1 = inlined_call_operand.vmem [shape: bf16[512,128], index: 1, kind: input, shape index: {}]
  %s2 = inlined_call_operand.vmem [shape: bf16[128,128], index: 2, kind: output, shape index: {0}]
  %s3 = inlined_call_operand.vmem [shape: f32[8,128], index: 3, kind: output, shape index: {1}]
  %4 = xla_tuple %s2, %s3
  %s5 = sld [smem:[#allocation0]]
  $region26: #{enc_forward.5} parent=0
    _
  %s7 = ssub.s32 1, %s5
  %s8 = scalar_select 0, %s7, %s5
  // Predicated region
  $region2: #{enc_forward.5} parent=0 // pred_check
    _
  $region3: #{enc_forward.5} parent=0 // pred_check_branch
    %10 = sbr.rel (0) target = $region5
  $region4: #{enc_forward.5} parent=0 // pred_region
    _
  $region5: #{enc_forward.5} parent=0 // pred_fallthru
    _
  // Predicated region
  $region6: #{enc_forward.5} parent=0 // pred_check
    _
  $region7: #{enc_forward.5} parent=0 // pred_check_branch
    %12 = sbr.rel (0) target = $region9
  $region8: #{enc_forward.5} parent=0 // pred_region
    _
  $region9: #{enc_forward.5} parent=0 // pred_fallthru
    _
  %v14 = vld [vmem:[%s0] sm:$0xff]
  %v15 = vld [vmem:[%s0 + $0x8] sm:$0xff]
  %v16 = vld [vmem:[%s0 + $0x10] sm:$0xff]
  %v17 = vld [vmem:[%s0 + $0x18] sm:$0xff]
  %v18 = vld [vmem:[%s0 + $0x20] sm:$0xff]
  %v19 = vld [vmem:[%s0 + $0x28] sm:$0xff]
  %v20 = vld [vmem:[%s0 + $0x30] sm:$0xff]
  %v21 = vld [vmem:[%s0 + $0x38] sm:$0xff]
  %v22 = vld [vmem:[%s0 + $0x40] sm:$0xff]
  %v23 = vld [vmem:[%s0 + $0x48] sm:$0xff]
  %v24 = vld [vmem:[%s0 + $0x50] sm:$0xff]
  %v25 = vld [vmem:[%s0 + $0x58] sm:$0xff]
  %v26 = vld [vmem:[%s0 + $0x60] sm:$0xff]
  %v27 = vld [vmem:[%s0 + $0x68] sm:$0xff]
  %v28 = vld [vmem:[%s0 + $0x70] sm:$0xff]
  %v29 = vld [vmem:[%s0 + $0x78] sm:$0xff]
  %v30 = vld [vmem:[%s0 + $0x80] sm:$0xff]
  %v31 = vld [vmem:[%s0 + $0x88] sm:$0xff]
  %v32 = vld [vmem:[%s0 + $0x90] sm:$0xff]
  %v33 = vld [vmem:[%s0 + $0x98] sm:$0xff]
  %v34 = vld [vmem:[%s0 + $0xa0] sm:$0xff]
  %v35 = vld [vmem:[%s0 + $0xa8] sm:$0xff]
  %v36 = vld [vmem:[%s0 + $0xb0] sm:$0xff]
  %v37 = vld [vmem:[%s0 + $0xb8] sm:$0xff]
  %v38 = vld [vmem:[%s0 + $0xc0] sm:$0xff]
  %v39 = vld [vmem:[%s0 + $0xc8] sm:$0xff]
  %v40 = vld [vmem:[%s0 + $0xd0] sm:$0xff]
  %v41 = vld [vmem:[%s0 + $0xd8] sm:$0xff]
  %v42 = vld [vmem:[%s0 + $0xe0] sm:$0xff]
  %v43 = vld [vmem:[%s0 + $0xe8] sm:$0xff]
  %v44 = vld [vmem:[%s0 + $0xf0] sm:$0xff]
  %v45 = vld [vmem:[%s0 + $0xf8] sm:$0xff]
  %v46 = vld [vmem:[%s1] sm:$0xf]
  %v47 = vld [vmem:[%s1 + $0x4] sm:$0xf]
  %v48 = vld [vmem:[%s1 + $0x8] sm:$0xf]
  %v49 = vld [vmem:[%s1 + $0xc] sm:$0xf]
  %v50 = vld [vmem:[%s1 + $0x10] sm:$0xf]
  %v51 = vld [vmem:[%s1 + $0x14] sm:$0xf]
  %v52 = vld [vmem:[%s1 + $0x18] sm:$0xf]
  %v53 = vld [vmem:[%s1 + $0x1c] sm:$0xf]
  %v54 = vld [vmem:[%s1 + $0x20] sm:$0xf]
  %v55 = vld [vmem:[%s1 + $0x24] sm:$0xf]
  %v56 = vld [vmem:[%s1 + $0x28] sm:$0xf]
  %v57 = vld [vmem:[%s1 + $0x2c] sm:$0xf]
  %v58 = vld [vmem:[%s1 + $0x30] sm:$0xf]
  %v59 = vld [vmem:[%s1 + $0x34] sm:$0xf]
  %v60 = vld [vmem:[%s1 + $0x38] sm:$0xf]
  %v61 = vld [vmem:[%s1 + $0x3c] sm:$0xf]
  %v62 = vld [vmem:[%s1 + $0x40] sm:$0xf]
  %v63 = vld [vmem:[%s1 + $0x44] sm:$0xf]
  %v64 = vld [vmem:[%s1 + $0x48] sm:$0xf]
  %v65 = vld [vmem:[%s1 + $0x4c] sm:$0xf]
  %v66 = vld [vmem:[%s1 + $0x50] sm:$0xf]
  %v67 = vld [vmem:[%s1 + $0x54] sm:$0xf]
  %v68 = vld [vmem:[%s1 + $0x58] sm:$0xf]
  %v69 = vld [vmem:[%s1 + $0x5c] sm:$0xf]
  %v70 = vld [vmem:[%s1 + $0x60] sm:$0xf]
  %v71 = vld [vmem:[%s1 + $0x64] sm:$0xf]
  %v72 = vld [vmem:[%s1 + $0x68] sm:$0xf]
  %v73 = vld [vmem:[%s1 + $0x6c] sm:$0xf]
  %v74 = vld [vmem:[%s1 + $0x70] sm:$0xf]
  %v75 = vld [vmem:[%s1 + $0x74] sm:$0xf]
  %v76 = vld [vmem:[%s1 + $0x78] sm:$0xf]
  %v77 = vld [vmem:[%s1 + $0x7c] sm:$0xf]
  %v78 = vld [vmem:[%s1 + $0x80] sm:$0xf]
  %v79 = vld [vmem:[%s1 + $0x84] sm:$0xf]
  %v80 = vld [vmem:[%s1 + $0x88] sm:$0xf]
  %v81 = vld [vmem:[%s1 + $0x8c] sm:$0xf]
  %v82 = vld [vmem:[%s1 + $0x90] sm:$0xf]
  %v83 = vld [vmem:[%s1 + $0x94] sm:$0xf]
  %v84 = vld [vmem:[%s1 + $0x98] sm:$0xf]
  %v85 = vld [vmem:[%s1 + $0x9c] sm:$0xf]
  %v86 = vld [vmem:[%s1 + $0xa0] sm:$0xf]
  %v87 = vld [vmem:[%s1 + $0xa4] sm:$0xf]
  %v88 = vld [vmem:[%s1 + $0xa8] sm:$0xf]
  %v89 = vld [vmem:[%s1 + $0xac] sm:$0xf]
  %v90 = vld [vmem:[%s1 + $0xb0] sm:$0xf]
  %v91 = vld [vmem:[%s1 + $0xb4] sm:$0xf]
  %v92 = vld [vmem:[%s1 + $0xb8] sm:$0xf]
  %v93 = vld [vmem:[%s1 + $0xbc] sm:$0xf]
  %v94 = vld [vmem:[%s1 + $0xc0] sm:$0xf]
  %v95 = vld [vmem:[%s1 + $0xc4] sm:$0xf]
  %v96 = vld [vmem:[%s1 + $0xc8] sm:$0xf]
  %v97 = vld [vmem:[%s1 + $0xcc] sm:$0xf]
  %v98 = vld [vmem:[%s1 + $0xd0] sm:$0xf]
  %v99 = vld [vmem:[%s1 + $0xd4] sm:$0xf]
  %v100 = vld [vmem:[%s1 + $0xd8] sm:$0xf]
  %v101 = vld [vmem:[%s1 + $0xdc] sm:$0xf]
  %v102 = vld [vmem:[%s1 + $0xe0] sm:$0xf]
  %v103 = vld [vmem:[%s1 + $0xe4] sm:$0xf]
  %v104 = vld [vmem:[%s1 + $0xe8] sm:$0xf]
  %v105 = vld [vmem:[%s1 + $0xec] sm:$0xf]
  %v106 = vld [vmem:[%s1 + $0xf0] sm:$0xf]
  %v107 = vld [vmem:[%s1 + $0xf4] sm:$0xf]
  %v108 = vld [vmem:[%s1 + $0xf8] sm:$0xf]
  %v109 = vld [vmem:[%s1 + $0xfc] sm:$0xf]
  %v142 = vunpack.c.l.b16 %v14
  %v143 = vunpack.c.h.b16 %v14
  %v144 = vunpack.c.l.b16 %v15
  %v145 = vunpack.c.h.b16 %v15
  %v146 = vunpack.c.l.b16 %v16
  %v147 = vunpack.c.h.b16 %v16
  %v148 = vunpack.c.l.b16 %v17
  %v149 = vunpack.c.h.b16 %v17
  %v150 = vunpack.c.l.b16 %v18
  %v151 = vunpack.c.h.b16 %v18
  %v152 = vunpack.c.l.b16 %v19
  %v153 = vunpack.c.h.b16 %v19
  %v154 = vunpack.c.l.b16 %v20
  %v155 = vunpack.c.h.b16 %v20
  %v156 = vunpack.c.l.b16 %v21
  %v157 = vunpack.c.h.b16 %v21
  %v158 = vunpack.c.l.b16 %v22
  %v159 = vunpack.c.h.b16 %v22
  %v160 = vunpack.c.l.b16 %v23
  %v161 = vunpack.c.h.b16 %v23
  %v162 = vunpack.c.l.b16 %v24
  %v163 = vunpack.c.h.b16 %v24
  %v164 = vunpack.c.l.b16 %v25
  %v165 = vunpack.c.h.b16 %v25
  %v166 = vunpack.c.l.b16 %v26
  %v167 = vunpack.c.h.b16 %v26
  %v168 = vunpack.c.l.b16 %v27
  %v169 = vunpack.c.h.b16 %v27
  %v170 = vunpack.c.l.b16 %v28
  %v171 = vunpack.c.h.b16 %v28
  %v172 = vunpack.c.l.b16 %v29
  %v173 = vunpack.c.h.b16 %v29
  %v174 = vunpack.c.l.b16 %v30
  %v175 = vunpack.c.h.b16 %v30
  %v176 = vunpack.c.l.b16 %v31
  %v177 = vunpack.c.h.b16 %v31
  %v178 = vunpack.c.l.b16 %v32
  %v179 = vunpack.c.h.b16 %v32
  %v180 = vunpack.c.l.b16 %v33
  %v181 = vunpack.c.h.b16 %v33
  %v182 = vunpack.c.l.b16 %v34
  %v183 = vunpack.c.h.b16 %v34
  %v184 = vunpack.c.l.b16 %v35
  %v185 = vunpack.c.h.b16 %v35
  %v186 = vunpack.c.l.b16 %v36
  %v187 = vunpack.c.h.b16 %v36
  %v188 = vunpack.c.l.b16 %v37
  %v189 = vunpack.c.h.b16 %v37
  %v190 = vunpack.c.l.b16 %v38
  %v191 = vunpack.c.h.b16 %v38
  %v192 = vunpack.c.l.b16 %v39
  %v193 = vunpack.c.h.b16 %v39
  %v194 = vunpack.c.l.b16 %v40
  %v195 = vunpack.c.h.b16 %v40
  %v196 = vunpack.c.l.b16 %v41
  %v197 = vunpack.c.h.b16 %v41
  %v198 = vunpack.c.l.b16 %v42
  %v199 = vunpack.c.h.b16 %v42
  %v200 = vunpack.c.l.b16 %v43
  %v201 = vunpack.c.h.b16 %v43
  %v202 = vunpack.c.l.b16 %v44
  %v203 = vunpack.c.h.b16 %v44
  %v204 = vunpack.c.l.b16 %v45
  %v205 = vunpack.c.h.b16 %v45
  %v206 = vpack.c.b16 %v146, %v142
  %v207 = vpack.c.b16 %v147, %v143
  %v208 = vpack.c.b16 %v148, %v144
  %v209 = vpack.c.b16 %v149, %v145
  %v210 = vpack.c.b16 %v154, %v150
  %v211 = vpack.c.b16 %v155, %v151
  %v212 = vpack.c.b16 %v156, %v152
  %v213 = vpack.c.b16 %v157, %v153
  %v214 = vpack.c.b16 %v162, %v158
  %v215 = vpack.c.b16 %v163, %v159
  %v216 = vpack.c.b16 %v164, %v160
  %v217 = vpack.c.b16 %v165, %v161
  %v218 = vpack.c.b16 %v170, %v166
  %v219 = vpack.c.b16 %v171, %v167
  %v220 = vpack.c.b16 %v172, %v168
  %v221 = vpack.c.b16 %v173, %v169
  %v222 = vpack.c.b16 %v178, %v174
  %v223 = vpack.c.b16 %v179, %v175
  %v224 = vpack.c.b16 %v180, %v176
  %v225 = vpack.c.b16 %v181, %v177
  %v226 = vpack.c.b16 %v186, %v182
  %v227 = vpack.c.b16 %v187, %v183
  %v228 = vpack.c.b16 %v188, %v184
  %v229 = vpack.c.b16 %v189, %v185
  %v230 = vpack.c.b16 %v194, %v190
  %v231 = vpack.c.b16 %v195, %v191
  %v232 = vpack.c.b16 %v196, %v192
  %v233 = vpack.c.b16 %v197, %v193
  %v234 = vpack.c.b16 %v202, %v198
  %v235 = vpack.c.b16 %v203, %v199
  %v236 = vpack.c.b16 %v204, %v200
  %v237 = vpack.c.b16 %v205, %v201
  %v334 = vunpack.c.l.b16 %v46
  %v335 = vunpack.c.l.b16 %v47
  %v336 = vunpack.c.l.b16 %v48
  %v337 = vunpack.c.l.b16 %v49
  %v338 = vunpack.c.l.b16 %v50
  %v339 = vunpack.c.l.b16 %v51
  %v340 = vunpack.c.l.b16 %v52
  %v341 = vunpack.c.l.b16 %v53
  %v342 = vunpack.c.l.b16 %v54
  %v343 = vunpack.c.l.b16 %v55
  %v344 = vunpack.c.l.b16 %v56
  %v345 = vunpack.c.l.b16 %v57
  %v346 = vunpack.c.l.b16 %v58
  %v347 = vunpack.c.l.b16 %v59
  %v348 = vunpack.c.l.b16 %v60
  %v349 = vunpack.c.l.b16 %v61
  %v350 = vunpack.c.l.b16 %v62
  %v351 = vunpack.c.l.b16 %v63
  %v352 = vunpack.c.l.b16 %v64
  %v353 = vunpack.c.l.b16 %v65
  %v354 = vunpack.c.l.b16 %v66
  %v355 = vunpack.c.l.b16 %v67
  %v356 = vunpack.c.l.b16 %v68
  %v357 = vunpack.c.l.b16 %v69
  %v358 = vunpack.c.l.b16 %v70
  %v359 = vunpack.c.l.b16 %v71
  %v360 = vunpack.c.l.b16 %v72
  %v361 = vunpack.c.l.b16 %v73
  %v362 = vunpack.c.l.b16 %v74
  %v363 = vunpack.c.l.b16 %v75
  %v364 = vunpack.c.l.b16 %v76
  %v365 = vunpack.c.l.b16 %v77
  %v366 = vunpack.c.l.b16 %v78
  %v367 = vunpack.c.l.b16 %v79
  %v368 = vunpack.c.l.b16 %v80
  %v369 = vunpack.c.l.b16 %v81
  %v370 = vunpack.c.l.b16 %v82
  %v371 = vunpack.c.l.b16 %v83
  %v372 = vunpack.c.l.b16 %v84
  %v373 = vunpack.c.l.b16 %v85
  %v374 = vunpack.c.l.b16 %v86
  %v375 = vunpack.c.l.b16 %v87
  %v376 = vunpack.c.l.b16 %v88
  %v377 = vunpack.c.l.b16 %v89
  %v378 = vunpack.c.l.b16 %v90
  %v379 = vunpack.c.l.b16 %v91
  %v380 = vunpack.c.l.b16 %v92
  %v381 = vunpack.c.l.b16 %v93
  %v382 = vunpack.c.l.b16 %v94
  %v383 = vunpack.c.l.b16 %v95
  %v384 = vunpack.c.l.b16 %v96
  %v385 = vunpack.c.l.b16 %v97
  %v386 = vunpack.c.l.b16 %v98
  %v387 = vunpack.c.l.b16 %v99
  %v388 = vunpack.c.l.b16 %v100
  %v389 = vunpack.c.l.b16 %v101
  %v390 = vunpack.c.l.b16 %v102
  %v391 = vunpack.c.l.b16 %v103
  %v392 = vunpack.c.l.b16 %v104
  %v393 = vunpack.c.l.b16 %v105
  %v394 = vunpack.c.l.b16 %v106
  %v395 = vunpack.c.l.b16 %v107
  %v396 = vunpack.c.l.b16 %v108
  %v397 = vunpack.c.l.b16 %v109
  %v398 = vpack.c.b16 %v335, %v334
  %v399 = vpack.c.b16 %v337, %v336
  %v400 = vpack.c.b16 %v339, %v338
  %v401 = vpack.c.b16 %v341, %v340
  %v402 = vpack.c.b16 %v343, %v342
  %v403 = vpack.c.b16 %v345, %v344
  %v404 = vpack.c.b16 %v347, %v346
  %v405 = vpack.c.b16 %v349, %v348
  %v406 = vpack.c.b16 %v351, %v350
  %v407 = vpack.c.b16 %v353, %v352
  %v408 = vpack.c.b16 %v355, %v354
  %v409 = vpack.c.b16 %v357, %v356
  %v410 = vpack.c.b16 %v359, %v358
  %v411 = vpack.c.b16 %v361, %v360
  %v412 = vpack.c.b16 %v363, %v362
  %v413 = vpack.c.b16 %v365, %v364
  %v414 = vpack.c.b16 %v367, %v366
  %v415 = vpack.c.b16 %v369, %v368
  %v416 = vpack.c.b16 %v371, %v370
  %v417 = vpack.c.b16 %v373, %v372
  %v418 = vpack.c.b16 %v375, %v374
  %v419 = vpack.c.b16 %v377, %v376
  %v420 = vpack.c.b16 %v379, %v378
  %v421 = vpack.c.b16 %v381, %v380
  %v422 = vpack.c.b16 %v383, %v382
  %v423 = vpack.c.b16 %v385, %v384
  %v424 = vpack.c.b16 %v387, %v386
  %v425 = vpack.c.b16 %v389, %v388
  %v426 = vpack.c.b16 %v391, %v390
  %v427 = vpack.c.b16 %v393, %v392
  %v428 = vpack.c.b16 %v395, %v394
  %v429 = vpack.c.b16 %v397, %v396
  %462 = vmatprep.subr.bf16.mxu0 0
  %463 = vmatpush1.bf16.msra.mxu0 %v398
  %464 = vmatprep.subr.bf16.mxu0 0
  %465 = vmatpush1.bf16.msra.mxu0 %v399
  %466 = vmatprep.subr.bf16.mxu0 0
  %467 = vmatpush1.bf16.msra.mxu0 %v400
  %468 = vmatprep.subr.bf16.mxu0 0
  %469 = vmatpush1.bf16.msra.mxu0 %v401
  %470 = vmatprep.subr.bf16.mxu0 0
  %471 = vmatpush1.bf16.msra.mxu0 %v402
  %472 = vmatprep.subr.bf16.mxu0 0
  %473 = vmatpush1.bf16.msra.mxu0 %v403
  %474 = vmatprep.subr.bf16.mxu0 0
  %475 = vmatpush1.bf16.msra.mxu0 %v404
  %476 = vmatprep.subr.bf16.mxu0 0
  %477 = vmatpush1.bf16.msra.mxu0 %v405
  %478 = vmatprep.subr.bf16.mxu0 0
  %479 = vmatpush1.bf16.msra.mxu0 %v406
  %480 = vmatprep.subr.bf16.mxu0 0
  %481 = vmatpush1.bf16.msra.mxu0 %v407
  %482 = vmatprep.subr.bf16.mxu0 0
  %483 = vmatpush1.bf16.msra.mxu0 %v408
  %484 = vmatprep.subr.bf16.mxu0 0
  %485 = vmatpush1.bf16.msra.mxu0 %v409
  %486 = vmatprep.subr.bf16.mxu0 0
  %487 = vmatpush1.bf16.msra.mxu0 %v410
  %488 = vmatprep.subr.bf16.mxu0 0
  %489 = vmatpush1.bf16.msra.mxu0 %v411
  %490 = vmatprep.subr.bf16.mxu0 0
  %491 = vmatpush1.bf16.msra.mxu0 %v412
  %492 = vmatprep.subr.bf16.mxu0 0
  %493 = vmatpush1.bf16.msra.mxu0 %v413
  %494 = vmatprep.mubr.bf16.mxu0 %v207
  %495 = vmatmul.mubr.bf16.gmra.mrb[0].mxu0 %v206
  %v496 = vpop.f32.mrb[0].mxu0
  %v497 = vadd.f32 0.0, %v496
  %v498 = vpop.f32.mrb[0].mxu0
  %v499 = vpop.f32.mrb[0].mxu0
  %v500 = vadd.f32 0.0, %v499
  %v501 = vpop.f32.mrb[0].mxu0
  %502 = vmatprep.mubr.bf16.mxu0 %v211
  %503 = vmatmul.mubr.bf16.gmra.mrb[0].mxu0 %v210
  %v504 = vpop.f32.mrb[0].mxu0
  %v505 = vadd.f32 0.0, %v504
  %v506 = vpop.f32.mrb[0].mxu0
  %v507 = vpop.f32.mrb[0].mxu0
  %v508 = vadd.f32 0.0, %v507
  %v509 = vpop.f32.mrb[0].mxu0
  %510 = vmatprep.mubr.bf16.mxu0 %v215
  %511 = vmatmul.mubr.bf16.gmra.mrb[0].mxu0 %v214
  %v512 = vpop.f32.mrb[0].mxu0
  %v513 = vadd.f32 0.0, %v512
  %v514 = vpop.f32.mrb[0].mxu0
  %v515 = vpop.f32.mrb[0].mxu0
  %v516 = vadd.f32 0.0, %v515
  %v517 = vpop.f32.mrb[0].mxu0
  %518 = vmatprep.mubr.bf16.mxu0 %v219
  %519 = vmatmul.mubr.bf16.gmra.mrb[0].mxu0 %v218
  %v520 = vpop.f32.mrb[0].mxu0
  %v521 = vadd.f32 0.0, %v520
  %v522 = vpop.f32.mrb[0].mxu0
  %v523 = vpop.f32.mrb[0].mxu0
  %v524 = vadd.f32 0.0, %v523
  %v525 = vpop.f32.mrb[0].mxu0
  %526 = vmatprep.mubr.bf16.mxu0 %v223
  %527 = vmatmul.mubr.bf16.gmra.mrb[0].mxu0 %v222
  %v528 = vpop.f32.mrb[0].mxu0
  %v529 = vadd.f32 0.0, %v528
  %v530 = vpop.f32.mrb[0].mxu0
  %v531 = vpop.f32.mrb[0].mxu0
  %v532 = vadd.f32 0.0, %v531
  %v533 = vpop.f32.mrb[0].mxu0
  %534 = vmatprep.mubr.bf16.mxu0 %v227
  %535 = vmatmul.mubr.bf16.gmra.mrb[0].mxu0 %v226
  %v536 = vpop.f32.mrb[0].mxu0
  %v537 = vadd.f32 0.0, %v536
  %v538 = vpop.f32.mrb[0].mxu0
  %v539 = vpop.f32.mrb[0].mxu0
  %v540 = vadd.f32 0.0, %v539
  %v541 = vpop.f32.mrb[0].mxu0
  %542 = vmatprep.mubr.bf16.mxu0 %v231
  %543 = vmatmul.mubr.bf16.gmra.mrb[0].mxu0 %v230
  %v544 = vpop.f32.mrb[0].mxu0
  %v545 = vadd.f32 0.0, %v544
  %v546 = vpop.f32.mrb[0].mxu0
  %v547 = vpop.f32.mrb[0].mxu0
  %v548 = vadd.f32 0.0, %v547
  %v549 = vpop.f32.mrb[0].mxu0
  %550 = vmatprep.mubr.bf16.mxu0 %v235
  %551 = vmatmul.mubr.bf16.gmra.mrb[0].mxu0 %v234
  %v552 = vpop.f32.mrb[0].mxu0
  %v553 = vadd.f32 0.0, %v552
  %v554 = vpop.f32.mrb[0].mxu0
  %v555 = vpop.f32.mrb[0].mxu0
  %v556 = vadd.f32 0.0, %v555
  %v557 = vpop.f32.mrb[0].mxu0
  %558 = vdwg.mxu0
  %559 = vmatprep.subr.bf16.mxu0 0
  %560 = vmatpush1.bf16.msra.mxu0 %v414
  %561 = vmatprep.subr.bf16.mxu0 0
  %562 = vmatpush1.bf16.msra.mxu0 %v415
  %563 = vmatprep.subr.bf16.mxu0 0
  %564 = vmatpush1.bf16.msra.mxu0 %v416
  %565 = vmatprep.subr.bf16.mxu0 0
  %566 = vmatpush1.bf16.msra.mxu0 %v417
  %567 = vmatprep.subr.bf16.mxu0 0
  %568 = vmatpush1.bf16.msra.mxu0 %v418
  %569 = vmatprep.subr.bf16.mxu0 0
  %570 = vmatpush1.bf16.msra.mxu0 %v419
  %571 = vmatprep.subr.bf16.mxu0 0
  %572 = vmatpush1.bf16.msra.mxu0 %v420
  %573 = vmatprep.subr.bf16.mxu0 0
  %574 = vmatpush1.bf16.msra.mxu0 %v421
  %575 = vmatprep.subr.bf16.mxu0 0
  %576 = vmatpush1.bf16.msra.mxu0 %v422
  %577 = vmatprep.subr.bf16.mxu0 0
  %578 = vmatpush1.bf16.msra.mxu0 %v423
  %579 = vmatprep.subr.bf16.mxu0 0
  %580 = vmatpush1.bf16.msra.mxu0 %v424
  %581 = vmatprep.subr.bf16.mxu0 0
  %582 = vmatpush1.bf16.msra.mxu0 %v425
  %583 = vmatprep.subr.bf16.mxu0 0
  %584 = vmatpush1.bf16.msra.mxu0 %v426
  %585 = vmatprep.subr.bf16.mxu0 0
  %586 = vmatpush1.bf16.msra.mxu0 %v427
  %587 = vmatprep.subr.bf16.mxu0 0
  %588 = vmatpush1.bf16.msra.mxu0 %v428
  %589 = vmatprep.subr.bf16.mxu0 0
  %590 = vmatpush1.bf16.msra.mxu0 %v429
  %591 = vmatprep.mubr.bf16.mxu0 %v209
  %592 = vmatmul.mubr.bf16.gmra.mrb[0].mxu0 %v208
  %v593 = vpop.f32.mrb[0].mxu0
  %v594 = vadd.f32 %v497, %v593
  %v595 = vpop.f32.mrb[0].mxu0
  %v596 = vpop.f32.mrb[0].mxu0
  %v597 = vadd.f32 %v500, %v596
  %v598 = vpop.f32.mrb[0].mxu0
  %599 = vmatprep.mubr.bf16.mxu0 %v213
  %600 = vmatmul.mubr.bf16.gmra.mrb[0].mxu0 %v212
  %v601 = vpop.f32.mrb[0].mxu0
  %v602 = vadd.f32 %v505, %v601
  %v603 = vpop.f32.mrb[0].mxu0
  %v604 = vpop.f32.mrb[0].mxu0
  %v605 = vadd.f32 %v508, %v604
  %v606 = vpop.f32.mrb[0].mxu0
  %607 = vmatprep.mubr.bf16.mxu0 %v217
  %608 = vmatmul.mubr.bf16.gmra.mrb[0].mxu0 %v216
  %v609 = vpop.f32.mrb[0].mxu0
  %v610 = vadd.f32 %v513, %v609
  %v611 = vpop.f32.mrb[0].mxu0
  %v612 = vpop.f32.mrb[0].mxu0
  %v613 = vadd.f32 %v516, %v612
  %v614 = vpop.f32.mrb[0].mxu0
  %615 = vmatprep.mubr.bf16.mxu0 %v221
  %616 = vmatmul.mubr.bf16.gmra.mrb[0].mxu0 %v220
  %v617 = vpop.f32.mrb[0].mxu0
  %v618 = vadd.f32 %v521, %v617
  %v619 = vpop.f32.mrb[0].mxu0
  %v620 = vpop.f32.mrb[0].mxu0
  %v621 = vadd.f32 %v524, %v620
  %v622 = vpop.f32.mrb[0].mxu0
  %623 = vmatprep.mubr.bf16.mxu0 %v225
  %624 = vmatmul.mubr.bf16.gmra.mrb[0].mxu0 %v224
  %v625 = vpop.f32.mrb[0].mxu0
  %v626 = vadd.f32 %v529, %v625
  %v627 = vpop.f32.mrb[0].mxu0
  %v628 = vpop.f32.mrb[0].mxu0
  %v629 = vadd.f32 %v532, %v628
  %v630 = vpop.f32.mrb[0].mxu0
  %631 = vmatprep.mubr.bf16.mxu0 %v229
  %632 = vmatmul.mubr.bf16.gmra.mrb[0].mxu0 %v228
  %v633 = vpop.f32.mrb[0].mxu0
  %v634 = vadd.f32 %v537, %v633
  %v635 = vpop.f32.mrb[0].mxu0
  %v636 = vpop.f32.mrb[0].mxu0
  %v637 = vadd.f32 %v540, %v636
  %v638 = vpop.f32.mrb[0].mxu0
  %639 = vmatprep.mubr.bf16.mxu0 %v233
  %640 = vmatmul.mubr.bf16.gmra.mrb[0].mxu0 %v232
  %v641 = vpop.f32.mrb[0].mxu0
  %v642 = vadd.f32 %v545, %v641
  %v643 = vpop.f32.mrb[0].mxu0
  %v644 = vpop.f32.mrb[0].mxu0
  %v645 = vadd.f32 %v548, %v644
  %v646 = vpop.f32.mrb[0].mxu0
  %647 = vmatprep.mubr.bf16.mxu0 %v237
  %648 = vmatmul.mubr.bf16.gmra.mrb[0].mxu0 %v236
  %v649 = vpop.f32.mrb[0].mxu0
  %v650 = vadd.f32 %v553, %v649
  %v651 = vpop.f32.mrb[0].mxu0
  %v652 = vpop.f32.mrb[0].mxu0
  %v653 = vadd.f32 %v556, %v652
  %v654 = vpop.f32.mrb[0].mxu0
  %655 = vdwg.mxu0
  %v656 = vpack.c.bf16 %v597, %v594
  %v657 = vpack.c.bf16 %v605, %v602
  %v658 = vpack.c.bf16 %v613, %v610
  %v659 = vpack.c.bf16 %v621, %v618
  %v660 = vpack.c.bf16 %v629, %v626
  %v661 = vpack.c.bf16 %v637, %v634
  %v662 = vpack.c.bf16 %v645, %v642
  %v663 = vpack.c.bf16 %v653, %v650
  %v672 = vunpack.c.l.b16 %v656
  %v673 = vunpack.c.h.b16 %v656
  %v674 = vunpack.c.l.b16 %v657
  %v675 = vunpack.c.h.b16 %v657
  %v676 = vunpack.c.l.b16 %v658
  %v677 = vunpack.c.h.b16 %v658
  %v678 = vunpack.c.l.b16 %v659
  %v679 = vunpack.c.h.b16 %v659
  %v680 = vunpack.c.l.b16 %v660
  %v681 = vunpack.c.h.b16 %v660
  %v682 = vunpack.c.l.b16 %v661
  %v683 = vunpack.c.h.b16 %v661
  %v684 = vunpack.c.l.b16 %v662
  %v685 = vunpack.c.h.b16 %v662
  %v686 = vunpack.c.l.b16 %v663
  %v687 = vunpack.c.h.b16 %v663
  %v688 = vpack.c.b16 %v672, %v672
  %v689 = vpack.c.b16 %v673, %v673
  %v690 = vpack.c.b16 %v674, %v674
  %v691 = vpack.c.b16 %v675, %v675
  %v692 = vpack.c.b16 %v676, %v676
  %v693 = vpack.c.b16 %v677, %v677
  %v694 = vpack.c.b16 %v678, %v678
  %v695 = vpack.c.b16 %v679, %v679
  %v696 = vpack.c.b16 %v680, %v680
  %v697 = vpack.c.b16 %v681, %v681
  %v698 = vpack.c.b16 %v682, %v682
  %v699 = vpack.c.b16 %v683, %v683
  %v700 = vpack.c.b16 %v684, %v684
  %v701 = vpack.c.b16 %v685, %v685
  %v702 = vpack.c.b16 %v686, %v686
  %v703 = vpack.c.b16 %v687, %v687
  %720 = vst [vmem:[%s2] sm:$0xf] %v688
  %721 = vst [vmem:[%s2 + $0x4] sm:$0xf] %v689
  %722 = vst [vmem:[%s2 + $0x8] sm:$0xf] %v690
  %723 = vst [vmem:[%s2 + $0xc] sm:$0xf] %v691
  %724 = vst [vmem:[%s2 + $0x10] sm:$0xf] %v692
  %725 = vst [vmem:[%s2 + $0x14] sm:$0xf] %v693
  %726 = vst [vmem:[%s2 + $0x18] sm:$0xf] %v694
  %727 = vst [vmem:[%s2 + $0x1c] sm:$0xf] %v695
  %728 = vst [vmem:[%s2 + $0x20] sm:$0xf] %v696
  %729 = vst [vmem:[%s2 + $0x24] sm:$0xf] %v697
  %730 = vst [vmem:[%s2 + $0x28] sm:$0xf] %v698
  %731 = vst [vmem:[%s2 + $0x2c] sm:$0xf] %v699
  %732 = vst [vmem:[%s2 + $0x30] sm:$0xf] %v700
  %733 = vst [vmem:[%s2 + $0x34] sm:$0xf] %v701
  %734 = vst [vmem:[%s2 + $0x38] sm:$0xf] %v702
  %735 = vst [vmem:[%s2 + $0x3c] sm:$0xf] %v703
  %v736 = vadd.f32 %v594, %v597
  %v737 = vadd.f32 %v736, %v602
  %v738 = vadd.f32 %v737, %v605
  %v739 = vadd.f32 %v738, %v610
  %v740 = vadd.f32 %v739, %v613
  %v741 = vadd.f32 %v740, %v618
  %v742 = vadd.f32 %v741, %v621
  %v743 = vadd.f32 %v742, %v626
  %v744 = vadd.f32 %v743, %v629
  %v745 = vadd.f32 %v744, %v634
  %v746 = vadd.f32 %v745, %v637
  %v747 = vadd.f32 %v746, %v642
  %v748 = vadd.f32 %v747, %v645
  %v749 = vadd.f32 %v748, %v650
  %v750 = vadd.f32 %v749, %v653
  %v751 = vrot.slane %v750, 4
  %v752 = vadd.f32 %v750, %v751
  %v753 = vrot.slane %v752, 2
  %v754 = vadd.f32 %v752, %v753
  %v755 = vrot.slane %v754, 1
  %v756 = vadd.f32 %v754, %v755
  %757 = vst [vmem:[%s3] sm:$0x1] %v756
  %v758 = vmul.f32 %v594, %v594
  %v759 = vmul.f32 %v597, %v597
  %v760 = vmul.f32 %v602, %v602
  %v761 = vmul.f32 %v605, %v605
  %v762 = vmul.f32 %v610, %v610
  %v763 = vmul.f32 %v613, %v613
  %v764 = vmul.f32 %v618, %v618
  %v765 = vmul.f32 %v621, %v621
  %v766 = vmul.f32 %v626, %v626
  %v767 = vmul.f32 %v629, %v629
  %v768 = vmul.f32 %v634, %v634
  %v769 = vmul.f32 %v637, %v637
  %v770 = vmul.f32 %v642, %v642
  %v771 = vmul.f32 %v645, %v645
  %v772 = vmul.f32 %v650, %v650
  %v773 = vmul.f32 %v653, %v653
  %v774 = vadd.f32 %v758, %v759
  %v775 = vadd.f32 %v774, %v760
  %v776 = vadd.f32 %v775, %v761
  %v777 = vadd.f32 %v776, %v762
  %v778 = vadd.f32 %v777, %v763
  %v779 = vadd.f32 %v778, %v764
  %v780 = vadd.f32 %v779, %v765
  %v781 = vadd.f32 %v780, %v766
  %v782 = vadd.f32 %v781, %v767
  %v783 = vadd.f32 %v782, %v768
  %v784 = vadd.f32 %v783, %v769
  %v785 = vadd.f32 %v784, %v770
  %v786 = vadd.f32 %v785, %v771
  %v787 = vadd.f32 %v786, %v772
  %v788 = vadd.f32 %v787, %v773
  %v789 = vrot.slane %v788, 4
  %v790 = vadd.f32 %v788, %v789
  %v791 = vrot.slane %v790, 2
  %v792 = vadd.f32 %v790, %v791
  %v793 = vrot.slane %v792, 1
  %v794 = vadd.f32 %v792, %v793
  %795 = vst [vmem:[%s3 + $0x1] sm:$0x1] %v794
  // Predicated region
  $region10: #{enc_forward.5} parent=0 // pred_check
    _
  $region11: #{enc_forward.5} parent=0 // pred_check_branch
    %797 = sbr.rel (0) target = $region13
  $region12: #{enc_forward.5} parent=0 // pred_region
    _
  $region13: #{enc_forward.5} parent=0 // pred_fallthru
    _
  // Predicated region
  $region14: #{enc_forward.5} parent=0 // pred_check
    _
  $region15: #{enc_forward.5} parent=0 // pred_check_branch
    %799 = sbr.rel (0) target = $region17
  $region16: #{enc_forward.5} parent=0 // pred_region
    _
  $region17: #{enc_forward.5} parent=0 // pred_fallthru
    _
  // Predicated region
  $region18: #{enc_forward.5} parent=0 // pred_check
    _
  $region19: #{enc_forward.5} parent=0 // pred_check_branch
    %801 = sbr.rel (0) target = $region21
  $region20: #{enc_forward.5} parent=0 // pred_region
    _
  $region21: #{enc_forward.5} parent=0 // pred_fallthru
    _
  // Predicated region
  $region22: #{enc_forward.5} parent=0 // pred_check
    _
  $region23: #{enc_forward.5} parent=0 // pred_check_branch
    %803 = sbr.rel (0) target = $region25
  $region24: #{enc_forward.5} parent=0 // pred_region
    _
  $region25: #{enc_forward.5} parent=0 // pred_fallthru
    _

// kernel: tile.13
$region0: #{tile.13}
  #allocation0 [shape = 's32[1]{0}', space=sflag, size = 0x4, scoped, tag = 'scoped memory for tile.13']
  %s0 = inlined_call_operand.vmem [shape: f32[128], index: 0, kind: input, shape index: {}]
  %s1 = inlined_call_operand.vmem [shape: f32[16,128], index: 1, kind: output, shape index: {}]
  // Predicated region
  $region2: #{tile.13} parent=0 // pred_check
    _
  $region3: #{tile.13} parent=0 // pred_check_branch
    %3 = sbr.rel (0) target = $region5
  $region4: #{tile.13} parent=0 // pred_region
    _
  $region5: #{tile.13} parent=0 // pred_fallthru
    _
  %v4 = vld [vmem:[%s0] ss:$0 sm:$0xff]
  %5 = vst [vmem:[%s1] sm:$0xff] %v4
  %s6 = scalar_lea.vmem %s1, 8
  %7 = vst [vmem:[%s6] sm:$0xff] %v4

// kernel: enc_forward.6
$region0: #{enc_forward.6}
  #allocation0 [shape = 'u32[]', space=smem, size = 0x4, offset = 0x4, fixed_abs, tag = 'smem constant byte address 0x4 - core index']
  #allocation1 [shape = 'u32[144,128]{1,0:T(1,128)}', space=vmem, size = 0x12000, scoped, tag = 'internal scratch']
  %s0 = inlined_call_operand.vmem [shape: bf16[32,1024], index: 0, kind: input, shape index: {}]
  %s1 = inlined_call_operand.vmem [shape: bf16[1024,128], index: 1, kind: input, shape index: {}]
  %s2 = inlined_call_operand.vmem [shape: bf16[32,128], index: 2, kind: output, shape index: {0}]
  %s3 = inlined_call_operand.vmem [shape: f32[8,128], index: 3, kind: output, shape index: {1}]
  %4 = xla_tuple %s2, %s3
  %s5 = sld [smem:[#allocation0]]
  $region26: #{enc_forward.6} parent=0
    _
  %s7 = ssub.s32 1, %s5
  %s8 = scalar_select 0, %s7, %s5
  // Predicated region
  $region2: #{enc_forward.6} parent=0 // pred_check
    _
  $region3: #{enc_forward.6} parent=0 // pred_check_branch
    %10 = sbr.rel (0) target = $region5
  $region4: #{enc_forward.6} parent=0 // pred_region
    _
  $region5: #{enc_forward.6} parent=0 // pred_fallthru
    _
  // Predicated region
  $region6: #{enc_forward.6} parent=0 // pred_check
    _
  $region7: #{enc_forward.6} parent=0 // pred_check_branch
    %12 = sbr.rel (0) target = $region9
  $region8: #{enc_forward.6} parent=0 // pred_region
    _
  $region9: #{enc_forward.6} parent=0 // pred_fallthru
    _
  %v14 = vld [vmem:[%s0] sm:$0xff]
  %v15 = vld [vmem:[%s0 + $0x8] sm:$0xff]
  %v16 = vld [vmem:[%s0 + $0x10] sm:$0xff]
  %v17 = vld [vmem:[%s0 + $0x18] sm:$0xff]
  %v18 = vld [vmem:[%s0 + $0x20] sm:$0xff]
  %v19 = vld [vmem:[%s0 + $0x28] sm:$0xff]
  %v20 = vld [vmem:[%s0 + $0x30] sm:$0xff]
  %v21 = vld [vmem:[%s0 + $0x38] sm:$0xff]
  %v22 = vld [vmem:[%s0 + $0x40] sm:$0xff]
  %v23 = vld [vmem:[%s0 + $0x48] sm:$0xff]
  %v24 = vld [vmem:[%s0 + $0x50] sm:$0xff]
  %v25 = vld [vmem:[%s0 + $0x58] sm:$0xff]
  %v26 = vld [vmem:[%s0 + $0x60] sm:$0xff]
  %v27 = vld [vmem:[%s0 + $0x68] sm:$0xff]
  %v28 = vld [vmem:[%s0 + $0x70] sm:$0xff]
  %v29 = vld [vmem:[%s0 + $0x78] sm:$0xff]
  %v30 = vld [vmem:[%s1] sm:$0xf]
  %v31 = vld [vmem:[%s1 + $0x4] sm:$0xf]
  %v32 = vld [vmem:[%s1 + $0x8] sm:$0xf]
  %v33 = vld [vmem:[%s1 + $0xc] sm:$0xf]
  %v34 = vld [vmem:[%s1 + $0x10] sm:$0xf]
  %v35 = vld [vmem:[%s1 + $0x14] sm:$0xf]
  %v36 = vld [vmem:[%s1 + $0x18] sm:$0xf]
  %v37 = vld [vmem:[%s1 + $0x1c] sm:$0xf]
  %v38 = vld [vmem:[%s1 + $0x20] sm:$0xf]
  %v39 = vld [vmem:[%s1 + $0x24] sm:$0xf]
  %v40 = vld [vmem:[%s1 + $0x28] sm:$0xf]
  %v41 = vld [vmem:[%s1 + $0x2c] sm:$0xf]
  %v42 = vld [vmem:[%s1 + $0x30] sm:$0xf]
  %v43 = vld [vmem:[%s1 + $0x34] sm:$0xf]
  %v44 = vld [vmem:[%s1 + $0x38] sm:$0xf]
  %v45 = vld [vmem:[%s1 + $0x3c] sm:$0xf]
  %v46 = vld [vmem:[%s1 + $0x40] sm:$0xf]
  %v47 = vld [vmem:[%s1 + $0x44] sm:$0xf]
  %v48 = vld [vmem:[%s1 + $0x48] sm:$0xf]
  %v49 = vld [vmem:[%s1 + $0x4c] sm:$0xf]
  %v50 = vld [vmem:[%s1 + $0x50] sm:$0xf]
  %v51 = vld [vmem:[%s1 + $0x54] sm:$0xf]
  %v52 = vld [vmem:[%s1 + $0x58] sm:$0xf]
  %v53 = vld [vmem:[%s1 + $0x5c] sm:$0xf]
  %v54 = vld [vmem:[%s1 + $0x60] sm:$0xf]
  %v55 = vld [vmem:[%s1 + $0x64] sm:$0xf]
  %v56 = vld [vmem:[%s1 + $0x68] sm:$0xf]
  %v57 = vld [vmem:[%s1 + $0x6c] sm:$0xf]
  %v58 = vld [vmem:[%s1 + $0x70] sm:$0xf]
  %v59 = vld [vmem:[%s1 + $0x74] sm:$0xf]
  %v60 = vld [vmem:[%s1 + $0x78] sm:$0xf]
  %v61 = vld [vmem:[%s1 + $0x7c] sm:$0xf]
  %v62 = vld [vmem:[%s1 + $0x80] sm:$0xf]
  %v63 = vld [vmem:[%s1 + $0x84] sm:$0xf]
  %v64 = vld [vmem:[%s1 + $0x88] sm:$0xf]
  %v65 = vld [vmem:[%s1 + $0x8c] sm:$0xf]
  %v66 = vld [vmem:[%s1 + $0x90] sm:$0xf]
  %v67 = vld [vmem:[%s1 + $0x94] sm:$0xf]
  %v68 = vld [vmem:[%s1 + $0x98] sm:$0xf]
  %v69 = vld [vmem:[%s1 + $0x9c] sm:$0xf]
  %v70 = vld [vmem:[%s1 + $0xa0] sm:$0xf]
  %v71 = vld [vmem:[%s1 + $0xa4] sm:$0xf]
  %v72 = vld [vmem:[%s1 + $0xa8] sm:$0xf]
  %v73 = vld [vmem:[%s1 + $0xac] sm:$0xf]
  %v74 = vld [vmem:[%s1 + $0xb0] sm:$0xf]
  %v75 = vld [vmem:[%s1 + $0xb4] sm:$0xf]
  %v76 = vld [vmem:[%s1 + $0xb8] sm:$0xf]
  %v77 = vld [vmem:[%s1 + $0xbc] sm:$0xf]
  %v78 = vld [vmem:[%s1 + $0xc0] sm:$0xf]
  %v79 = vld [vmem:[%s1 + $0xc4] sm:$0xf]
  %v80 = vld [vmem:[%s1 + $0xc8] sm:$0xf]
  %v81 = vld [vmem:[%s1 + $0xcc] sm:$0xf]
  %v82 = vld [vmem:[%s1 + $0xd0] sm:$0xf]
  %v83 = vld [vmem:[%s1 + $0xd4] sm:$0xf]
  %v84 = vld [vmem:[%s1 + $0xd8] sm:$0xf]
  %v85 = vld [vmem:[%s1 + $0xdc] sm:$0xf]
  %v86 = vld [vmem:[%s1 + $0xe0] sm:$0xf]
  %v87 = vld [vmem:[%s1 + $0xe4] sm:$0xf]
  %v88 = vld [vmem:[%s1 + $0xe8] sm:$0xf]
  %v89 = vld [vmem:[%s1 + $0xec] sm:$0xf]
  %v90 = vld [vmem:[%s1 + $0xf0] sm:$0xf]
  %v91 = vld [vmem:[%s1 + $0xf4] sm:$0xf]
  %v92 = vld [vmem:[%s1 + $0xf8] sm:$0xf]
  %v93 = vld [vmem:[%s1 + $0xfc] sm:$0xf]
  %v94 = vld [vmem:[%s1 + $0x100] sm:$0xf]
  %v95 = vld [vmem:[%s1 + $0x104] sm:$0xf]
  %v96 = vld [vmem:[%s1 + $0x108] sm:$0xf]
  %v97 = vld [vmem:[%s1 + $0x10c] sm:$0xf]
  %v98 = vld [vmem:[%s1 + $0x110] sm:$0xf]
  %v99 = vld [vmem:[%s1 + $0x114] sm:$0xf]
  %v100 = vld [vmem:[%s1 + $0x118] sm:$0xf]
  %v101 = vld [vmem:[%s1 + $0x11c] sm:$0xf]
  %v102 = vld [vmem:[%s1 + $0x120] sm:$0xf]
  %v103 = vld [vmem:[%s1 + $0x124] sm:$0xf]
  %v104 = vld [vmem:[%s1 + $0x128] sm:$0xf]
  %v105 = vld [vmem:[%s1 + $0x12c] sm:$0xf]
  %v106 = vld [vmem:[%s1 + $0x130] sm:$0xf]
  %v107 = vld [vmem:[%s1 + $0x134] sm:$0xf]
  %v108 = vld [vmem:[%s1 + $0x138] sm:$0xf]
  %v109 = vld [vmem:[%s1 + $0x13c] sm:$0xf]
  %v110 = vld [vmem:[%s1 + $0x140] sm:$0xf]
  %v111 = vld [vmem:[%s1 + $0x144] sm:$0xf]
  %v112 = vld [vmem:[%s1 + $0x148] sm:$0xf]
  %v113 = vld [vmem:[%s1 + $0x14c] sm:$0xf]
  %v114 = vld [vmem:[%s1 + $0x150] sm:$0xf]
  %v115 = vld [vmem:[%s1 + $0x154] sm:$0xf]
  %v116 = vld [vmem:[%s1 + $0x158] sm:$0xf]
  %v117 = vld [vmem:[%s1 + $0x15c] sm:$0xf]
  %v118 = vld [vmem:[%s1 + $0x160] sm:$0xf]
  %v119 = vld [vmem:[%s1 + $0x164] sm:$0xf]
  %v120 = vld [vmem:[%s1 + $0x168] sm:$0xf]
  %v121 = vld [vmem:[%s1 + $0x16c] sm:$0xf]
  %v122 = vld [vmem:[%s1 + $0x170] sm:$0xf]
  %v123 = vld [vmem:[%s1 + $0x174] sm:$0xf]
  %v124 = vld [vmem:[%s1 + $0x178] sm:$0xf]
  %v125 = vld [vmem:[%s1 + $0x17c] sm:$0xf]
  %v126 = vld [vmem:[%s1 + $0x180] sm:$0xf]
  %v127 = vld [vmem:[%s1 + $0x184] sm:$0xf]
  %v128 = vld [vmem:[%s1 + $0x188] sm:$0xf]
  %v129 = vld [vmem:[%s1 + $0x18c] sm:$0xf]
  %v130 = vld [vmem:[%s1 + $0x190] sm:$0xf]
  %v131 = vld [vmem:[%s1 + $0x194] sm:$0xf]
  %v132 = vld [vmem:[%s1 + $0x198] sm:$0xf]
  %v133 = vld [vmem:[%s1 + $0x19c] sm:$0xf]
  %v134 = vld [vmem:[%s1 + $0x1a0] sm:$0xf]
  %v135 = vld [vmem:[%s1 + $0x1a4] sm:$0xf]
  %v136 = vld [vmem:[%s1 + $0x1a8] sm:$0xf]
  %v137 = vld [vmem:[%s1 + $0x1ac] sm:$0xf]
  %v138 = vld [vmem:[%s1 + $0x1b0] sm:$0xf]
  %v139 = vld [vmem:[%s1 + $0x1b4] sm:$0xf]
  %v140 = vld [vmem:[%s1 + $0x1b8] sm:$0xf]
  %v141 = vld [vmem:[%s1 + $0x1bc] sm:$0xf]
  %v142 = vld [vmem:[%s1 + $0x1c0] sm:$0xf]
  %v143 = vld [vmem:[%s1 + $0x1c4] sm:$0xf]
  %v144 = vld [vmem:[%s1 + $0x1c8] sm:$0xf]
  %v145 = vld [vmem:[%s1 + $0x1cc] sm:$0xf]
  %v146 = vld [vmem:[%s1 + $0x1d0] sm:$0xf]
  %v147 = vld [vmem:[%s1 + $0x1d4] sm:$0xf]
  %v148 = vld [vmem:[%s1 + $0x1d8] sm:$0xf]
  %v149 = vld [vmem:[%s1 + $0x1dc] sm:$0xf]
  %v150 = vld [vmem:[%s1 + $0x1e0] sm:$0xf]
  %v151 = vld [vmem:[%s1 + $0x1e4] sm:$0xf]
  %v152 = vld [vmem:[%s1 + $0x1e8] sm:$0xf]
  %v153 = vld [vmem:[%s1 + $0x1ec] sm:$0xf]
  %v154 = vld [vmem:[%s1 + $0x1f0] sm:$0xf]
  %v155 = vld [vmem:[%s1 + $0x1f4] sm:$0xf]
  %v156 = vld [vmem:[%s1 + $0x1f8] sm:$0xf]
  %v157 = vld [vmem:[%s1 + $0x1fc] sm:$0xf]
  %v174 = vunpack.c.l.b16 %v14
  %v175 = vunpack.c.h.b16 %v14
  %v176 = vunpack.c.l.b16 %v15
  %v177 = vunpack.c.h.b16 %v15
  %v178 = vunpack.c.l.b16 %v16
  %v179 = vunpack.c.h.b16 %v16
  %v180 = vunpack.c.l.b16 %v17
  %v181 = vunpack.c.h.b16 %v17
  %v182 = vunpack.c.l.b16 %v18
  %v183 = vunpack.c.h.b16 %v18
  %v184 = vunpack.c.l.b16 %v19
  %v185 = vunpack.c.h.b16 %v19
  %v186 = vunpack.c.l.b16 %v20
  %v187 = vunpack.c.h.b16 %v20
  %v188 = vunpack.c.l.b16 %v21
  %v189 = vunpack.c.h.b16 %v21
  %v190 = vunpack.c.l.b16 %v22
  %v191 = vunpack.c.h.b16 %v22
  %v192 = vunpack.c.l.b16 %v23
  %v193 = vunpack.c.h.b16 %v23
  %v194 = vunpack.c.l.b16 %v24
  %v195 = vunpack.c.h.b16 %v24
  %v196 = vunpack.c.l.b16 %v25
  %v197 = vunpack.c.h.b16 %v25
  %v198 = vunpack.c.l.b16 %v26
  %v199 = vunpack.c.h.b16 %v26
  %v200 = vunpack.c.l.b16 %v27
  %v201 = vunpack.c.h.b16 %v27
  %v202 = vunpack.c.l.b16 %v28
  %v203 = vunpack.c.h.b16 %v28
  %v204 = vunpack.c.l.b16 %v29
  %v205 = vunpack.c.h.b16 %v29
  %v206 = vpack.c.b16 %v182, %v174
  %v207 = vpack.c.b16 %v183, %v175
  %v208 = vpack.c.b16 %v184, %v176
  %v209 = vpack.c.b16 %v185, %v177
  %v210 = vpack.c.b16 %v186, %v178
  %v211 = vpack.c.b16 %v187, %v179
  %v212 = vpack.c.b16 %v188, %v180
  %v213 = vpack.c.b16 %v189, %v181
  %v214 = vpack.c.b16 %v198, %v190
  %v215 = vpack.c.b16 %v199, %v191
  %v216 = vpack.c.b16 %v200, %v192
  %v217 = vpack.c.b16 %v201, %v193
  %v218 = vpack.c.b16 %v202, %v194
  %v219 = vpack.c.b16 %v203, %v195
  %v220 = vpack.c.b16 %v204, %v196
  %v221 = vpack.c.b16 %v205, %v197
  %v366 = vunpack.c.l.b16 %v30
  %v367 = vunpack.c.l.b16 %v31
  %v368 = vunpack.c.l.b16 %v32
  %v369 = vunpack.c.l.b16 %v33
  %v370 = vunpack.c.l.b16 %v34
  %v371 = vunpack.c.l.b16 %v35
  %v372 = vunpack.c.l.b16 %v36
  %v373 = vunpack.c.l.b16 %v37
  %v374 = vunpack.c.l.b16 %v38
  %v375 = vunpack.c.l.b16 %v39
  %v376 = vunpack.c.l.b16 %v40
  %v377 = vunpack.c.l.b16 %v41
  %v378 = vunpack.c.l.b16 %v42
  %v379 = vunpack.c.l.b16 %v43
  %v380 = vunpack.c.l.b16 %v44
  %v381 = vunpack.c.l.b16 %v45
  %v382 = vunpack.c.l.b16 %v46
  %v383 = vunpack.c.l.b16 %v47
  %v384 = vunpack.c.l.b16 %v48
  %v385 = vunpack.c.l.b16 %v49
  %v386 = vunpack.c.l.b16 %v50
  %v387 = vunpack.c.l.b16 %v51
  %v388 = vunpack.c.l.b16 %v52
  %v389 = vunpack.c.l.b16 %v53
  %v390 = vunpack.c.l.b16 %v54
  %v391 = vunpack.c.l.b16 %v55
  %v392 = vunpack.c.l.b16 %v56
  %v393 = vunpack.c.l.b16 %v57
  %v394 = vunpack.c.l.b16 %v58
  %v395 = vunpack.c.l.b16 %v59
  %v396 = vunpack.c.l.b16 %v60
  %v397 = vunpack.c.l.b16 %v61
  %v398 = vunpack.c.l.b16 %v62
  %v399 = vunpack.c.l.b16 %v63
  %v400 = vunpack.c.l.b16 %v64
  %v401 = vunpack.c.l.b16 %v65
  %v402 = vunpack.c.l.b16 %v66
  %v403 = vunpack.c.l.b16 %v67
  %v404 = vunpack.c.l.b16 %v68
  %v405 = vunpack.c.l.b16 %v69
  %v406 = vunpack.c.l.b16 %v70
  %v407 = vunpack.c.l.b16 %v71
  %v408 = vunpack.c.l.b16 %v72
  %v409 = vunpack.c.l.b16 %v73
  %v410 = vunpack.c.l.b16 %v74
  %v411 = vunpack.c.l.b16 %v75
  %v412 = vunpack.c.l.b16 %v76
  %v413 = vunpack.c.l.b16 %v77
  %v414 = vunpack.c.l.b16 %v78
  %v415 = vunpack.c.l.b16 %v79
  %v416 = vunpack.c.l.b16 %v80
  %v417 = vunpack.c.l.b16 %v81
  %v418 = vunpack.c.l.b16 %v82
  %v419 = vunpack.c.l.b16 %v83
  %v420 = vunpack.c.l.b16 %v84
  %v421 = vunpack.c.l.b16 %v85
  %v422 = vunpack.c.l.b16 %v86
  %v423 = vunpack.c.l.b16 %v87
  %v424 = vunpack.c.l.b16 %v88
  %v425 = vunpack.c.l.b16 %v89
  %v426 = vunpack.c.l.b16 %v90
  %v427 = vunpack.c.l.b16 %v91
  %v428 = vunpack.c.l.b16 %v92
  %v429 = vunpack.c.l.b16 %v93
  %v430 = vunpack.c.l.b16 %v94
  %v431 = vunpack.c.l.b16 %v95
  %v432 = vunpack.c.l.b16 %v96
  %v433 = vunpack.c.l.b16 %v97
  %v434 = vunpack.c.l.b16 %v98
  %v435 = vunpack.c.l.b16 %v99
  %v436 = vunpack.c.l.b16 %v100
  %v437 = vunpack.c.l.b16 %v101
  %v438 = vunpack.c.l.b16 %v102
  %v439 = vunpack.c.l.b16 %v103
  %v440 = vunpack.c.l.b16 %v104
  %v441 = vunpack.c.l.b16 %v105
  %v442 = vunpack.c.l.b16 %v106
  %v443 = vunpack.c.l.b16 %v107
  %v444 = vunpack.c.l.b16 %v108
  %v445 = vunpack.c.l.b16 %v109
  %v446 = vunpack.c.l.b16 %v110
  %v447 = vunpack.c.l.b16 %v111
  %v448 = vunpack.c.l.b16 %v112
  %v449 = vunpack.c.l.b16 %v113
  %v450 = vunpack.c.l.b16 %v114
  %v451 = vunpack.c.l.b16 %v115
  %v452 = vunpack.c.l.b16 %v116
  %v453 = vunpack.c.l.b16 %v117
  %v454 = vunpack.c.l.b16 %v118
  %v455 = vunpack.c.l.b16 %v119
  %v456 = vunpack.c.l.b16 %v120
  %v457 = vunpack.c.l.b16 %v121
  %v458 = vunpack.c.l.b16 %v122
  %v459 = vunpack.c.l.b16 %v123
  %v460 = vunpack.c.l.b16 %v124
  %v461 = vunpack.c.l.b16 %v125
  %v462 = vunpack.c.l.b16 %v126
  %v463 = vunpack.c.l.b16 %v127
  %v464 = vunpack.c.l.b16 %v128
  %v465 = vunpack.c.l.b16 %v129
  %v466 = vunpack.c.l.b16 %v130
  %v467 = vunpack.c.l.b16 %v131
  %v468 = vunpack.c.l.b16 %v132
  %v469 = vunpack.c.l.b16 %v133
  %v470 = vunpack.c.l.b16 %v134
  %v471 = vunpack.c.l.b16 %v135
  %v472 = vunpack.c.l.b16 %v136
  %v473 = vunpack.c.l.b16 %v137
  %v474 = vunpack.c.l.b16 %v138
  %v475 = vunpack.c.l.b16 %v139
  %v476 = vunpack.c.l.b16 %v140
  %v477 = vunpack.c.l.b16 %v141
  %v478 = vunpack.c.l.b16 %v142
  %v479 = vunpack.c.l.b16 %v143
  %v480 = vunpack.c.l.b16 %v144
  %v481 = vunpack.c.l.b16 %v145
  %v482 = vunpack.c.l.b16 %v146
  %v483 = vunpack.c.l.b16 %v147
  %v484 = vunpack.c.l.b16 %v148
  %v485 = vunpack.c.l.b16 %v149
  %v486 = vunpack.c.l.b16 %v150
  %v487 = vunpack.c.l.b16 %v151
  %v488 = vunpack.c.l.b16 %v152
  %v489 = vunpack.c.l.b16 %v153
  %v490 = vunpack.c.l.b16 %v154
  %v491 = vunpack.c.l.b16 %v155
  %v492 = vunpack.c.l.b16 %v156
  %v493 = vunpack.c.l.b16 %v157
  %v494 = vpack.c.b16 %v367, %v366
  %v495 = vpack.c.b16 %v369, %v368
  %v496 = vpack.c.b16 %v371, %v370
  %v497 = vpack.c.b16 %v373, %v372
  %v498 = vpack.c.b16 %v375, %v374
  %v499 = vpack.c.b16 %v377, %v376
  %v500 = vpack.c.b16 %v379, %v378
  %v501 = vpack.c.b16 %v381, %v380
  %v502 = vpack.c.b16 %v383, %v382
  %v503 = vpack.c.b16 %v385, %v384
  %v504 = vpack.c.b16 %v387, %v386
  %v505 = vpack.c.b16 %v389, %v388
  %v506 = vpack.c.b16 %v391, %v390
  %v507 = vpack.c.b16 %v393, %v392
  %v508 = vpack.c.b16 %v395, %v394
  %v509 = vpack.c.b16 %v397, %v396
  %v510 = vpack.c.b16 %v399, %v398
  %v511 = vpack.c.b16 %v401, %v400
  %v512 = vpack.c.b16 %v403, %v402
  %v513 = vpack.c.b16 %v405, %v404
  %v514 = vpack.c.b16 %v407, %v406
  %v515 = vpack.c.b16 %v409, %v408
  %v516 = vpack.c.b16 %v411, %v410
  %v517 = vpack.c.b16 %v413, %v412
  %v518 = vpack.c.b16 %v415, %v414
  %v519 = vpack.c.b16 %v417, %v416
  %v520 = vpack.c.b16 %v419, %v418
  %v521 = vpack.c.b16 %v421, %v420
  %v522 = vpack.c.b16 %v423, %v422
  %v523 = vpack.c.b16 %v425, %v424
  %v524 = vpack.c.b16 %v427, %v426
  %v525 = vpack.c.b16 %v429, %v428
  %v526 = vpack.c.b16 %v431, %v430
  %v527 = vpack.c.b16 %v433, %v432
  %v528 = vpack.c.b16 %v435, %v434
  %v529 = vpack.c.b16 %v437, %v436
  %v530 = vpack.c.b16 %v439, %v438
  %v531 = vpack.c.b16 %v441, %v440
  %v532 = vpack.c.b16 %v443, %v442
  %v533 = vpack.c.b16 %v445, %v444
  %v534 = vpack.c.b16 %v447, %v446
  %v535 = vpack.c.b16 %v449, %v448
  %v536 = vpack.c.b16 %v451, %v450
  %v537 = vpack.c.b16 %v453, %v452
  %v538 = vpack.c.b16 %v455, %v454
  %v539 = vpack.c.b16 %v457, %v456
  %v540 = vpack.c.b16 %v459, %v458
  %v541 = vpack.c.b16 %v461, %v460
  %v542 = vpack.c.b16 %v463, %v462
  %v543 = vpack.c.b16 %v465, %v464
  %v544 = vpack.c.b16 %v467, %v466
  %v545 = vpack.c.b16 %v469, %v468
  %v546 = vpack.c.b16 %v471, %v470
  %v547 = vpack.c.b16 %v473, %v472
  %v548 = vpack.c.b16 %v475, %v474
  %v549 = vpack.c.b16 %v477, %v476
  %v550 = vpack.c.b16 %v479, %v478
  %v551 = vpack.c.b16 %v481, %v480
  %v552 = vpack.c.b16 %v483, %v482
  %v553 = vpack.c.b16 %v485, %v484
  %v554 = vpack.c.b16 %v487, %v486
  %v555 = vpack.c.b16 %v489, %v488
  %v556 = vpack.c.b16 %v491, %v490
  %v557 = vpack.c.b16 %v493, %v492
  %622 = vmatprep.subr.bf16.mxu0 0
  %623 = vmatpush1.bf16.msra.mxu0 %v494
  %624 = vmatprep.subr.bf16.mxu0 0
  %625 = vmatpush1.bf16.msra.mxu0 %v495
  %626 = vmatprep.subr.bf16.mxu0 0
  %627 = vmatpush1.bf16.msra.mxu0 %v496
  %628 = vmatprep.subr.bf16.mxu0 0
  %629 = vmatpush1.bf16.msra.mxu0 %v497
  %630 = vmatprep.subr.bf16.mxu0 0
  %631 = vmatpush1.bf16.msra.mxu0 %v498
  %632 = vmatprep.subr.bf16.mxu0 0
  %633 = vmatpush1.bf16.msra.mxu0 %v499
  %634 = vmatprep.subr.bf16.mxu0 0
  %635 = vmatpush1.bf16.msra.mxu0 %v500
  %636 = vmatprep.subr.bf16.mxu0 0
  %637 = vmatpush1.bf16.msra.mxu0 %v501
  %638 = vmatprep.subr.bf16.mxu0 0
  %639 = vmatpush1.bf16.msra.mxu0 %v502
  %640 = vmatprep.subr.bf16.mxu0 0
  %641 = vmatpush1.bf16.msra.mxu0 %v503
  %642 = vmatprep.subr.bf16.mxu0 0
  %643 = vmatpush1.bf16.msra.mxu0 %v504
  %644 = vmatprep.subr.bf16.mxu0 0
  %645 = vmatpush1.bf16.msra.mxu0 %v505
  %646 = vmatprep.subr.bf16.mxu0 0
  %647 = vmatpush1.bf16.msra.mxu0 %v506
  %648 = vmatprep.subr.bf16.mxu0 0
  %649 = vmatpush1.bf16.msra.mxu0 %v507
  %650 = vmatprep.subr.bf16.mxu0 0
  %651 = vmatpush1.bf16.msra.mxu0 %v508
  %652 = vmatprep.subr.bf16.mxu0 0
  %653 = vmatpush1.bf16.msra.mxu0 %v509
  %654 = vmatprep.mubr.bf16.mxu0 %v207
  %655 = vmatmul.mubr.bf16.gmra.mrb[0].mxu0 %v206
  %v656 = vpop.f32.mrb[0].mxu0
  %v657 = vadd.f32 0.0, %v656
  %v658 = vpop.f32.mrb[0].mxu0
  %v659 = vpop.f32.mrb[0].mxu0
  %v660 = vadd.f32 0.0, %v659
  %v661 = vpop.f32.mrb[0].mxu0
  %662 = vmatprep.mubr.bf16.mxu0 %v215
  %663 = vmatmul.mubr.bf16.gmra.mrb[0].mxu0 %v214
  %v664 = vpop.f32.mrb[0].mxu0
  %v665 = vadd.f32 0.0, %v664
  %v666 = vpop.f32.mrb[0].mxu0
  %v667 = vpop.f32.mrb[0].mxu0
  %v668 = vadd.f32 0.0, %v667
  %v669 = vpop.f32.mrb[0].mxu0
  %670 = vdwg.mxu0
  %671 = vmatprep.subr.bf16.mxu0 0
  %672 = vmatpush1.bf16.msra.mxu0 %v510
  %673 = vmatprep.subr.bf16.mxu0 0
  %674 = vmatpush1.bf16.msra.mxu0 %v511
  %675 = vmatprep.subr.bf16.mxu0 0
  %676 = vmatpush1.bf16.msra.mxu0 %v512
  %677 = vmatprep.subr.bf16.mxu0 0
  %678 = vmatpush1.bf16.msra.mxu0 %v513
  %679 = vmatprep.subr.bf16.mxu0 0
  %680 = vmatpush1.bf16.msra.mxu0 %v514
  %681 = vmatprep.subr.bf16.mxu0 0
  %682 = vmatpush1.bf16.msra.mxu0 %v515
  %683 = vmatprep.subr.bf16.mxu0 0
  %684 = vmatpush1.bf16.msra.mxu0 %v516
  %685 = vmatprep.subr.bf16.mxu0 0
  %686 = vmatpush1.bf16.msra.mxu0 %v517
  %687 = vmatprep.subr.bf16.mxu0 0
  %688 = vmatpush1.bf16.msra.mxu0 %v518
  %689 = vmatprep.subr.bf16.mxu0 0
  %690 = vmatpush1.bf16.msra.mxu0 %v519
  %691 = vmatprep.subr.bf16.mxu0 0
  %692 = vmatpush1.bf16.msra.mxu0 %v520
  %693 = vmatprep.subr.bf16.mxu0 0
  %694 = vmatpush1.bf16.msra.mxu0 %v521
  %695 = vmatprep.subr.bf16.mxu0 0
  %696 = vmatpush1.bf16.msra.mxu0 %v522
  %697 = vmatprep.subr.bf16.mxu0 0
  %698 = vmatpush1.bf16.msra.mxu0 %v523
  %699 = vmatprep.subr.bf16.mxu0 0
  %700 = vmatpush1.bf16.msra.mxu0 %v524
  %701 = vmatprep.subr.bf16.mxu0 0
  %702 = vmatpush1.bf16.msra.mxu0 %v525
  %703 = vmatprep.mubr.bf16.mxu0 %v209
  %704 = vmatmul.mubr.bf16.gmra.mrb[0].mxu0 %v208
  %v705 = vpop.f32.mrb[0].mxu0
  %v706 = vadd.f32 %v657, %v705
  %v707 = vpop.f32.mrb[0].mxu0
  %v708 = vpop.f32.mrb[0].mxu0
  %v709 = vadd.f32 %v660, %v708
  %v710 = vpop.f32.mrb[0].mxu0
  %711 = vmatprep.mubr.bf16.mxu0 %v217
  %712 = vmatmul.mubr.bf16.gmra.mrb[0].mxu0 %v216
  %v713 = vpop.f32.mrb[0].mxu0
  %v714 = vadd.f32 %v665, %v713
  %v715 = vpop.f32.mrb[0].mxu0
  %v716 = vpop.f32.mrb[0].mxu0
  %v717 = vadd.f32 %v668, %v716
  %v718 = vpop.f32.mrb[0].mxu0
  %719 = vdwg.mxu0
  %720 = vmatprep.subr.bf16.mxu0 0
  %721 = vmatpush1.bf16.msra.mxu0 %v526
  %722 = vmatprep.subr.bf16.mxu0 0
  %723 = vmatpush1.bf16.msra.mxu0 %v527
  %724 = vmatprep.subr.bf16.mxu0 0
  %725 = vmatpush1.bf16.msra.mxu0 %v528
  %726 = vmatprep.subr.bf16.mxu0 0
  %727 = vmatpush1.bf16.msra.mxu0 %v529
  %728 = vmatprep.subr.bf16.mxu0 0
  %729 = vmatpush1.bf16.msra.mxu0 %v530
  %730 = vmatprep.subr.bf16.mxu0 0
  %731 = vmatpush1.bf16.msra.mxu0 %v531
  %732 = vmatprep.subr.bf16.mxu0 0
  %733 = vmatpush1.bf16.msra.mxu0 %v532
  %734 = vmatprep.subr.bf16.mxu0 0
  %735 = vmatpush1.bf16.msra.mxu0 %v533
  %736 = vmatprep.subr.bf16.mxu0 0
  %737 = vmatpush1.bf16.msra.mxu0 %v534
  %738 = vmatprep.subr.bf16.mxu0 0
  %739 = vmatpush1.bf16.msra.mxu0 %v535
  %740 = vmatprep.subr.bf16.mxu0 0
  %741 = vmatpush1.bf16.msra.mxu0 %v536
  %742 = vmatprep.subr.bf16.mxu0 0
  %743 = vmatpush1.bf16.msra.mxu0 %v537
  %744 = vmatprep.subr.bf16.mxu0 0
  %745 = vmatpush1.bf16.msra.mxu0 %v538
  %746 = vmatprep.subr.bf16.mxu0 0
  %747 = vmatpush1.bf16.msra.mxu0 %v539
  %748 = vmatprep.subr.bf16.mxu0 0
  %749 = vmatpush1.bf16.msra.mxu0 %v540
  %750 = vmatprep.subr.bf16.mxu0 0
  %751 = vmatpush1.bf16.msra.mxu0 %v541
  %752 = vmatprep.mubr.bf16.mxu0 %v211
  %753 = vmatmul.mubr.bf16.gmra.mrb[0].mxu0 %v210
  %v754 = vpop.f32.mrb[0].mxu0
  %v755 = vadd.f32 %v706, %v754
  %v756 = vpop.f32.mrb[0].mxu0
  %v757 = vpop.f32.mrb[0].mxu0
  %v758 = vadd.f32 %v709, %v757
  %v759 = vpop.f32.mrb[0].mxu0
  %760 = vmatprep.mubr.bf16.mxu0 %v219
  %761 = vmatmul.mubr.bf16.gmra.mrb[0].mxu0 %v218
  %v762 = vpop.f32.mrb[0].mxu0
  %v763 = vadd.f32 %v714, %v762
  %v764 = vpop.f32.mrb[0].mxu0
  %v765 = vpop.f32.mrb[0].mxu0
  %v766 = vadd.f32 %v717, %v765
  %v767 = vpop.f32.mrb[0].mxu0
  %768 = vdwg.mxu0
  %769 = vmatprep.subr.bf16.mxu0 0
  %770 = vmatpush1.bf16.msra.mxu0 %v542
  %771 = vmatprep.subr.bf16.mxu0 0
  %772 = vmatpush1.bf16.msra.mxu0 %v543
  %773 = vmatprep.subr.bf16.mxu0 0
  %774 = vmatpush1.bf16.msra.mxu0 %v544
  %775 = vmatprep.subr.bf16.mxu0 0
  %776 = vmatpush1.bf16.msra.mxu0 %v545
  %777 = vmatprep.subr.bf16.mxu0 0
  %778 = vmatpush1.bf16.msra.mxu0 %v546
  %779 = vmatprep.subr.bf16.mxu0 0
  %780 = vmatpush1.bf16.msra.mxu0 %v547
  %781 = vmatprep.subr.bf16.mxu0 0
  %782 = vmatpush1.bf16.msra.mxu0 %v548
  %783 = vmatprep.subr.bf16.mxu0 0
  %784 = vmatpush1.bf16.msra.mxu0 %v549
  %785 = vmatprep.subr.bf16.mxu0 0
  %786 = vmatpush1.bf16.msra.mxu0 %v550
  %787 = vmatprep.subr.bf16.mxu0 0
  %788 = vmatpush1.bf16.msra.mxu0 %v551
  %789 = vmatprep.subr.bf16.mxu0 0
  %790 = vmatpush1.bf16.msra.mxu0 %v552
  %791 = vmatprep.subr.bf16.mxu0 0
  %792 = vmatpush1.bf16.msra.mxu0 %v553
  %793 = vmatprep.subr.bf16.mxu0 0
  %794 = vmatpush1.bf16.msra.mxu0 %v554
  %795 = vmatprep.subr.bf16.mxu0 0
  %796 = vmatpush1.bf16.msra.mxu0 %v555
  %797 = vmatprep.subr.bf16.mxu0 0
  %798 = vmatpush1.bf16.msra.mxu0 %v556
  %799 = vmatprep.subr.bf16.mxu0 0
  %800 = vmatpush1.bf16.msra.mxu0 %v557
  %801 = vmatprep.mubr.bf16.mxu0 %v213
  %802 = vmatmul.mubr.bf16.gmra.mrb[0].mxu0 %v212
  %v803 = vpop.f32.mrb[0].mxu0
  %v804 = vadd.f32 %v755, %v803
  %v805 = vpop.f32.mrb[0].mxu0
  %v806 = vpop.f32.mrb[0].mxu0
  %v807 = vadd.f32 %v758, %v806
  %v808 = vpop.f32.mrb[0].mxu0
  %809 = vmatprep.mubr.bf16.mxu0 %v221
  %810 = vmatmul.mubr.bf16.gmra.mrb[0].mxu0 %v220
  %v811 = vpop.f32.mrb[0].mxu0
  %v812 = vadd.f32 %v763, %v811
  %v813 = vpop.f32.mrb[0].mxu0
  %v814 = vpop.f32.mrb[0].mxu0
  %v815 = vadd.f32 %v766, %v814
  %v816 = vpop.f32.mrb[0].mxu0
  %817 = vdwg.mxu0
  %v818 = vpack.c.bf16 %v807, %v804
  %v819 = vpack.c.bf16 %v815, %v812
  %v822 = vunpack.c.l.b16 %v818
  %v823 = vunpack.c.h.b16 %v818
  %v824 = vunpack.c.l.b16 %v819
  %v825 = vunpack.c.h.b16 %v819
  %v826 = vpack.c.b16 %v822, %v822
  %v827 = vpack.c.b16 %v823, %v823
  %v828 = vpack.c.b16 %v824, %v824
  %v829 = vpack.c.b16 %v825, %v825
  %834 = vst [vmem:[%s2] sm:$0xf] %v826
  %835 = vst [vmem:[%s2 + $0x4] sm:$0xf] %v827
  %836 = vst [vmem:[%s2 + $0x8] sm:$0xf] %v828
  %837 = vst [vmem:[%s2 + $0xc] sm:$0xf] %v829
  %v838 = vadd.f32 %v804, %v807
  %v839 = vadd.f32 %v838, %v812
  %v840 = vadd.f32 %v839, %v815
  %v841 = vrot.slane %v840, 4
  %v842 = vadd.f32 %v840, %v841
  %v843 = vrot.slane %v842, 2
  %v844 = vadd.f32 %v842, %v843
  %v845 = vrot.slane %v844, 1
  %v846 = vadd.f32 %v844, %v845
  %847 = vst [vmem:[%s3] sm:$0x1] %v846
  %v848 = vmul.f32 %v804, %v804
  %v849 = vmul.f32 %v807, %v807
  %v850 = vmul.f32 %v812, %v812
  %v851 = vmul.f32 %v815, %v815
  %v852 = vadd.f32 %v848, %v849
  %v853 = vadd.f32 %v852, %v850
  %v854 = vadd.f32 %v853, %v851
  %v855 = vrot.slane %v854, 4
  %v856 = vadd.f32 %v854, %v855
  %v857 = vrot.slane %v856, 2
  %v858 = vadd.f32 %v856, %v857
  %v859 = vrot.slane %v858, 1
  %v860 = vadd.f32 %v858, %v859
  %861 = vst [vmem:[%s3 + $0x1] sm:$0x1] %v860
  // Predicated region
  $region10: #{enc_forward.6} parent=0 // pred_check
    _
  $region11: #{enc_forward.6} parent=0 // pred_check_branch
    %863 = sbr.rel (0) target = $region13
  $region12: #{enc_forward.6} parent=0 // pred_region
    _
  $region13: #{enc_forward.6} parent=0 // pred_fallthru
    _
  // Predicated region
  $region14: #{enc_forward.6} parent=0 // pred_check
    _
  $region15: #{enc_forward.6} parent=0 // pred_check_branch
    %865 = sbr.rel (0) target = $region17
  $region16: #{enc_forward.6} parent=0 // pred_region
    _
  $region17: #{enc_forward.6} parent=0 // pred_fallthru
    _
  // Predicated region
  $region18: #{enc_forward.6} parent=0 // pred_check
    _
  $region19: #{enc_forward.6} parent=0 // pred_check_branch
    %867 = sbr.rel (0) target = $region21
  $region20: #{enc_forward.6} parent=0 // pred_region
    _
  $region21: #{enc_forward.6} parent=0 // pred_fallthru
    _
  // Predicated region
  $region22: #{enc_forward.6} parent=0 // pred_check
    _
  $region23: #{enc_forward.6} parent=0 // pred_check_branch
    %869 = sbr.rel (0) target = $region25
  $region24: #{enc_forward.6} parent=0 // pred_region
    _
  $region25: #{enc_forward.6} parent=0 // pred_fallthru
    _

// kernel: enc_forward.7
$region0: #{enc_forward.7}
  #allocation0 [shape = 'u32[]', space=smem, size = 0x4, offset = 0x4, fixed_abs, tag = 'smem constant byte address 0x4 - core index']
  #allocation1 [shape = 'u32[144,128]{1,0:T(1,128)}', space=vmem, size = 0x12000, scoped, tag = 'internal scratch']
  %s0 = inlined_call_operand.vmem [shape: bf16[16,2048], index: 0, kind: input, shape index: {}]
  %s1 = inlined_call_operand.vmem [shape: f32[1,2048], index: 1, kind: input, shape index: {}]
  %s2 = inlined_call_operand.vmem [shape: f32[1,2048], index: 2, kind: input, shape index: {}]
  %s3 = inlined_call_operand.vmem [shape: bf16[2048,128], index: 3, kind: input, shape index: {}]
  %s4 = inlined_call_operand.vmem [shape: f32[1,128], index: 4, kind: input, shape index: {}]
  %s5 = inlined_call_operand.vmem [shape: f32[16,128], index: 5, kind: output, shape index: {}]
  %s6 = sld [smem:[#allocation0]]
  $region30: #{enc_forward.7} parent=0
    _
  %s8 = ssub.s32 1, %s6
  %s9 = scalar_select 0, %s8, %s6
  // Predicated region
  $region2: #{enc_forward.7} parent=0 // pred_check
    _
  $region3: #{enc_forward.7} parent=0 // pred_check_branch
    %11 = sbr.rel (0) target = $region5
  $region4: #{enc_forward.7} parent=0 // pred_region
    _
  $region5: #{enc_forward.7} parent=0 // pred_fallthru
    _
  // Predicated region
  $region6: #{enc_forward.7} parent=0 // pred_check
    _
  $region7: #{enc_forward.7} parent=0 // pred_check_branch
    %13 = sbr.rel (0) target = $region9
  $region8: #{enc_forward.7} parent=0 // pred_region
    _
  $region9: #{enc_forward.7} parent=0 // pred_fallthru
    _
  // Predicated region
  $region10: #{enc_forward.7} parent=0 // pred_check
    _
  $region11: #{enc_forward.7} parent=0 // pred_check_branch
    %15 = sbr.rel (0) target = $region13
  $region12: #{enc_forward.7} parent=0 // pred_region
    _
  $region13: #{enc_forward.7} parent=0 // pred_fallthru
    _
  // Predicated region
  $region14: #{enc_forward.7} parent=0 // pred_check
    _
  $region15: #{enc_forward.7} parent=0 // pred_check_branch
    %17 = sbr.rel (0) target = $region17
  $region16: #{enc_forward.7} parent=0 // pred_region
    _
  $region17: #{enc_forward.7} parent=0 // pred_fallthru
    _
  // Predicated region
  $region18: #{enc_forward.7} parent=0 // pred_check
    _
  $region19: #{enc_forward.7} parent=0 // pred_check_branch
    %19 = sbr.rel (0) target = $region21
  $region20: #{enc_forward.7} parent=0 // pred_region
    _
  $region21: #{enc_forward.7} parent=0 // pred_fallthru
    _
  %v21 = vld [vmem:[%s0] sm:$0xff]
  %v22 = vld [vmem:[%s0 + $0x8] sm:$0xff]
  %v23 = vld [vmem:[%s0 + $0x10] sm:$0xff]
  %v24 = vld [vmem:[%s0 + $0x18] sm:$0xff]
  %v25 = vld [vmem:[%s0 + $0x20] sm:$0xff]
  %v26 = vld [vmem:[%s0 + $0x28] sm:$0xff]
  %v27 = vld [vmem:[%s0 + $0x30] sm:$0xff]
  %v28 = vld [vmem:[%s0 + $0x38] sm:$0xff]
  %v29 = vld [vmem:[%s0 + $0x40] sm:$0xff]
  %v30 = vld [vmem:[%s0 + $0x48] sm:$0xff]
  %v31 = vld [vmem:[%s0 + $0x50] sm:$0xff]
  %v32 = vld [vmem:[%s0 + $0x58] sm:$0xff]
  %v33 = vld [vmem:[%s0 + $0x60] sm:$0xff]
  %v34 = vld [vmem:[%s0 + $0x68] sm:$0xff]
  %v35 = vld [vmem:[%s0 + $0x70] sm:$0xff]
  %v36 = vld [vmem:[%s0 + $0x78] sm:$0xff]
  %v37 = vunpack.c.l.bf16 %v21
  %v38 = vunpack.c.h.bf16 %v21
  %v39 = vunpack.c.l.bf16 %v22
  %v40 = vunpack.c.h.bf16 %v22
  %v41 = vunpack.c.l.bf16 %v23
  %v42 = vunpack.c.h.bf16 %v23
  %v43 = vunpack.c.l.bf16 %v24
  %v44 = vunpack.c.h.bf16 %v24
  %v45 = vunpack.c.l.bf16 %v25
  %v46 = vunpack.c.h.bf16 %v25
  %v47 = vunpack.c.l.bf16 %v26
  %v48 = vunpack.c.h.bf16 %v26
  %v49 = vunpack.c.l.bf16 %v27
  %v50 = vunpack.c.h.bf16 %v27
  %v51 = vunpack.c.l.bf16 %v28
  %v52 = vunpack.c.h.bf16 %v28
  %v53 = vunpack.c.l.bf16 %v29
  %v54 = vunpack.c.h.bf16 %v29
  %v55 = vunpack.c.l.bf16 %v30
  %v56 = vunpack.c.h.bf16 %v30
  %v57 = vunpack.c.l.bf16 %v31
  %v58 = vunpack.c.h.bf16 %v31
  %v59 = vunpack.c.l.bf16 %v32
  %v60 = vunpack.c.h.bf16 %v32
  %v61 = vunpack.c.l.bf16 %v33
  %v62 = vunpack.c.h.bf16 %v33
  %v63 = vunpack.c.l.bf16 %v34
  %v64 = vunpack.c.h.bf16 %v34
  %v65 = vunpack.c.l.bf16 %v35
  %v66 = vunpack.c.h.bf16 %v35
  %v67 = vunpack.c.l.bf16 %v36
  %v68 = vunpack.c.h.bf16 %v36
  %v69 = vld [vmem:[%s1] sm:$0xff]
  %v70 = vld [vmem:[%s1 + $0x8] sm:$0xff]
  %v73 = vlaneseq
  %v74 = vshrl.u32 %v73, 7
  %v75 = vsub.s32 0, %v74
  %v76 = vrot.slane %v69, %v75
  %v77 = vlaneseq
  %v78 = vshrl.u32 %v77, 7
  %v79 = vsub.s32 1, %v78
  %v80 = vrot.slane %v69, %v79
  %v81 = vlaneseq
  %v82 = vshrl.u32 %v81, 7
  %v83 = vsub.s32 2, %v82
  %v84 = vrot.slane %v69, %v83
  %v85 = vlaneseq
  %v86 = vshrl.u32 %v85, 7
  %v87 = vsub.s32 3, %v86
  %v88 = vrot.slane %v69, %v87
  %v89 = vlaneseq
  %v90 = vshrl.u32 %v89, 7
  %v91 = vsub.s32 4, %v90
  %v92 = vrot.slane %v69, %v91
  %v93 = vlaneseq
  %v94 = vshrl.u32 %v93, 7
  %v95 = vsub.s32 5, %v94
  %v96 = vrot.slane %v69, %v95
  %v97 = vlaneseq
  %v98 = vshrl.u32 %v97, 7
  %v99 = vsub.s32 6, %v98
  %v100 = vrot.slane %v69, %v99
  %v101 = vlaneseq
  %v102 = vshrl.u32 %v101, 7
  %v103 = vsub.s32 7, %v102
  %v104 = vrot.slane %v69, %v103
  %v105 = vlaneseq
  %v106 = vshrl.u32 %v105, 7
  %v107 = vsub.s32 0, %v106
  %v108 = vrot.slane %v70, %v107
  %v109 = vlaneseq
  %v110 = vshrl.u32 %v109, 7
  %v111 = vsub.s32 1, %v110
  %v112 = vrot.slane %v70, %v111
  %v113 = vlaneseq
  %v114 = vshrl.u32 %v113, 7
  %v115 = vsub.s32 2, %v114
  %v116 = vrot.slane %v70, %v115
  %v117 = vlaneseq
  %v118 = vshrl.u32 %v117, 7
  %v119 = vsub.s32 3, %v118
  %v120 = vrot.slane %v70, %v119
  %v121 = vlaneseq
  %v122 = vshrl.u32 %v121, 7
  %v123 = vsub.s32 4, %v122
  %v124 = vrot.slane %v70, %v123
  %v125 = vlaneseq
  %v126 = vshrl.u32 %v125, 7
  %v127 = vsub.s32 5, %v126
  %v128 = vrot.slane %v70, %v127
  %v129 = vlaneseq
  %v130 = vshrl.u32 %v129, 7
  %v131 = vsub.s32 6, %v130
  %v132 = vrot.slane %v70, %v131
  %v133 = vlaneseq
  %v134 = vshrl.u32 %v133, 7
  %v135 = vsub.s32 7, %v134
  %v136 = vrot.slane %v70, %v135
  %v153 = vsub.f32 %v37, %v76
  %v154 = vsub.f32 %v38, %v80
  %v155 = vsub.f32 %v39, %v84
  %v156 = vsub.f32 %v40, %v88
  %v157 = vsub.f32 %v41, %v92
  %v158 = vsub.f32 %v42, %v96
  %v159 = vsub.f32 %v43, %v100
  %v160 = vsub.f32 %v44, %v104
  %v161 = vsub.f32 %v45, %v108
  %v162 = vsub.f32 %v46, %v112
  %v163 = vsub.f32 %v47, %v116
  %v164 = vsub.f32 %v48, %v120
  %v165 = vsub.f32 %v49, %v124
  %v166 = vsub.f32 %v50, %v128
  %v167 = vsub.f32 %v51, %v132
  %v168 = vsub.f32 %v52, %v136
  %v169 = vsub.f32 %v53, %v76
  %v170 = vsub.f32 %v54, %v80
  %v171 = vsub.f32 %v55, %v84
  %v172 = vsub.f32 %v56, %v88
  %v173 = vsub.f32 %v57, %v92
  %v174 = vsub.f32 %v58, %v96
  %v175 = vsub.f32 %v59, %v100
  %v176 = vsub.f32 %v60, %v104
  %v177 = vsub.f32 %v61, %v108
  %v178 = vsub.f32 %v62, %v112
  %v179 = vsub.f32 %v63, %v116
  %v180 = vsub.f32 %v64, %v120
  %v181 = vsub.f32 %v65, %v124
  %v182 = vsub.f32 %v66, %v128
  %v183 = vsub.f32 %v67, %v132
  %v184 = vsub.f32 %v68, %v136
  %v185 = vld [vmem:[%s2] sm:$0xff]
  %v186 = vld [vmem:[%s2 + $0x8] sm:$0xff]
  %v189 = vlaneseq
  %v190 = vshrl.u32 %v189, 7
  %v191 = vsub.s32 0, %v190
  %v192 = vrot.slane %v185, %v191
  %v193 = vlaneseq
  %v194 = vshrl.u32 %v193, 7
  %v195 = vsub.s32 1, %v194
  %v196 = vrot.slane %v185, %v195
  %v197 = vlaneseq
  %v198 = vshrl.u32 %v197, 7
  %v199 = vsub.s32 2, %v198
  %v200 = vrot.slane %v185, %v199
  %v201 = vlaneseq
  %v202 = vshrl.u32 %v201, 7
  %v203 = vsub.s32 3, %v202
  %v204 = vrot.slane %v185, %v203
  %v205 = vlaneseq
  %v206 = vshrl.u32 %v205, 7
  %v207 = vsub.s32 4, %v206
  %v208 = vrot.slane %v185, %v207
  %v209 = vlaneseq
  %v210 = vshrl.u32 %v209, 7
  %v211 = vsub.s32 5, %v210
  %v212 = vrot.slane %v185, %v211
  %v213 = vlaneseq
  %v214 = vshrl.u32 %v213, 7
  %v215 = vsub.s32 6, %v214
  %v216 = vrot.slane %v185, %v215
  %v217 = vlaneseq
  %v218 = vshrl.u32 %v217, 7
  %v219 = vsub.s32 7, %v218
  %v220 = vrot.slane %v185, %v219
  %v221 = vlaneseq
  %v222 = vshrl.u32 %v221, 7
  %v223 = vsub.s32 0, %v222
  %v224 = vrot.slane %v186, %v223
  %v225 = vlaneseq
  %v226 = vshrl.u32 %v225, 7
  %v227 = vsub.s32 1, %v226
  %v228 = vrot.slane %v186, %v227
  %v229 = vlaneseq
  %v230 = vshrl.u32 %v229, 7
  %v231 = vsub.s32 2, %v230
  %v232 = vrot.slane %v186, %v231
  %v233 = vlaneseq
  %v234 = vshrl.u32 %v233, 7
  %v235 = vsub.s32 3, %v234
  %v236 = vrot.slane %v186, %v235
  %v237 = vlaneseq
  %v238 = vshrl.u32 %v237, 7
  %v239 = vsub.s32 4, %v238
  %v240 = vrot.slane %v186, %v239
  %v241 = vlaneseq
  %v242 = vshrl.u32 %v241, 7
  %v243 = vsub.s32 5, %v242
  %v244 = vrot.slane %v186, %v243
  %v245 = vlaneseq
  %v246 = vshrl.u32 %v245, 7
  %v247 = vsub.s32 6, %v246
  %v248 = vrot.slane %v186, %v247
  %v249 = vlaneseq
  %v250 = vshrl.u32 %v249, 7
  %v251 = vsub.s32 7, %v250
  %v252 = vrot.slane %v186, %v251
  %v269 = vmul.f32 %v153, %v192
  %v270 = vmul.f32 %v154, %v196
  %v271 = vmul.f32 %v155, %v200
  %v272 = vmul.f32 %v156, %v204
  %v273 = vmul.f32 %v157, %v208
  %v274 = vmul.f32 %v158, %v212
  %v275 = vmul.f32 %v159, %v216
  %v276 = vmul.f32 %v160, %v220
  %v277 = vmul.f32 %v161, %v224
  %v278 = vmul.f32 %v162, %v228
  %v279 = vmul.f32 %v163, %v232
  %v280 = vmul.f32 %v164, %v236
  %v281 = vmul.f32 %v165, %v240
  %v282 = vmul.f32 %v166, %v244
  %v283 = vmul.f32 %v167, %v248
  %v284 = vmul.f32 %v168, %v252
  %v285 = vmul.f32 %v169, %v192
  %v286 = vmul.f32 %v170, %v196
  %v287 = vmul.f32 %v171, %v200
  %v288 = vmul.f32 %v172, %v204
  %v289 = vmul.f32 %v173, %v208
  %v290 = vmul.f32 %v174, %v212
  %v291 = vmul.f32 %v175, %v216
  %v292 = vmul.f32 %v176, %v220
  %v293 = vmul.f32 %v177, %v224
  %v294 = vmul.f32 %v178, %v228
  %v295 = vmul.f32 %v179, %v232
  %v296 = vmul.f32 %v180, %v236
  %v297 = vmul.f32 %v181, %v240
  %v298 = vmul.f32 %v182, %v244
  %v299 = vmul.f32 %v183, %v248
  %v300 = vmul.f32 %v184, %v252
  %vm301 = vcmp.gt.f32.partialorder %v269, 0.0
  %vm302 = vcmp.gt.f32.partialorder %v270, 0.0
  %vm303 = vcmp.gt.f32.partialorder %v271, 0.0
  %vm304 = vcmp.gt.f32.partialorder %v272, 0.0
  %vm305 = vcmp.gt.f32.partialorder %v273, 0.0
  %vm306 = vcmp.gt.f32.partialorder %v274, 0.0
  %vm307 = vcmp.gt.f32.partialorder %v275, 0.0
  %vm308 = vcmp.gt.f32.partialorder %v276, 0.0
  %vm309 = vcmp.gt.f32.partialorder %v277, 0.0
  %vm310 = vcmp.gt.f32.partialorder %v278, 0.0
  %vm311 = vcmp.gt.f32.partialorder %v279, 0.0
  %vm312 = vcmp.gt.f32.partialorder %v280, 0.0
  %vm313 = vcmp.gt.f32.partialorder %v281, 0.0
  %vm314 = vcmp.gt.f32.partialorder %v282, 0.0
  %vm315 = vcmp.gt.f32.partialorder %v283, 0.0
  %vm316 = vcmp.gt.f32.partialorder %v284, 0.0
  %vm317 = vcmp.gt.f32.partialorder %v285, 0.0
  %vm318 = vcmp.gt.f32.partialorder %v286, 0.0
  %vm319 = vcmp.gt.f32.partialorder %v287, 0.0
  %vm320 = vcmp.gt.f32.partialorder %v288, 0.0
  %vm321 = vcmp.gt.f32.partialorder %v289, 0.0
  %vm322 = vcmp.gt.f32.partialorder %v290, 0.0
  %vm323 = vcmp.gt.f32.partialorder %v291, 0.0
  %vm324 = vcmp.gt.f32.partialorder %v292, 0.0
  %vm325 = vcmp.gt.f32.partialorder %v293, 0.0
  %vm326 = vcmp.gt.f32.partialorder %v294, 0.0
  %vm327 = vcmp.gt.f32.partialorder %v295, 0.0
  %vm328 = vcmp.gt.f32.partialorder %v296, 0.0
  %vm329 = vcmp.gt.f32.partialorder %v297, 0.0
  %vm330 = vcmp.gt.f32.partialorder %v298, 0.0
  %vm331 = vcmp.gt.f32.partialorder %v299, 0.0
  %vm332 = vcmp.gt.f32.partialorder %v300, 0.0
  %v333 = vmul.f32 %v269, 0.2
  %v334 = vmul.f32 %v270, 0.2
  %v335 = vmul.f32 %v271, 0.2
  %v336 = vmul.f32 %v272, 0.2
  %v337 = vmul.f32 %v273, 0.2
  %v338 = vmul.f32 %v274, 0.2
  %v339 = vmul.f32 %v275, 0.2
  %v340 = vmul.f32 %v276, 0.2
  %v341 = vmul.f32 %v277, 0.2
  %v342 = vmul.f32 %v278, 0.2
  %v343 = vmul.f32 %v279, 0.2
  %v344 = vmul.f32 %v280, 0.2
  %v345 = vmul.f32 %v281, 0.2
  %v346 = vmul.f32 %v282, 0.2
  %v347 = vmul.f32 %v283, 0.2
  %v348 = vmul.f32 %v284, 0.2
  %v349 = vmul.f32 %v285, 0.2
  %v350 = vmul.f32 %v286, 0.2
  %v351 = vmul.f32 %v287, 0.2
  %v352 = vmul.f32 %v288, 0.2
  %v353 = vmul.f32 %v289, 0.2
  %v354 = vmul.f32 %v290, 0.2
  %v355 = vmul.f32 %v291, 0.2
  %v356 = vmul.f32 %v292, 0.2
  %v357 = vmul.f32 %v293, 0.2
  %v358 = vmul.f32 %v294, 0.2
  %v359 = vmul.f32 %v295, 0.2
  %v360 = vmul.f32 %v296, 0.2
  %v361 = vmul.f32 %v297, 0.2
  %v362 = vmul.f32 %v298, 0.2
  %v363 = vmul.f32 %v299, 0.2
  %v364 = vmul.f32 %v300, 0.2
  %v365 = vsel %vm301, %v269, %v333
  %v366 = vsel %vm302, %v270, %v334
  %v367 = vsel %vm303, %v271, %v335
  %v368 = vsel %vm304, %v272, %v336
  %v369 = vsel %vm305, %v273, %v337
  %v370 = vsel %vm306, %v274, %v338
  %v371 = vsel %vm307, %v275, %v339
  %v372 = vsel %vm308, %v276, %v340
  %v373 = vsel %vm309, %v277, %v341
  %v374 = vsel %vm310, %v278, %v342
  %v375 = vsel %vm311, %v279, %v343
  %v376 = vsel %vm312, %v280, %v344
  %v377 = vsel %vm313, %v281, %v345
  %v378 = vsel %vm314, %v282, %v346
  %v379 = vsel %vm315, %v283, %v347
  %v380 = vsel %vm316, %v284, %v348
  %v381 = vsel %vm317, %v285, %v349
  %v382 = vsel %vm318, %v286, %v350
  %v383 = vsel %vm319, %v287, %v351
  %v384 = vsel %vm320, %v288, %v352
  %v385 = vsel %vm321, %v289, %v353
  %v386 = vsel %vm322, %v290, %v354
  %v387 = vsel %vm323, %v291, %v355
  %v388 = vsel %vm324, %v292, %v356
  %v389 = vsel %vm325, %v293, %v357
  %v390 = vsel %vm326, %v294, %v358
  %v391 = vsel %vm327, %v295, %v359
  %v392 = vsel %vm328, %v296, %v360
  %v393 = vsel %vm329, %v297, %v361
  %v394 = vsel %vm330, %v298, %v362
  %v395 = vsel %vm331, %v299, %v363
  %v396 = vsel %vm332, %v300, %v364
  %v397 = vpack.c.bf16 %v381, %v365
  %v398 = vpack.c.bf16 %v382, %v366
  %v399 = vpack.c.bf16 %v383, %v367
  %v400 = vpack.c.bf16 %v384, %v368
  %v401 = vpack.c.bf16 %v385, %v369
  %v402 = vpack.c.bf16 %v386, %v370
  %v403 = vpack.c.bf16 %v387, %v371
  %v404 = vpack.c.bf16 %v388, %v372
  %v405 = vpack.c.bf16 %v389, %v373
  %v406 = vpack.c.bf16 %v390, %v374
  %v407 = vpack.c.bf16 %v391, %v375
  %v408 = vpack.c.bf16 %v392, %v376
  %v409 = vpack.c.bf16 %v393, %v377
  %v410 = vpack.c.bf16 %v394, %v378
  %v411 = vpack.c.bf16 %v395, %v379
  %v412 = vpack.c.bf16 %v396, %v380
  %v413 = vld [vmem:[%s3] sm:$0xf]
  %v414 = vld [vmem:[%s3 + $0x4] sm:$0xf]
  %v415 = vld [vmem:[%s3 + $0x8] sm:$0xf]
  %v416 = vld [vmem:[%s3 + $0xc] sm:$0xf]
  %v417 = vld [vmem:[%s3 + $0x10] sm:$0xf]
  %v418 = vld [vmem:[%s3 + $0x14] sm:$0xf]
  %v419 = vld [vmem:[%s3 + $0x18] sm:$0xf]
  %v420 = vld [vmem:[%s3 + $0x1c] sm:$0xf]
  %v421 = vld [vmem:[%s3 + $0x20] sm:$0xf]
  %v422 = vld [vmem:[%s3 + $0x24] sm:$0xf]
  %v423 = vld [vmem:[%s3 + $0x28] sm:$0xf]
  %v424 = vld [vmem:[%s3 + $0x2c] sm:$0xf]
  %v425 = vld [vmem:[%s3 + $0x30] sm:$0xf]
  %v426 = vld [vmem:[%s3 + $0x34] sm:$0xf]
  %v427 = vld [vmem:[%s3 + $0x38] sm:$0xf]
  %v428 = vld [vmem:[%s3 + $0x3c] sm:$0xf]
  %v429 = vld [vmem:[%s3 + $0x40] sm:$0xf]
  %v430 = vld [vmem:[%s3 + $0x44] sm:$0xf]
  %v431 = vld [vmem:[%s3 + $0x48] sm:$0xf]
  %v432 = vld [vmem:[%s3 + $0x4c] sm:$0xf]
  %v433 = vld [vmem:[%s3 + $0x50] sm:$0xf]
  %v434 = vld [vmem:[%s3 + $0x54] sm:$0xf]
  %v435 = vld [vmem:[%s3 + $0x58] sm:$0xf]
  %v436 = vld [vmem:[%s3 + $0x5c] sm:$0xf]
  %v437 = vld [vmem:[%s3 + $0x60] sm:$0xf]
  %v438 = vld [vmem:[%s3 + $0x64] sm:$0xf]
  %v439 = vld [vmem:[%s3 + $0x68] sm:$0xf]
  %v440 = vld [vmem:[%s3 + $0x6c] sm:$0xf]
  %v441 = vld [vmem:[%s3 + $0x70] sm:$0xf]
  %v442 = vld [vmem:[%s3 + $0x74] sm:$0xf]
  %v443 = vld [vmem:[%s3 + $0x78] sm:$0xf]
  %v444 = vld [vmem:[%s3 + $0x7c] sm:$0xf]
  %v445 = vld [vmem:[%s3 + $0x80] sm:$0xf]
  %v446 = vld [vmem:[%s3 + $0x84] sm:$0xf]
  %v447 = vld [vmem:[%s3 + $0x88] sm:$0xf]
  %v448 = vld [vmem:[%s3 + $0x8c] sm:$0xf]
  %v449 = vld [vmem:[%s3 + $0x90] sm:$0xf]
  %v450 = vld [vmem:[%s3 + $0x94] sm:$0xf]
  %v451 = vld [vmem:[%s3 + $0x98] sm:$0xf]
  %v452 = vld [vmem:[%s3 + $0x9c] sm:$0xf]
  %v453 = vld [vmem:[%s3 + $0xa0] sm:$0xf]
  %v454 = vld [vmem:[%s3 + $0xa4] sm:$0xf]
  %v455 = vld [vmem:[%s3 + $0xa8] sm:$0xf]
  %v456 = vld [vmem:[%s3 + $0xac] sm:$0xf]
  %v457 = vld [vmem:[%s3 + $0xb0] sm:$0xf]
  %v458 = vld [vmem:[%s3 + $0xb4] sm:$0xf]
  %v459 = vld [vmem:[%s3 + $0xb8] sm:$0xf]
  %v460 = vld [vmem:[%s3 + $0xbc] sm:$0xf]
  %v461 = vld [vmem:[%s3 + $0xc0] sm:$0xf]
  %v462 = vld [vmem:[%s3 + $0xc4] sm:$0xf]
  %v463 = vld [vmem:[%s3 + $0xc8] sm:$0xf]
  %v464 = vld [vmem:[%s3 + $0xcc] sm:$0xf]
  %v465 = vld [vmem:[%s3 + $0xd0] sm:$0xf]
  %v466 = vld [vmem:[%s3 + $0xd4] sm:$0xf]
  %v467 = vld [vmem:[%s3 + $0xd8] sm:$0xf]
  %v468 = vld [vmem:[%s3 + $0xdc] sm:$0xf]
  %v469 = vld [vmem:[%s3 + $0xe0] sm:$0xf]
  %v470 = vld [vmem:[%s3 + $0xe4] sm:$0xf]
  %v471 = vld [vmem:[%s3 + $0xe8] sm:$0xf]
  %v472 = vld [vmem:[%s3 + $0xec] sm:$0xf]
  %v473 = vld [vmem:[%s3 + $0xf0] sm:$0xf]
  %v474 = vld [vmem:[%s3 + $0xf4] sm:$0xf]
  %v475 = vld [vmem:[%s3 + $0xf8] sm:$0xf]
  %v476 = vld [vmem:[%s3 + $0xfc] sm:$0xf]
  %v477 = vld [vmem:[%s3 + $0x100] sm:$0xf]
  %v478 = vld [vmem:[%s3 + $0x104] sm:$0xf]
  %v479 = vld [vmem:[%s3 + $0x108] sm:$0xf]
  %v480 = vld [vmem:[%s3 + $0x10c] sm:$0xf]
  %v481 = vld [vmem:[%s3 + $0x110] sm:$0xf]
  %v482 = vld [vmem:[%s3 + $0x114] sm:$0xf]
  %v483 = vld [vmem:[%s3 + $0x118] sm:$0xf]
  %v484 = vld [vmem:[%s3 + $0x11c] sm:$0xf]
  %v485 = vld [vmem:[%s3 + $0x120] sm:$0xf]
  %v486 = vld [vmem:[%s3 + $0x124] sm:$0xf]
  %v487 = vld [vmem:[%s3 + $0x128] sm:$0xf]
  %v488 = vld [vmem:[%s3 + $0x12c] sm:$0xf]
  %v489 = vld [vmem:[%s3 + $0x130] sm:$0xf]
  %v490 = vld [vmem:[%s3 + $0x134] sm:$0xf]
  %v491 = vld [vmem:[%s3 + $0x138] sm:$0xf]
  %v492 = vld [vmem:[%s3 + $0x13c] sm:$0xf]
  %v493 = vld [vmem:[%s3 + $0x140] sm:$0xf]
  %v494 = vld [vmem:[%s3 + $0x144] sm:$0xf]
  %v495 = vld [vmem:[%s3 + $0x148] sm:$0xf]
  %v496 = vld [vmem:[%s3 + $0x14c] sm:$0xf]
  %v497 = vld [vmem:[%s3 + $0x150] sm:$0xf]
  %v498 = vld [vmem:[%s3 + $0x154] sm:$0xf]
  %v499 = vld [vmem:[%s3 + $0x158] sm:$0xf]
  %v500 = vld [vmem:[%s3 + $0x15c] sm:$0xf]
  %v501 = vld [vmem:[%s3 + $0x160] sm:$0xf]
  %v502 = vld [vmem:[%s3 + $0x164] sm:$0xf]
  %v503 = vld [vmem:[%s3 + $0x168] sm:$0xf]
  %v504 = vld [vmem:[%s3 + $0x16c] sm:$0xf]
  %v505 = vld [vmem:[%s3 + $0x170] sm:$0xf]
  %v506 = vld [vmem:[%s3 + $0x174] sm:$0xf]
  %v507 = vld [vmem:[%s3 + $0x178] sm:$0xf]
  %v508 = vld [vmem:[%s3 + $0x17c] sm:$0xf]
  %v509 = vld [vmem:[%s3 + $0x180] sm:$0xf]
  %v510 = vld [vmem:[%s3 + $0x184] sm:$0xf]
  %v511 = vld [vmem:[%s3 + $0x188] sm:$0xf]
  %v512 = vld [vmem:[%s3 + $0x18c] sm:$0xf]
  %v513 = vld [vmem:[%s3 + $0x190] sm:$0xf]
  %v514 = vld [vmem:[%s3 + $0x194] sm:$0xf]
  %v515 = vld [vmem:[%s3 + $0x198] sm:$0xf]
  %v516 = vld [vmem:[%s3 + $0x19c] sm:$0xf]
  %v517 = vld [vmem:[%s3 + $0x1a0] sm:$0xf]
  %v518 = vld [vmem:[%s3 + $0x1a4] sm:$0xf]
  %v519 = vld [vmem:[%s3 + $0x1a8] sm:$0xf]
  %v520 = vld [vmem:[%s3 + $0x1ac] sm:$0xf]
  %v521 = vld [vmem:[%s3 + $0x1b0] sm:$0xf]
  %v522 = vld [vmem:[%s3 + $0x1b4] sm:$0xf]
  %v523 = vld [vmem:[%s3 + $0x1b8] sm:$0xf]
  %v524 = vld [vmem:[%s3 + $0x1bc] sm:$0xf]
  %v525 = vld [vmem:[%s3 + $0x1c0] sm:$0xf]
  %v526 = vld [vmem:[%s3 + $0x1c4] sm:$0xf]
  %v527 = vld [vmem:[%s3 + $0x1c8] sm:$0xf]
  %v528 = vld [vmem:[%s3 + $0x1cc] sm:$0xf]
  %v529 = vld [vmem:[%s3 + $0x1d0] sm:$0xf]
  %v530 = vld [vmem:[%s3 + $0x1d4] sm:$0xf]
  %v531 = vld [vmem:[%s3 + $0x1d8] sm:$0xf]
  %v532 = vld [vmem:[%s3 + $0x1dc] sm:$0xf]
  %v533 = vld [vmem:[%s3 + $0x1e0] sm:$0xf]
  %v534 = vld [vmem:[%s3 + $0x1e4] sm:$0xf]
  %v535 = vld [vmem:[%s3 + $0x1e8] sm:$0xf]
  %v536 = vld [vmem:[%s3 + $0x1ec] sm:$0xf]
  %v537 = vld [vmem:[%s3 + $0x1f0] sm:$0xf]
  %v538 = vld [vmem:[%s3 + $0x1f4] sm:$0xf]
  %v539 = vld [vmem:[%s3 + $0x1f8] sm:$0xf]
  %v540 = vld [vmem:[%s3 + $0x1fc] sm:$0xf]
  %v541 = vld [vmem:[%s3 + $0x200] sm:$0xf]
  %v542 = vld [vmem:[%s3 + $0x204] sm:$0xf]
  %v543 = vld [vmem:[%s3 + $0x208] sm:$0xf]
  %v544 = vld [vmem:[%s3 + $0x20c] sm:$0xf]
  %v545 = vld [vmem:[%s3 + $0x210] sm:$0xf]
  %v546 = vld [vmem:[%s3 + $0x214] sm:$0xf]
  %v547 = vld [vmem:[%s3 + $0x218] sm:$0xf]
  %v548 = vld [vmem:[%s3 + $0x21c] sm:$0xf]
  %v549 = vld [vmem:[%s3 + $0x220] sm:$0xf]
  %v550 = vld [vmem:[%s3 + $0x224] sm:$0xf]
  %v551 = vld [vmem:[%s3 + $0x228] sm:$0xf]
  %v552 = vld [vmem:[%s3 + $0x22c] sm:$0xf]
  %v553 = vld [vmem:[%s3 + $0x230] sm:$0xf]
  %v554 = vld [vmem:[%s3 + $0x234] sm:$0xf]
  %v555 = vld [vmem:[%s3 + $0x238] sm:$0xf]
  %v556 = vld [vmem:[%s3 + $0x23c] sm:$0xf]
  %v557 = vld [vmem:[%s3 + $0x240] sm:$0xf]
  %v558 = vld [vmem:[%s3 + $0x244] sm:$0xf]
  %v559 = vld [vmem:[%s3 + $0x248] sm:$0xf]
  %v560 = vld [vmem:[%s3 + $0x24c] sm:$0xf]
  %v561 = vld [vmem:[%s3 + $0x250] sm:$0xf]
  %v562 = vld [vmem:[%s3 + $0x254] sm:$0xf]
  %v563 = vld [vmem:[%s3 + $0x258] sm:$0xf]
  %v564 = vld [vmem:[%s3 + $0x25c] sm:$0xf]
  %v565 = vld [vmem:[%s3 + $0x260] sm:$0xf]
  %v566 = vld [vmem:[%s3 + $0x264] sm:$0xf]
  %v567 = vld [vmem:[%s3 + $0x268] sm:$0xf]
  %v568 = vld [vmem:[%s3 + $0x26c] sm:$0xf]
  %v569 = vld [vmem:[%s3 + $0x270] sm:$0xf]
  %v570 = vld [vmem:[%s3 + $0x274] sm:$0xf]
  %v571 = vld [vmem:[%s3 + $0x278] sm:$0xf]
  %v572 = vld [vmem:[%s3 + $0x27c] sm:$0xf]
  %v573 = vld [vmem:[%s3 + $0x280] sm:$0xf]
  %v574 = vld [vmem:[%s3 + $0x284] sm:$0xf]
  %v575 = vld [vmem:[%s3 + $0x288] sm:$0xf]
  %v576 = vld [vmem:[%s3 + $0x28c] sm:$0xf]
  %v577 = vld [vmem:[%s3 + $0x290] sm:$0xf]
  %v578 = vld [vmem:[%s3 + $0x294] sm:$0xf]
  %v579 = vld [vmem:[%s3 + $0x298] sm:$0xf]
  %v580 = vld [vmem:[%s3 + $0x29c] sm:$0xf]
  %v581 = vld [vmem:[%s3 + $0x2a0] sm:$0xf]
  %v582 = vld [vmem:[%s3 + $0x2a4] sm:$0xf]
  %v583 = vld [vmem:[%s3 + $0x2a8] sm:$0xf]
  %v584 = vld [vmem:[%s3 + $0x2ac] sm:$0xf]
  %v585 = vld [vmem:[%s3 + $0x2b0] sm:$0xf]
  %v586 = vld [vmem:[%s3 + $0x2b4] sm:$0xf]
  %v587 = vld [vmem:[%s3 + $0x2b8] sm:$0xf]
  %v588 = vld [vmem:[%s3 + $0x2bc] sm:$0xf]
  %v589 = vld [vmem:[%s3 + $0x2c0] sm:$0xf]
  %v590 = vld [vmem:[%s3 + $0x2c4] sm:$0xf]
  %v591 = vld [vmem:[%s3 + $0x2c8] sm:$0xf]
  %v592 = vld [vmem:[%s3 + $0x2cc] sm:$0xf]
  %v593 = vld [vmem:[%s3 + $0x2d0] sm:$0xf]
  %v594 = vld [vmem:[%s3 + $0x2d4] sm:$0xf]
  %v595 = vld [vmem:[%s3 + $0x2d8] sm:$0xf]
  %v596 = vld [vmem:[%s3 + $0x2dc] sm:$0xf]
  %v597 = vld [vmem:[%s3 + $0x2e0] sm:$0xf]
  %v598 = vld [vmem:[%s3 + $0x2e4] sm:$0xf]
  %v599 = vld [vmem:[%s3 + $0x2e8] sm:$0xf]
  %v600 = vld [vmem:[%s3 + $0x2ec] sm:$0xf]
  %v601 = vld [vmem:[%s3 + $0x2f0] sm:$0xf]
  %v602 = vld [vmem:[%s3 + $0x2f4] sm:$0xf]
  %v603 = vld [vmem:[%s3 + $0x2f8] sm:$0xf]
  %v604 = vld [vmem:[%s3 + $0x2fc] sm:$0xf]
  %v605 = vld [vmem:[%s3 + $0x300] sm:$0xf]
  %v606 = vld [vmem:[%s3 + $0x304] sm:$0xf]
  %v607 = vld [vmem:[%s3 + $0x308] sm:$0xf]
  %v608 = vld [vmem:[%s3 + $0x30c] sm:$0xf]
  %v609 = vld [vmem:[%s3 + $0x310] sm:$0xf]
  %v610 = vld [vmem:[%s3 + $0x314] sm:$0xf]
  %v611 = vld [vmem:[%s3 + $0x318] sm:$0xf]
  %v612 = vld [vmem:[%s3 + $0x31c] sm:$0xf]
  %v613 = vld [vmem:[%s3 + $0x320] sm:$0xf]
  %v614 = vld [vmem:[%s3 + $0x324] sm:$0xf]
  %v615 = vld [vmem:[%s3 + $0x328] sm:$0xf]
  %v616 = vld [vmem:[%s3 + $0x32c] sm:$0xf]
  %v617 = vld [vmem:[%s3 + $0x330] sm:$0xf]
  %v618 = vld [vmem:[%s3 + $0x334] sm:$0xf]
  %v619 = vld [vmem:[%s3 + $0x338] sm:$0xf]
  %v620 = vld [vmem:[%s3 + $0x33c] sm:$0xf]
  %v621 = vld [vmem:[%s3 + $0x340] sm:$0xf]
  %v622 = vld [vmem:[%s3 + $0x344] sm:$0xf]
  %v623 = vld [vmem:[%s3 + $0x348] sm:$0xf]
  %v624 = vld [vmem:[%s3 + $0x34c] sm:$0xf]
  %v625 = vld [vmem:[%s3 + $0x350] sm:$0xf]
  %v626 = vld [vmem:[%s3 + $0x354] sm:$0xf]
  %v627 = vld [vmem:[%s3 + $0x358] sm:$0xf]
  %v628 = vld [vmem:[%s3 + $0x35c] sm:$0xf]
  %v629 = vld [vmem:[%s3 + $0x360] sm:$0xf]
  %v630 = vld [vmem:[%s3 + $0x364] sm:$0xf]
  %v631 = vld [vmem:[%s3 + $0x368] sm:$0xf]
  %v632 = vld [vmem:[%s3 + $0x36c] sm:$0xf]
  %v633 = vld [vmem:[%s3 + $0x370] sm:$0xf]
  %v634 = vld [vmem:[%s3 + $0x374] sm:$0xf]
  %v635 = vld [vmem:[%s3 + $0x378] sm:$0xf]
  %v636 = vld [vmem:[%s3 + $0x37c] sm:$0xf]
  %v637 = vld [vmem:[%s3 + $0x380] sm:$0xf]
  %v638 = vld [vmem:[%s3 + $0x384] sm:$0xf]
  %v639 = vld [vmem:[%s3 + $0x388] sm:$0xf]
  %v640 = vld [vmem:[%s3 + $0x38c] sm:$0xf]
  %v641 = vld [vmem:[%s3 + $0x390] sm:$0xf]
  %v642 = vld [vmem:[%s3 + $0x394] sm:$0xf]
  %v643 = vld [vmem:[%s3 + $0x398] sm:$0xf]
  %v644 = vld [vmem:[%s3 + $0x39c] sm:$0xf]
  %v645 = vld [vmem:[%s3 + $0x3a0] sm:$0xf]
  %v646 = vld [vmem:[%s3 + $0x3a4] sm:$0xf]
  %v647 = vld [vmem:[%s3 + $0x3a8] sm:$0xf]
  %v648 = vld [vmem:[%s3 + $0x3ac] sm:$0xf]
  %v649 = vld [vmem:[%s3 + $0x3b0] sm:$0xf]
  %v650 = vld [vmem:[%s3 + $0x3b4] sm:$0xf]
  %v651 = vld [vmem:[%s3 + $0x3b8] sm:$0xf]
  %v652 = vld [vmem:[%s3 + $0x3bc] sm:$0xf]
  %v653 = vld [vmem:[%s3 + $0x3c0] sm:$0xf]
  %v654 = vld [vmem:[%s3 + $0x3c4] sm:$0xf]
  %v655 = vld [vmem:[%s3 + $0x3c8] sm:$0xf]
  %v656 = vld [vmem:[%s3 + $0x3cc] sm:$0xf]
  %v657 = vld [vmem:[%s3 + $0x3d0] sm:$0xf]
  %v658 = vld [vmem:[%s3 + $0x3d4] sm:$0xf]
  %v659 = vld [vmem:[%s3 + $0x3d8] sm:$0xf]
  %v660 = vld [vmem:[%s3 + $0x3dc] sm:$0xf]
  %v661 = vld [vmem:[%s3 + $0x3e0] sm:$0xf]
  %v662 = vld [vmem:[%s3 + $0x3e4] sm:$0xf]
  %v663 = vld [vmem:[%s3 + $0x3e8] sm:$0xf]
  %v664 = vld [vmem:[%s3 + $0x3ec] sm:$0xf]
  %v665 = vld [vmem:[%s3 + $0x3f0] sm:$0xf]
  %v666 = vld [vmem:[%s3 + $0x3f4] sm:$0xf]
  %v667 = vld [vmem:[%s3 + $0x3f8] sm:$0xf]
  %v668 = vld [vmem:[%s3 + $0x3fc] sm:$0xf]
  %v669 = vld [vmem:[%s4] sm:$0x1]
  %v671 = vlaneseq
  %v672 = vshrl.u32 %v671, 7
  %v673 = vsub.s32 0, %v672
  %v674 = vrot.slane %v669, %v673
  %v932 = vunpack.c.l.b16 %v413
  %v933 = vunpack.c.l.b16 %v414
  %v934 = vunpack.c.l.b16 %v415
  %v935 = vunpack.c.l.b16 %v416
  %v936 = vunpack.c.l.b16 %v417
  %v937 = vunpack.c.l.b16 %v418
  %v938 = vunpack.c.l.b16 %v419
  %v939 = vunpack.c.l.b16 %v420
  %v940 = vunpack.c.l.b16 %v421
  %v941 = vunpack.c.l.b16 %v422
  %v942 = vunpack.c.l.b16 %v423
  %v943 = vunpack.c.l.b16 %v424
  %v944 = vunpack.c.l.b16 %v425
  %v945 = vunpack.c.l.b16 %v426
  %v946 = vunpack.c.l.b16 %v427
  %v947 = vunpack.c.l.b16 %v428
  %v948 = vunpack.c.l.b16 %v429
  %v949 = vunpack.c.l.b16 %v430
  %v950 = vunpack.c.l.b16 %v431
  %v951 = vunpack.c.l.b16 %v432
  %v952 = vunpack.c.l.b16 %v433
  %v953 = vunpack.c.l.b16 %v434
  %v954 = vunpack.c.l.b16 %v435
  %v955 = vunpack.c.l.b16 %v436
  %v956 = vunpack.c.l.b16 %v437
  %v957 = vunpack.c.l.b16 %v438
  %v958 = vunpack.c.l.b16 %v439
  %v959 = vunpack.c.l.b16 %v440
  %v960 = vunpack.c.l.b16 %v441
  %v961 = vunpack.c.l.b16 %v442
  %v962 = vunpack.c.l.b16 %v443
  %v963 = vunpack.c.l.b16 %v444
  %v964 = vunpack.c.l.b16 %v445
  %v965 = vunpack.c.l.b16 %v446
  %v966 = vunpack.c.l.b16 %v447
  %v967 = vunpack.c.l.b16 %v448
  %v968 = vunpack.c.l.b16 %v449
  %v969 = vunpack.c.l.b16 %v450
  %v970 = vunpack.c.l.b16 %v451
  %v971 = vunpack.c.l.b16 %v452
  %v972 = vunpack.c.l.b16 %v453
  %v973 = vunpack.c.l.b16 %v454
  %v974 = vunpack.c.l.b16 %v455
  %v975 = vunpack.c.l.b16 %v456
  %v976 = vunpack.c.l.b16 %v457
  %v977 = vunpack.c.l.b16 %v458
  %v978 = vunpack.c.l.b16 %v459
  %v979 = vunpack.c.l.b16 %v460
  %v980 = vunpack.c.l.b16 %v461
  %v981 = vunpack.c.l.b16 %v462
  %v982 = vunpack.c.l.b16 %v463
  %v983 = vunpack.c.l.b16 %v464
  %v984 = vunpack.c.l.b16 %v465
  %v985 = vunpack.c.l.b16 %v466
  %v986 = vunpack.c.l.b16 %v467
  %v987 = vunpack.c.l.b16 %v468
  %v988 = vunpack.c.l.b16 %v469
  %v989 = vunpack.c.l.b16 %v470
  %v990 = vunpack.c.l.b16 %v471
  %v991 = vunpack.c.l.b16 %v472
  %v992 = vunpack.c.l.b16 %v473
  %v993 = vunpack.c.l.b16 %v474
  %v994 = vunpack.c.l.b16 %v475
  %v995 = vunpack.c.l.b16 %v476
  %v996 = vunpack.c.l.b16 %v477
  %v997 = vunpack.c.l.b16 %v478
  %v998 = vunpack.c.l.b16 %v479
  %v999 = vunpack.c.l.b16 %v480
  %v1000 = vunpack.c.l.b16 %v481
  %v1001 = vunpack.c.l.b16 %v482
  %v1002 = vunpack.c.l.b16 %v483
  %v1003 = vunpack.c.l.b16 %v484
  %v1004 = vunpack.c.l.b16 %v485
  %v1005 = vunpack.c.l.b16 %v486
  %v1006 = vunpack.c.l.b16 %v487
  %v1007 = vunpack.c.l.b16 %v488
  %v1008 = vunpack.c.l.b16 %v489
  %v1009 = vunpack.c.l.b16 %v490
  %v1010 = vunpack.c.l.b16 %v491
  %v1011 = vunpack.c.l.b16 %v492
  %v1012 = vunpack.c.l.b16 %v493
  %v1013 = vunpack.c.l.b16 %v494
  %v1014 = vunpack.c.l.b16 %v495
  %v1015 = vunpack.c.l.b16 %v496
  %v1016 = vunpack.c.l.b16 %v497
  %v1017 = vunpack.c.l.b16 %v498
  %v1018 = vunpack.c.l.b16 %v499
  %v1019 = vunpack.c.l.b16 %v500
  %v1020 = vunpack.c.l.b16 %v501
  %v1021 = vunpack.c.l.b16 %v502
  %v1022 = vunpack.c.l.b16 %v503
  %v1023 = vunpack.c.l.b16 %v504
  %v1024 = vunpack.c.l.b16 %v505
  %v1025 = vunpack.c.l.b16 %v506
  %v1026 = vunpack.c.l.b16 %v507
  %v1027 = vunpack.c.l.b16 %v508
  %v1028 = vunpack.c.l.b16 %v509
  %v1029 = vunpack.c.l.b16 %v510
  %v1030 = vunpack.c.l.b16 %v511
  %v1031 = vunpack.c.l.b16 %v512
  %v1032 = vunpack.c.l.b16 %v513
  %v1033 = vunpack.c.l.b16 %v514
  %v1034 = vunpack.c.l.b16 %v515
  %v1035 = vunpack.c.l.b16 %v516
  %v1036 = vunpack.c.l.b16 %v517
  %v1037 = vunpack.c.l.b16 %v518
  %v1038 = vunpack.c.l.b16 %v519
  %v1039 = vunpack.c.l.b16 %v520
  %v1040 = vunpack.c.l.b16 %v521
  %v1041 = vunpack.c.l.b16 %v522
  %v1042 = vunpack.c.l.b16 %v523
  %v1043 = vunpack.c.l.b16 %v524
  %v1044 = vunpack.c.l.b16 %v525
  %v1045 = vunpack.c.l.b16 %v526
  %v1046 = vunpack.c.l.b16 %v527
  %v1047 = vunpack.c.l.b16 %v528
  %v1048 = vunpack.c.l.b16 %v529
  %v1049 = vunpack.c.l.b16 %v530
  %v1050 = vunpack.c.l.b16 %v531
  %v1051 = vunpack.c.l.b16 %v532
  %v1052 = vunpack.c.l.b16 %v533
  %v1053 = vunpack.c.l.b16 %v534
  %v1054 = vunpack.c.l.b16 %v535
  %v1055 = vunpack.c.l.b16 %v536
  %v1056 = vunpack.c.l.b16 %v537
  %v1057 = vunpack.c.l.b16 %v538
  %v1058 = vunpack.c.l.b16 %v539
  %v1059 = vunpack.c.l.b16 %v540
  %v1060 = vunpack.c.l.b16 %v541
  %v1061 = vunpack.c.l.b16 %v542
  %v1062 = vunpack.c.l.b16 %v543
  %v1063 = vunpack.c.l.b16 %v544
  %v1064 = vunpack.c.l.b16 %v545
  %v1065 = vunpack.c.l.b16 %v546
  %v1066 = vunpack.c.l.b16 %v547
  %v1067 = vunpack.c.l.b16 %v548
  %v1068 = vunpack.c.l.b16 %v549
  %v1069 = vunpack.c.l.b16 %v550
  %v1070 = vunpack.c.l.b16 %v551
  %v1071 = vunpack.c.l.b16 %v552
  %v1072 = vunpack.c.l.b16 %v553
  %v1073 = vunpack.c.l.b16 %v554
  %v1074 = vunpack.c.l.b16 %v555
  %v1075 = vunpack.c.l.b16 %v556
  %v1076 = vunpack.c.l.b16 %v557
  %v1077 = vunpack.c.l.b16 %v558
  %v1078 = vunpack.c.l.b16 %v559
  %v1079 = vunpack.c.l.b16 %v560
  %v1080 = vunpack.c.l.b16 %v561
  %v1081 = vunpack.c.l.b16 %v562
  %v1082 = vunpack.c.l.b16 %v563
  %v1083 = vunpack.c.l.b16 %v564
  %v1084 = vunpack.c.l.b16 %v565
  %v1085 = vunpack.c.l.b16 %v566
  %v1086 = vunpack.c.l.b16 %v567
  %v1087 = vunpack.c.l.b16 %v568
  %v1088 = vunpack.c.l.b16 %v569
  %v1089 = vunpack.c.l.b16 %v570
  %v1090 = vunpack.c.l.b16 %v571
  %v1091 = vunpack.c.l.b16 %v572
  %v1092 = vunpack.c.l.b16 %v573
  %v1093 = vunpack.c.l.b16 %v574
  %v1094 = vunpack.c.l.b16 %v575
  %v1095 = vunpack.c.l.b16 %v576
  %v1096 = vunpack.c.l.b16 %v577
  %v1097 = vunpack.c.l.b16 %v578
  %v1098 = vunpack.c.l.b16 %v579
  %v1099 = vunpack.c.l.b16 %v580
  %v1100 = vunpack.c.l.b16 %v581
  %v1101 = vunpack.c.l.b16 %v582
  %v1102 = vunpack.c.l.b16 %v583
  %v1103 = vunpack.c.l.b16 %v584
  %v1104 = vunpack.c.l.b16 %v585
  %v1105 = vunpack.c.l.b16 %v586
  %v1106 = vunpack.c.l.b16 %v587
  %v1107 = vunpack.c.l.b16 %v588
  %v1108 = vunpack.c.l.b16 %v589
  %v1109 = vunpack.c.l.b16 %v590
  %v1110 = vunpack.c.l.b16 %v591
  %v1111 = vunpack.c.l.b16 %v592
  %v1112 = vunpack.c.l.b16 %v593
  %v1113 = vunpack.c.l.b16 %v594
  %v1114 = vunpack.c.l.b16 %v595
  %v1115 = vunpack.c.l.b16 %v596
  %v1116 = vunpack.c.l.b16 %v597
  %v1117 = vunpack.c.l.b16 %v598
  %v1118 = vunpack.c.l.b16 %v599
  %v1119 = vunpack.c.l.b16 %v600
  %v1120 = vunpack.c.l.b16 %v601
  %v1121 = vunpack.c.l.b16 %v602
  %v1122 = vunpack.c.l.b16 %v603
  %v1123 = vunpack.c.l.b16 %v604
  %v1124 = vunpack.c.l.b16 %v605
  %v1125 = vunpack.c.l.b16 %v606
  %v1126 = vunpack.c.l.b16 %v607
  %v1127 = vunpack.c.l.b16 %v608
  %v1128 = vunpack.c.l.b16 %v609
  %v1129 = vunpack.c.l.b16 %v610
  %v1130 = vunpack.c.l.b16 %v611
  %v1131 = vunpack.c.l.b16 %v612
  %v1132 = vunpack.c.l.b16 %v613
  %v1133 = vunpack.c.l.b16 %v614
  %v1134 = vunpack.c.l.b16 %v615
  %v1135 = vunpack.c.l.b16 %v616
  %v1136 = vunpack.c.l.b16 %v617
  %v1137 = vunpack.c.l.b16 %v618
  %v1138 = vunpack.c.l.b16 %v619
  %v1139 = vunpack.c.l.b16 %v620
  %v1140 = vunpack.c.l.b16 %v621
  %v1141 = vunpack.c.l.b16 %v622
  %v1142 = vunpack.c.l.b16 %v623
  %v1143 = vunpack.c.l.b16 %v624
  %v1144 = vunpack.c.l.b16 %v625
  %v1145 = vunpack.c.l.b16 %v626
  %v1146 = vunpack.c.l.b16 %v627
  %v1147 = vunpack.c.l.b16 %v628
  %v1148 = vunpack.c.l.b16 %v629
  %v1149 = vunpack.c.l.b16 %v630
  %v1150 = vunpack.c.l.b16 %v631
  %v1151 = vunpack.c.l.b16 %v632
  %v1152 = vunpack.c.l.b16 %v633
  %v1153 = vunpack.c.l.b16 %v634
  %v1154 = vunpack.c.l.b16 %v635
  %v1155 = vunpack.c.l.b16 %v636
  %v1156 = vunpack.c.l.b16 %v637
  %v1157 = vunpack.c.l.b16 %v638
  %v1158 = vunpack.c.l.b16 %v639
  %v1159 = vunpack.c.l.b16 %v640
  %v1160 = vunpack.c.l.b16 %v641
  %v1161 = vunpack.c.l.b16 %v642
  %v1162 = vunpack.c.l.b16 %v643
  %v1163 = vunpack.c.l.b16 %v644
  %v1164 = vunpack.c.l.b16 %v645
  %v1165 = vunpack.c.l.b16 %v646
  %v1166 = vunpack.c.l.b16 %v647
  %v1167 = vunpack.c.l.b16 %v648
  %v1168 = vunpack.c.l.b16 %v649
  %v1169 = vunpack.c.l.b16 %v650
  %v1170 = vunpack.c.l.b16 %v651
  %v1171 = vunpack.c.l.b16 %v652
  %v1172 = vunpack.c.l.b16 %v653
  %v1173 = vunpack.c.l.b16 %v654
  %v1174 = vunpack.c.l.b16 %v655
  %v1175 = vunpack.c.l.b16 %v656
  %v1176 = vunpack.c.l.b16 %v657
  %v1177 = vunpack.c.l.b16 %v658
  %v1178 = vunpack.c.l.b16 %v659
  %v1179 = vunpack.c.l.b16 %v660
  %v1180 = vunpack.c.l.b16 %v661
  %v1181 = vunpack.c.l.b16 %v662
  %v1182 = vunpack.c.l.b16 %v663
  %v1183 = vunpack.c.l.b16 %v664
  %v1184 = vunpack.c.l.b16 %v665
  %v1185 = vunpack.c.l.b16 %v666
  %v1186 = vunpack.c.l.b16 %v667
  %v1187 = vunpack.c.l.b16 %v668
  %v1188 = vpack.c.b16 %v933, %v932
  %v1189 = vpack.c.b16 %v935, %v934
  %v1190 = vpack.c.b16 %v937, %v936
  %v1191 = vpack.c.b16 %v939, %v938
  %v1192 = vpack.c.b16 %v941, %v940
  %v1193 = vpack.c.b16 %v943, %v942
  %v1194 = vpack.c.b16 %v945, %v944
  %v1195 = vpack.c.b16 %v947, %v946
  %v1196 = vpack.c.b16 %v949, %v948
  %v1197 = vpack.c.b16 %v951, %v950
  %v1198 = vpack.c.b16 %v953, %v952
  %v1199 = vpack.c.b16 %v955, %v954
  %v1200 = vpack.c.b16 %v957, %v956
  %v1201 = vpack.c.b16 %v959, %v958
  %v1202 = vpack.c.b16 %v961, %v960
  %v1203 = vpack.c.b16 %v963, %v962
  %v1204 = vpack.c.b16 %v965, %v964
  %v1205 = vpack.c.b16 %v967, %v966
  %v1206 = vpack.c.b16 %v969, %v968
  %v1207 = vpack.c.b16 %v971, %v970
  %v1208 = vpack.c.b16 %v973, %v972
  %v1209 = vpack.c.b16 %v975, %v974
  %v1210 = vpack.c.b16 %v977, %v976
  %v1211 = vpack.c.b16 %v979, %v978
  %v1212 = vpack.c.b16 %v981, %v980
  %v1213 = vpack.c.b16 %v983, %v982
  %v1214 = vpack.c.b16 %v985, %v984
  %v1215 = vpack.c.b16 %v987, %v986
  %v1216 = vpack.c.b16 %v989, %v988
  %v1217 = vpack.c.b16 %v991, %v990
  %v1218 = vpack.c.b16 %v993, %v992
  %v1219 = vpack.c.b16 %v995, %v994
  %v1220 = vpack.c.b16 %v997, %v996
  %v1221 = vpack.c.b16 %v999, %v998
  %v1222 = vpack.c.b16 %v1001, %v1000
  %v1223 = vpack.c.b16 %v1003, %v1002
  %v1224 = vpack.c.b16 %v1005, %v1004
  %v1225 = vpack.c.b16 %v1007, %v1006
  %v1226 = vpack.c.b16 %v1009, %v1008
  %v1227 = vpack.c.b16 %v1011, %v1010
  %v1228 = vpack.c.b16 %v1013, %v1012
  %v1229 = vpack.c.b16 %v1015, %v1014
  %v1230 = vpack.c.b16 %v1017, %v1016
  %v1231 = vpack.c.b16 %v1019, %v1018
  %v1232 = vpack.c.b16 %v1021, %v1020
  %v1233 = vpack.c.b16 %v1023, %v1022
  %v1234 = vpack.c.b16 %v1025, %v1024
  %v1235 = vpack.c.b16 %v1027, %v1026
  %v1236 = vpack.c.b16 %v1029, %v1028
  %v1237 = vpack.c.b16 %v1031, %v1030
  %v1238 = vpack.c.b16 %v1033, %v1032
  %v1239 = vpack.c.b16 %v1035, %v1034
  %v1240 = vpack.c.b16 %v1037, %v1036
  %v1241 = vpack.c.b16 %v1039, %v1038
  %v1242 = vpack.c.b16 %v1041, %v1040
  %v1243 = vpack.c.b16 %v1043, %v1042
  %v1244 = vpack.c.b16 %v1045, %v1044
  %v1245 = vpack.c.b16 %v1047, %v1046
  %v1246 = vpack.c.b16 %v1049, %v1048
  %v1247 = vpack.c.b16 %v1051, %v1050
  %v1248 = vpack.c.b16 %v1053, %v1052
  %v1249 = vpack.c.b16 %v1055, %v1054
  %v1250 = vpack.c.b16 %v1057, %v1056
  %v1251 = vpack.c.b16 %v1059, %v1058
  %v1252 = vpack.c.b16 %v1061, %v1060
  %v1253 = vpack.c.b16 %v1063, %v1062
  %v1254 = vpack.c.b16 %v1065, %v1064
  %v1255 = vpack.c.b16 %v1067, %v1066
  %v1256 = vpack.c.b16 %v1069, %v1068
  %v1257 = vpack.c.b16 %v1071, %v1070
  %v1258 = vpack.c.b16 %v1073, %v1072
  %v1259 = vpack.c.b16 %v1075, %v1074
  %v1260 = vpack.c.b16 %v1077, %v1076
  %v1261 = vpack.c.b16 %v1079, %v1078
  %v1262 = vpack.c.b16 %v1081, %v1080
  %v1263 = vpack.c.b16 %v1083, %v1082
  %v1264 = vpack.c.b16 %v1085, %v1084
  %v1265 = vpack.c.b16 %v1087, %v1086
  %v1266 = vpack.c.b16 %v1089, %v1088
  %v1267 = vpack.c.b16 %v1091, %v1090
  %v1268 = vpack.c.b16 %v1093, %v1092
  %v1269 = vpack.c.b16 %v1095, %v1094
  %v1270 = vpack.c.b16 %v1097, %v1096
  %v1271 = vpack.c.b16 %v1099, %v1098
  %v1272 = vpack.c.b16 %v1101, %v1100
  %v1273 = vpack.c.b16 %v1103, %v1102
  %v1274 = vpack.c.b16 %v1105, %v1104
  %v1275 = vpack.c.b16 %v1107, %v1106
  %v1276 = vpack.c.b16 %v1109, %v1108
  %v1277 = vpack.c.b16 %v1111, %v1110
  %v1278 = vpack.c.b16 %v1113, %v1112
  %v1279 = vpack.c.b16 %v1115, %v1114
  %v1280 = vpack.c.b16 %v1117, %v1116
  %v1281 = vpack.c.b16 %v1119, %v1118
  %v1282 = vpack.c.b16 %v1121, %v1120
  %v1283 = vpack.c.b16 %v1123, %v1122
  %v1284 = vpack.c.b16 %v1125, %v1124
  %v1285 = vpack.c.b16 %v1127, %v1126
  %v1286 = vpack.c.b16 %v1129, %v1128
  %v1287 = vpack.c.b16 %v1131, %v1130
  %v1288 = vpack.c.b16 %v1133, %v1132
  %v1289 = vpack.c.b16 %v1135, %v1134
  %v1290 = vpack.c.b16 %v1137, %v1136
  %v1291 = vpack.c.b16 %v1139, %v1138
  %v1292 = vpack.c.b16 %v1141, %v1140
  %v1293 = vpack.c.b16 %v1143, %v1142
  %v1294 = vpack.c.b16 %v1145, %v1144
  %v1295 = vpack.c.b16 %v1147, %v1146
  %v1296 = vpack.c.b16 %v1149, %v1148
  %v1297 = vpack.c.b16 %v1151, %v1150
  %v1298 = vpack.c.b16 %v1153, %v1152
  %v1299 = vpack.c.b16 %v1155, %v1154
  %v1300 = vpack.c.b16 %v1157, %v1156
  %v1301 = vpack.c.b16 %v1159, %v1158
  %v1302 = vpack.c.b16 %v1161, %v1160
  %v1303 = vpack.c.b16 %v1163, %v1162
  %v1304 = vpack.c.b16 %v1165, %v1164
  %v1305 = vpack.c.b16 %v1167, %v1166
  %v1306 = vpack.c.b16 %v1169, %v1168
  %v1307 = vpack.c.b16 %v1171, %v1170
  %v1308 = vpack.c.b16 %v1173, %v1172
  %v1309 = vpack.c.b16 %v1175, %v1174
  %v1310 = vpack.c.b16 %v1177, %v1176
  %v1311 = vpack.c.b16 %v1179, %v1178
  %v1312 = vpack.c.b16 %v1181, %v1180
  %v1313 = vpack.c.b16 %v1183, %v1182
  %v1314 = vpack.c.b16 %v1185, %v1184
  %v1315 = vpack.c.b16 %v1187, %v1186
  %1444 = vmatprep.subr.bf16.mxu0 0
  %1445 = vmatpush1.bf16.msra.mxu0 %v1188
  %1446 = vmatprep.subr.bf16.mxu0 0
  %1447 = vmatpush1.bf16.msra.mxu0 %v1189
  %1448 = vmatprep.subr.bf16.mxu0 0
  %1449 = vmatpush1.bf16.msra.mxu0 %v1190
  %1450 = vmatprep.subr.bf16.mxu0 0
  %1451 = vmatpush1.bf16.msra.mxu0 %v1191
  %1452 = vmatprep.subr.bf16.mxu0 0
  %1453 = vmatpush1.bf16.msra.mxu0 %v1192
  %1454 = vmatprep.subr.bf16.mxu0 0
  %1455 = vmatpush1.bf16.msra.mxu0 %v1193
  %1456 = vmatprep.subr.bf16.mxu0 0
  %1457 = vmatpush1.bf16.msra.mxu0 %v1194
  %1458 = vmatprep.subr.bf16.mxu0 0
  %1459 = vmatpush1.bf16.msra.mxu0 %v1195
  %1460 = vmatprep.subr.bf16.mxu0 0
  %1461 = vmatpush1.bf16.msra.mxu0 %v1196
  %1462 = vmatprep.subr.bf16.mxu0 0
  %1463 = vmatpush1.bf16.msra.mxu0 %v1197
  %1464 = vmatprep.subr.bf16.mxu0 0
  %1465 = vmatpush1.bf16.msra.mxu0 %v1198
  %1466 = vmatprep.subr.bf16.mxu0 0
  %1467 = vmatpush1.bf16.msra.mxu0 %v1199
  %1468 = vmatprep.subr.bf16.mxu0 0
  %1469 = vmatpush1.bf16.msra.mxu0 %v1200
  %1470 = vmatprep.subr.bf16.mxu0 0
  %1471 = vmatpush1.bf16.msra.mxu0 %v1201
  %1472 = vmatprep.subr.bf16.mxu0 0
  %1473 = vmatpush1.bf16.msra.mxu0 %v1202
  %1474 = vmatprep.subr.bf16.mxu0 0
  %1475 = vmatpush1.bf16.msra.mxu0 %v1203
  %1476 = vmatprep.mubr.bf16.mxu0 %v398
  %1477 = vmatmul.mubr.bf16.gmra.mrb[0].mxu0 %v397
  %v1478 = vpop.f32.mrb[0].mxu0
  %v1479 = vadd.f32 %v674, %v1478
  %v1480 = vpop.f32.mrb[0].mxu0
  %v1481 = vpop.f32.mrb[0].mxu0
  %v1482 = vadd.f32 %v674, %v1481
  %v1483 = vpop.f32.mrb[0].mxu0
  %1484 = vdwg.mxu0
  %1485 = vmatprep.subr.bf16.mxu0 0
  %1486 = vmatpush1.bf16.msra.mxu0 %v1204
  %1487 = vmatprep.subr.bf16.mxu0 0
  %1488 = vmatpush1.bf16.msra.mxu0 %v1205
  %1489 = vmatprep.subr.bf16.mxu0 0
  %1490 = vmatpush1.bf16.msra.mxu0 %v1206
  %1491 = vmatprep.subr.bf16.mxu0 0
  %1492 = vmatpush1.bf16.msra.mxu0 %v1207
  %1493 = vmatprep.subr.bf16.mxu0 0
  %1494 = vmatpush1.bf16.msra.mxu0 %v1208
  %1495 = vmatprep.subr.bf16.mxu0 0
  %1496 = vmatpush1.bf16.msra.mxu0 %v1209
  %1497 = vmatprep.subr.bf16.mxu0 0
  %1498 = vmatpush1.bf16.msra.mxu0 %v1210
  %1499 = vmatprep.subr.bf16.mxu0 0
  %1500 = vmatpush1.bf16.msra.mxu0 %v1211
  %1501 = vmatprep.subr.bf16.mxu0 0
  %1502 = vmatpush1.bf16.msra.mxu0 %v1212
  %1503 = vmatprep.subr.bf16.mxu0 0
  %1504 = vmatpush1.bf16.msra.mxu0 %v1213
  %1505 = vmatprep.subr.bf16.mxu0 0
  %1506 = vmatpush1.bf16.msra.mxu0 %v1214
  %1507 = vmatprep.subr.bf16.mxu0 0
  %1508 = vmatpush1.bf16.msra.mxu0 %v1215
  %1509 = vmatprep.subr.bf16.mxu0 0
  %1510 = vmatpush1.bf16.msra.mxu0 %v1216
  %1511 = vmatprep.subr.bf16.mxu0 0
  %1512 = vmatpush1.bf16.msra.mxu0 %v1217
  %1513 = vmatprep.subr.bf16.mxu0 0
  %1514 = vmatpush1.bf16.msra.mxu0 %v1218
  %1515 = vmatprep.subr.bf16.mxu0 0
  %1516 = vmatpush1.bf16.msra.mxu0 %v1219
  %1517 = vmatprep.mubr.bf16.mxu0 %v400
  %1518 = vmatmul.mubr.bf16.gmra.mrb[0].mxu0 %v399
  %v1519 = vpop.f32.mrb[0].mxu0
  %v1520 = vadd.f32 %v1479, %v1519
  %v1521 = vpop.f32.mrb[0].mxu0
  %v1522 = vpop.f32.mrb[0].mxu0
  %v1523 = vadd.f32 %v1482, %v1522
  %v1524 = vpop.f32.mrb[0].mxu0
  %1525 = vdwg.mxu0
  %1526 = vmatprep.subr.bf16.mxu0 0
  %1527 = vmatpush1.bf16.msra.mxu0 %v1220
  %1528 = vmatprep.subr.bf16.mxu0 0
  %1529 = vmatpush1.bf16.msra.mxu0 %v1221
  %1530 = vmatprep.subr.bf16.mxu0 0
  %1531 = vmatpush1.bf16.msra.mxu0 %v1222
  %1532 = vmatprep.subr.bf16.mxu0 0
  %1533 = vmatpush1.bf16.msra.mxu0 %v1223
  %1534 = vmatprep.subr.bf16.mxu0 0
  %1535 = vmatpush1.bf16.msra.mxu0 %v1224
  %1536 = vmatprep.subr.bf16.mxu0 0
  %1537 = vmatpush1.bf16.msra.mxu0 %v1225
  %1538 = vmatprep.subr.bf16.mxu0 0
  %1539 = vmatpush1.bf16.msra.mxu0 %v1226
  %1540 = vmatprep.subr.bf16.mxu0 0
  %1541 = vmatpush1.bf16.msra.mxu0 %v1227
  %1542 = vmatprep.subr.bf16.mxu0 0
  %1543 = vmatpush1.bf16.msra.mxu0 %v1228
  %1544 = vmatprep.subr.bf16.mxu0 0
  %1545 = vmatpush1.bf16.msra.mxu0 %v1229
  %1546 = vmatprep.subr.bf16.mxu0 0
  %1547 = vmatpush1.bf16.msra.mxu0 %v1230
  %1548 = vmatprep.subr.bf16.mxu0 0
  %1549 = vmatpush1.bf16.msra.mxu0 %v1231
  %1550 = vmatprep.subr.bf16.mxu0 0
  %1551 = vmatpush1.bf16.msra.mxu0 %v1232
  %1552 = vmatprep.subr.bf16.mxu0 0
  %1553 = vmatpush1.bf16.msra.mxu0 %v1233
  %1554 = vmatprep.subr.bf16.mxu0 0
  %1555 = vmatpush1.bf16.msra.mxu0 %v1234
  %1556 = vmatprep.subr.bf16.mxu0 0
  %1557 = vmatpush1.bf16.msra.mxu0 %v1235
  %1558 = vmatprep.mubr.bf16.mxu0 %v402
  %1559 = vmatmul.mubr.bf16.gmra.mrb[0].mxu0 %v401
  %v1560 = vpop.f32.mrb[0].mxu0
  %v1561 = vadd.f32 %v1520, %v1560
  %v1562 = vpop.f32.mrb[0].mxu0
  %v1563 = vpop.f32.mrb[0].mxu0
  %v1564 = vadd.f32 %v1523, %v1563
  %v1565 = vpop.f32.mrb[0].mxu0
  %1566 = vdwg.mxu0
  %1567 = vmatprep.subr.bf16.mxu0 0
  %1568 = vmatpush1.bf16.msra.mxu0 %v1236
  %1569 = vmatprep.subr.bf16.mxu0 0
  %1570 = vmatpush1.bf16.msra.mxu0 %v1237
  %1571 = vmatprep.subr.bf16.mxu0 0
  %1572 = vmatpush1.bf16.msra.mxu0 %v1238
  %1573 = vmatprep.subr.bf16.mxu0 0
  %1574 = vmatpush1.bf16.msra.mxu0 %v1239
  %1575 = vmatprep.subr.bf16.mxu0 0
  %1576 = vmatpush1.bf16.msra.mxu0 %v1240
  %1577 = vmatprep.subr.bf16.mxu0 0
  %1578 = vmatpush1.bf16.msra.mxu0 %v1241
  %1579 = vmatprep.subr.bf16.mxu0 0
  %1580 = vmatpush1.bf16.msra.mxu0 %v1242
  %1581 = vmatprep.subr.bf16.mxu0 0
  %1582 = vmatpush1.bf16.msra.mxu0 %v1243
  %1583 = vmatprep.subr.bf16.mxu0 0
  %1584 = vmatpush1.bf16.msra.mxu0 %v1244
  %1585 = vmatprep.subr.bf16.mxu0 0
  %1586 = vmatpush1.bf16.msra.mxu0 %v1245
  %1587 = vmatprep.subr.bf16.mxu0 0
  %1588 = vmatpush1.bf16.msra.mxu0 %v1246
  %1589 = vmatprep.subr.bf16.mxu0 0
  %1590 = vmatpush1.bf16.msra.mxu0 %v1247
  %1591 = vmatprep.subr.bf16.mxu0 0
  %1592 = vmatpush1.bf16.msra.mxu0 %v1248
  %1593 = vmatprep.subr.bf16.mxu0 0
  %1594 = vmatpush1.bf16.msra.mxu0 %v1249
  %1595 = vmatprep.subr.bf16.mxu0 0
  %1596 = vmatpush1.bf16.msra.mxu0 %v1250
  %1597 = vmatprep.subr.bf16.mxu0 0
  %1598 = vmatpush1.bf16.msra.mxu0 %v1251
  %1599 = vmatprep.mubr.bf16.mxu0 %v404
  %1600 = vmatmul.mubr.bf16.gmra.mrb[0].mxu0 %v403
  %v1601 = vpop.f32.mrb[0].mxu0
  %v1602 = vadd.f32 %v1561, %v1601
  %v1603 = vpop.f32.mrb[0].mxu0
  %v1604 = vpop.f32.mrb[0].mxu0
  %v1605 = vadd.f32 %v1564, %v1604
  %v1606 = vpop.f32.mrb[0].mxu0
  %1607 = vdwg.mxu0
  %1608 = vmatprep.subr.bf16.mxu0 0
  %1609 = vmatpush1.bf16.msra.mxu0 %v1252
  %1610 = vmatprep.subr.bf16.mxu0 0
  %1611 = vmatpush1.bf16.msra.mxu0 %v1253
  %1612 = vmatprep.subr.bf16.mxu0 0
  %1613 = vmatpush1.bf16.msra.mxu0 %v1254
  %1614 = vmatprep.subr.bf16.mxu0 0
  %1615 = vmatpush1.bf16.msra.mxu0 %v1255
  %1616 = vmatprep.subr.bf16.mxu0 0
  %1617 = vmatpush1.bf16.msra.mxu0 %v1256
  %1618 = vmatprep.subr.bf16.mxu0 0
  %1619 = vmatpush1.bf16.msra.mxu0 %v1257
  %1620 = vmatprep.subr.bf16.mxu0 0
  %1621 = vmatpush1.bf16.msra.mxu0 %v1258
  %1622 = vmatprep.subr.bf16.mxu0 0
  %1623 = vmatpush1.bf16.msra.mxu0 %v1259
  %1624 = vmatprep.subr.bf16.mxu0 0
  %1625 = vmatpush1.bf16.msra.mxu0 %v1260
  %1626 = vmatprep.subr.bf16.mxu0 0
  %1627 = vmatpush1.bf16.msra.mxu0 %v1261
  %1628 = vmatprep.subr.bf16.mxu0 0
  %1629 = vmatpush1.bf16.msra.mxu0 %v1262
  %1630 = vmatprep.subr.bf16.mxu0 0
  %1631 = vmatpush1.bf16.msra.mxu0 %v1263
  %1632 = vmatprep.subr.bf16.mxu0 0
  %1633 = vmatpush1.bf16.msra.mxu0 %v1264
  %1634 = vmatprep.subr.bf16.mxu0 0
  %1635 = vmatpush1.bf16.msra.mxu0 %v1265
  %1636 = vmatprep.subr.bf16.mxu0 0
  %1637 = vmatpush1.bf16.msra.mxu0 %v1266
  %1638 = vmatprep.subr.bf16.mxu0 0
  %1639 = vmatpush1.bf16.msra.mxu0 %v1267
  %1640 = vmatprep.mubr.bf16.mxu0 %v406
  %1641 = vmatmul.mubr.bf16.gmra.mrb[0].mxu0 %v405
  %v1642 = vpop.f32.mrb[0].mxu0
  %v1643 = vadd.f32 %v1602, %v1642
  %v1644 = vpop.f32.mrb[0].mxu0
  %v1645 = vpop.f32.mrb[0].mxu0
  %v1646 = vadd.f32 %v1605, %v1645
  %v1647 = vpop.f32.mrb[0].mxu0
  %1648 = vdwg.mxu0
  %1649 = vmatprep.subr.bf16.mxu0 0
  %1650 = vmatpush1.bf16.msra.mxu0 %v1268
  %1651 = vmatprep.subr.bf16.mxu0 0
  %1652 = vmatpush1.bf16.msra.mxu0 %v1269
  %1653 = vmatprep.subr.bf16.mxu0 0
  %1654 = vmatpush1.bf16.msra.mxu0 %v1270
  %1655 = vmatprep.subr.bf16.mxu0 0
  %1656 = vmatpush1.bf16.msra.mxu0 %v1271
  %1657 = vmatprep.subr.bf16.mxu0 0
  %1658 = vmatpush1.bf16.msra.mxu0 %v1272
  %1659 = vmatprep.subr.bf16.mxu0 0
  %1660 = vmatpush1.bf16.msra.mxu0 %v1273
  %1661 = vmatprep.subr.bf16.mxu0 0
  %1662 = vmatpush1.bf16.msra.mxu0 %v1274
  %1663 = vmatprep.subr.bf16.mxu0 0
  %1664 = vmatpush1.bf16.msra.mxu0 %v1275
  %1665 = vmatprep.subr.bf16.mxu0 0
  %1666 = vmatpush1.bf16.msra.mxu0 %v1276
  %1667 = vmatprep.subr.bf16.mxu0 0
  %1668 = vmatpush1.bf16.msra.mxu0 %v1277
  %1669 = vmatprep.subr.bf16.mxu0 0
  %1670 = vmatpush1.bf16.msra.mxu0 %v1278
  %1671 = vmatprep.subr.bf16.mxu0 0
  %1672 = vmatpush1.bf16.msra.mxu0 %v1279
  %1673 = vmatprep.subr.bf16.mxu0 0
  %1674 = vmatpush1.bf16.msra.mxu0 %v1280
  %1675 = vmatprep.subr.bf16.mxu0 0
  %1676 = vmatpush1.bf16.msra.mxu0 %v1281
  %1677 = vmatprep.subr.bf16.mxu0 0
  %1678 = vmatpush1.bf16.msra.mxu0 %v1282
  %1679 = vmatprep.subr.bf16.mxu0 0
  %1680 = vmatpush1.bf16.msra.mxu0 %v1283
  %1681 = vmatprep.mubr.bf16.mxu0 %v408
  %1682 = vmatmul.mubr.bf16.gmra.mrb[0].mxu0 %v407
  %v1683 = vpop.f32.mrb[0].mxu0
  %v1684 = vadd.f32 %v1643, %v1683
  %v1685 = vpop.f32.mrb[0].mxu0
  %v1686 = vpop.f32.mrb[0].mxu0
  %v1687 = vadd.f32 %v1646, %v1686
  %v1688 = vpop.f32.mrb[0].mxu0
  %1689 = vdwg.mxu0
  %1690 = vmatprep.subr.bf16.mxu0 0
  %1691 = vmatpush1.bf16.msra.mxu0 %v1284
  %1692 = vmatprep.subr.bf16.mxu0 0
  %1693 = vmatpush1.bf16.msra.mxu0 %v1285
  %1694 = vmatprep.subr.bf16.mxu0 0
  %1695 = vmatpush1.bf16.msra.mxu0 %v1286
  %1696 = vmatprep.subr.bf16.mxu0 0
  %1697 = vmatpush1.bf16.msra.mxu0 %v1287
  %1698 = vmatprep.subr.bf16.mxu0 0
  %1699 = vmatpush1.bf16.msra.mxu0 %v1288
  %1700 = vmatprep.subr.bf16.mxu0 0
  %1701 = vmatpush1.bf16.msra.mxu0 %v1289
  %1702 = vmatprep.subr.bf16.mxu0 0
  %1703 = vmatpush1.bf16.msra.mxu0 %v1290
  %1704 = vmatprep.subr.bf16.mxu0 0
  %1705 = vmatpush1.bf16.msra.mxu0 %v1291
  %1706 = vmatprep.subr.bf16.mxu0 0
  %1707 = vmatpush1.bf16.msra.mxu0 %v1292
  %1708 = vmatprep.subr.bf16.mxu0 0
  %1709 = vmatpush1.bf16.msra.mxu0 %v1293
  %1710 = vmatprep.subr.bf16.mxu0 0
  %1711 = vmatpush1.bf16.msra.mxu0 %v1294
  %1712 = vmatprep.subr.bf16.mxu0 0
  %1713 = vmatpush1.bf16.msra.mxu0 %v1295
  %1714 = vmatprep.subr.bf16.mxu0 0
  %1715 = vmatpush1.bf16.msra.mxu0 %v1296
  %1716 = vmatprep.subr.bf16.mxu0 0
  %1717 = vmatpush1.bf16.msra.mxu0 %v1297
  %1718 = vmatprep.subr.bf16.mxu0 0
  %1719 = vmatpush1.bf16.msra.mxu0 %v1298
  %1720 = vmatprep.subr.bf16.mxu0 0
  %1721 = vmatpush1.bf16.msra.mxu0 %v1299
  %1722 = vmatprep.mubr.bf16.mxu0 %v410
  %1723 = vmatmul.mubr.bf16.gmra.mrb[0].mxu0 %v409
  %v1724 = vpop.f32.mrb[0].mxu0
  %v1725 = vadd.f32 %v1684, %v1724
  %v1726 = vpop.f32.mrb[0].mxu0
  %v1727 = vpop.f32.mrb[0].mxu0
  %v1728 = vadd.f32 %v1687, %v1727
  %v1729 = vpop.f32.mrb[0].mxu0
  %1730 = vdwg.mxu0
  %1731 = vmatprep.subr.bf16.mxu0 0
  %1732 = vmatpush1.bf16.msra.mxu0 %v1300
  %1733 = vmatprep.subr.bf16.mxu0 0
  %1734 = vmatpush1.bf16.msra.mxu0 %v1301
  %1735 = vmatprep.subr.bf16.mxu0 0
  %1736 = vmatpush1.bf16.msra.mxu0 %v1302
  %1737 = vmatprep.subr.bf16.mxu0 0
  %1738 = vmatpush1.bf16.msra.mxu0 %v1303
  %1739 = vmatprep.subr.bf16.mxu0 0
  %1740 = vmatpush1.bf16.msra.mxu0 %v1304
  %1741 = vmatprep.subr.bf16.mxu0 0
  %1742 = vmatpush1.bf16.msra.mxu0 %v1305
  %1743 = vmatprep.subr.bf16.mxu0 0
  %1744 = vmatpush1.bf16.msra.mxu0 %v1306
  %1745 = vmatprep.subr.bf16.mxu0 0
  %1746 = vmatpush1.bf16.msra.mxu0 %v1307
  %1747 = vmatprep.subr.bf16.mxu0 0
  %1748 = vmatpush1.bf16.msra.mxu0 %v1308
  %1749 = vmatprep.subr.bf16.mxu0 0
  %1750 = vmatpush1.bf16.msra.mxu0 %v1309
  %1751 = vmatprep.subr.bf16.mxu0 0
  %1752 = vmatpush1.bf16.msra.mxu0 %v1310
  %1753 = vmatprep.subr.bf16.mxu0 0
  %1754 = vmatpush1.bf16.msra.mxu0 %v1311
  %1755 = vmatprep.subr.bf16.mxu0 0
  %1756 = vmatpush1.bf16.msra.mxu0 %v1312
  %1757 = vmatprep.subr.bf16.mxu0 0
  %1758 = vmatpush1.bf16.msra.mxu0 %v1313
  %1759 = vmatprep.subr.bf16.mxu0 0
  %1760 = vmatpush1.bf16.msra.mxu0 %v1314
  %1761 = vmatprep.subr.bf16.mxu0 0
  %1762 = vmatpush1.bf16.msra.mxu0 %v1315
  %1763 = vmatprep.mubr.bf16.mxu0 %v412
  %1764 = vmatmul.mubr.bf16.gmra.mrb[0].mxu0 %v411
  %v1765 = vpop.f32.mrb[0].mxu0
  %v1766 = vadd.f32 %v1725, %v1765
  %v1767 = vpop.f32.mrb[0].mxu0
  %v1768 = vpop.f32.mrb[0].mxu0
  %v1769 = vadd.f32 %v1728, %v1768
  %v1770 = vpop.f32.mrb[0].mxu0
  %1771 = vdwg.mxu0
  %v1772 = vlaneseq
  %v1773 = vand.u32 %v1772, 127
  %vm1774 = vcmp.ge.s32.totalorder %v1773, 20
  %vm1775 = vcmp.lt.s32.totalorder %v1773, 40
  %vm1776 = vmand %vm1774, %vm1775
  %v1777 = vmax.f32 %v1766, 0.0
  %v1778 = vmax.f32 %v1769, 0.0
  %v1779 = vand.u32 2147483647, %v1766
  %v1780 = vand.u32 2147483647, %v1769
  %v1781 = vsub.f32 0.0, %v1779
  %v1782 = vsub.f32 0.0, %v1780
  %v1783 = vmul.f32 %v1781, 1.442695
  %v1784 = vpow.pop %v1783
  %v1785 = vmul.f32 %v1782, 1.442695
  %v1786 = vpow.pop %v1785
  %v1787 = vadd.f32 %v1784, 1.0
  %v1788 = vlog2.pop %v1787
  %v1789 = vmul.f32 %v1788, 0.6931472
  %v1790 = vmul.f32 -0.5, %v1784
  %v1791 = vadd.f32 %v1790, 1.0
  %v1792 = vmul.f32 %v1791, %v1784
  %v1793 = vand.u32 2147483647, %v1784
  %vm1794 = vcmp.lt.f32.partialorder %v1793, 0.0004427343
  %v1795 = vsel %vm1794, %v1792, %v1789
  %v1796 = vadd.f32 %v1786, 1.0
  %v1797 = vlog2.pop %v1796
  %v1798 = vmul.f32 %v1797, 0.6931472
  %v1799 = vmul.f32 -0.5, %v1786
  %v1800 = vadd.f32 %v1799, 1.0
  %v1801 = vmul.f32 %v1800, %v1786
  %v1802 = vand.u32 2147483647, %v1786
  %vm1803 = vcmp.lt.f32.partialorder %v1802, 0.0004427343
  %v1804 = vsel %vm1803, %v1801, %v1798
  %v1805 = vadd.f32 %v1777, %v1795
  %v1806 = vadd.f32 %v1778, %v1804
  %v1807 = vadd.f32 %v1805, 1e-06
  %v1808 = vadd.f32 %v1806, 1e-06
  %v1809 = vsel %vm1776, %v1807, %v1766
  %v1810 = vsel %vm1776, %v1808, %v1769
  %1811 = vst [vmem:[%s5] sm:$0xff] %v1809
  %1812 = vst [vmem:[%s5 + $0x8] sm:$0xff] %v1810
  // Predicated region
  $region22: #{enc_forward.7} parent=0 // pred_check
    _
  $region23: #{enc_forward.7} parent=0 // pred_check_branch
    %1814 = sbr.rel (0) target = $region25
  $region24: #{enc_forward.7} parent=0 // pred_region
    _
  $region25: #{enc_forward.7} parent=0 // pred_fallthru
    _
  // Predicated region
  $region26: #{enc_forward.7} parent=0 // pred_check
    _
  $region27: #{enc_forward.7} parent=0 // pred_check_branch
    %1816 = sbr.rel (0) target = $region29
  $region28: #{enc_forward.7} parent=0 // pred_region
    _
  $region29: #{enc_forward.7} parent=0 // pred_fallthru
    _

</llo_original>
